<compile_context>
chip_gen: v6e
topology: v6e:2x2x1
jax: 0.10.0
libtpu: 0.0.40
codegen_flags: <defaults>
</compile_context>

<pallas_src>
import functools

import numpy as np
import jax
import jax.numpy as jnp
from jax.experimental import pallas as pl
from jax.experimental.pallas import tpu as pltpu

LANE = 128                       # vreg lane width: all feature dims padded to this
VMEM_LIMIT_BYTES = 48 * 1024 * 1024   # < 64 MiB (v7x physical), ample headroom on v5e/v6e


def _round_up(a, b):
    return ((a + b - 1) // b) * b


# ------------------ Kernel A: gather + aggregate(sum,max) + merge + dense0 ------------------


def graph_aggregate_kernel(
    x_ref,      # VMEM (n_pad, 128) bf16     all node features (resident, gather source)
    nbr_ref,    # VMEM (TN, MAX_DEG) int32   per-slot neighbor node ids (0 for empty slots)
    ew_ref,     # VMEM (TN, MAX_DEG) f32     per-slot edge weights (0.0 for empty slots)
    deg_ref,    # VMEM (TN, 1) int32         in-degree per node (drives the max mask)
    wm_ref,     # VMEM (256, 128) bf16       fused merge weight  rows [0:D]=sum, [128:128+D]=max
    bm_ref,     # VMEM (1, 128) f32          merge bias (zero-padded)
    w0_ref,     # VMEM (256, 128) bf16       fused dense0 weight rows [0:D]=x,   [128:128+D]=x_agg
    b0_ref,     # VMEM (1, 128) f32          dense0 bias (zero-padded)
    h_ref,      # VMEM (TN, 128) bf16        out: LeakyReLU(dense0([x|x_agg])), padded rows zeroed
    st_ref,     # VMEM (8, 128) f32          out: row0 = sum(h), row1 = sum(h^2) for this tile
    *, tile_n, max_deg, n_valid,
):
    f32, bf16 = jnp.float32, jnp.bfloat16
    t = pl.program_id(0)
    n_src, d_pad = x_ref.shape

    x_all = x_ref[...]                                      # (n_pad, 128) bf16
    nbr = nbr_ref[...]                                      # (TN, MAX_DEG) int32
    ew = ew_ref[...]                                        # (TN, MAX_DEG) f32
    deg = deg_ref[...]                                      # (TN, 1) int32

    col = jax.lax.broadcasted_iota(jnp.int32, (tile_n, n_src), 1)

    sum_agg = jnp.zeros((tile_n, d_pad), f32)
    max_agg = jnp.full((tile_n, d_pad), -1e30, f32)

    # Vectorized neighbor gather: per degree slot, one-hot row selection on the MXU
    # (the MXU is otherwise idle here), weights applied post-gather in f32.
    for d in range(max_deg):                                # max_deg is small and static
        sel = jnp.where(col == nbr[:, d:d + 1], 1.0, 0.0).astype(bf16)   # (TN, n_pad)
        g = jnp.dot(sel, x_all, preferred_element_type=f32)              # gathered rows (TN, 128)
        wg = g * ew[:, d:d + 1]                             # weighted neighbor features
        sum_agg = sum_agg + wg
        max_agg = jnp.maximum(max_agg, jnp.where(deg > d, wg, -1e30))

    # TODO(synk): torch_scatter's fill value for degree-0 nodes is version dependent
    #             (0 vs dtype-min); 0 is used here (demo graph has no isolated nodes).
    max_agg = jnp.where(max_agg < -1e29, 0.0, max_agg)

    # merge 'cat' + Linear(2D -> D): one fused K=256 MXU pass (bf16 operands, f32 acc).
    agg_cat = jnp.concatenate([sum_agg, max_agg], axis=1).astype(bf16)   # (TN, 256)
    x_agg = jnp.dot(agg_cat, wm_ref[...], preferred_element_type=f32) + bm_ref[...]

    # update 'cat' + backbone dense0: one fused K=256 MXU pass, then LeakyReLU(0.01).
    row0 = pl.multiple_of(t * tile_n, tile_n)
    x_tile = x_ref[pl.ds(row0, tile_n), :]                               # (TN, 128) bf16
    xu = jnp.concatenate([x_tile, x_agg.astype(bf16)], axis=1)           # (TN, 256) bf16
    h = jnp.dot(xu, w0_ref[...], preferred_element_type=f32) + b0_ref[...]
    h = jnp.where(h > 0, h, 0.01 * h)

    # Zero padded node rows so the downstream BN statistics need no extra masking.
    rows = t * tile_n + jax.lax.broadcasted_iota(jnp.int32, (tile_n, 1), 0)
    h = jnp.where(rows < n_valid, h, 0.0)

    h_ref[...] = h.astype(h_ref.dtype)                      # bf16 hop to kernel B

    # Per-tile partial BN0 statistics (finalized in the wrapper: tiny O(H) math).
    s0 = jnp.sum(h, axis=0, keepdims=True)
    s1 = jnp.sum(h * h, axis=0, keepdims=True)
    st_ref[...] = jnp.concatenate([s0, s1, jnp.zeros((6, h.shape[1]), f32)], axis=0)


# ------------------------- Kernel B: BN0 apply -> dense1 -> LeakyReLU ------------------------


def bn_dense1_kernel(h_ref, sc0_ref, sh0_ref, w1_ref, b1_ref, y_ref, st_ref,
                     *, tile_n, n_valid):
    f32, bf16 = jnp.float32, jnp.bfloat16
    t = pl.program_id(0)

    hn = h_ref[...].astype(f32) * sc0_ref[...] + sh0_ref[...]            # BN0 (scale/shift form)
    y = jnp.dot(hn.astype(bf16), w1_ref[...], preferred_element_type=f32) + b1_ref[...]
    y = jnp.where(y > 0, y, 0.01 * y)                                    # LeakyReLU(0.01)

    rows = t * tile_n + jax.lax.broadcasted_iota(jnp.int32, (tile_n, 1), 0)
    y = jnp.where(rows < n_valid, y, 0.0)                                # zero padded rows

    y_ref[...] = y
    s0 = jnp.sum(y, axis=0, keepdims=True)                               # partial BN1 stats
    s1 = jnp.sum(y * y, axis=0, keepdims=True)
    st_ref[...] = jnp.concatenate([s0, s1, jnp.zeros((6, y.shape[1]), jnp.float32)], axis=0)


# ----------------------------------- Kernel C: BN1 apply ------------------------------------


def bn_apply_kernel(y_ref, sc1_ref, sh1_ref, out_ref):
    out_ref[...] = y_ref[...] * sc1_ref[...] + sh1_ref[...]


# --------------------------------------- wrapper --------------------------------------------


def _bn_scale_shift(s, ss, n, gamma, beta, eps=1e-5):
    """Training-mode BatchNorm (biased variance) folded into a per-feature scale/shift.
    All operands are (1, 128) vectors -> negligible XLA glue between kernels."""
    inv_n = 1.0 / float(n)
    mu = s * inv_n
    var = jnp.maximum(ss * inv_n - mu * mu, 0.0)
    scale = gamma * jax.lax.rsqrt(var + eps)
    return scale, beta - mu * scale


@functools.partial(jax.jit, static_argnames=("output_dim", "tile_n"))
def graph_conv_forward(x, nbr_tbl, ew_tbl, deg_tbl, params, *, output_dim, tile_n=128):
    """x: (N, D) f32.  nbr_tbl/ew_tbl/deg_tbl: padded per-node neighbor tables built by
    build_neighbor_tables (O(N*max_deg) memory; no dense one-hot HBM matrices)."""
    N, D = x.shape
    n_pad, max_deg = ew_tbl.shape
    assert n_pad % tile_n == 0 and tile_n % 8 == 0 and n_pad >= N and D <= LANE
    d_pad = LANE
    h_pad = params["b0"].shape[1]
    o_pad = params["b1"].shape[1]
    num_tiles = n_pad // tile_n

    # Lane-dense, zero-padded node features.  bf16: the features only feed MXU operands
    # (gather / merge / dense0), halving the resident gather-source block.
    x_pad = jnp.zeros((n_pad, d_pad), jnp.bfloat16).at[:N, :D].set(x.astype(jnp.bfloat16))

    cparams = pltpu.CompilerParams(dimension_semantics=("parallel",),
                                   vmem_limit_bytes=VMEM_LIMIT_BYTES)

    # ---- stage A: aggregate + merge + dense0 + LeakyReLU (+ partial BN0 stats) ----
    kern_a = functools.partial(graph_aggregate_kernel,
                               tile_n=tile_n, max_deg=max_deg, n_valid=N)
    h_bf16, st0 = pl.pallas_call(
        kern_a,
        out_shape=(jax.ShapeDtypeStruct((n_pad, h_pad), jnp.bfloat16),
                   jax.ShapeDtypeStruct((num_tiles * 8, h_pad), jnp.float32)),
        grid=(num_tiles,),
        in_specs=[
            pl.BlockSpec((n_pad, d_pad), lambda t: (0, 0)),       # x (resident; not re-DMA'd)
            pl.BlockSpec((tile_n, max_deg), lambda t: (t, 0)),    # neighbor ids (per tile, VMEM)
            pl.BlockSpec((tile_n, max_deg), lambda t: (t, 0)),    # edge weights (per tile)
            pl.BlockSpec((tile_n, 1), lambda t: (t, 0)),          # in-degree (per tile)
            pl.BlockSpec((2 * d_pad, d_pad), lambda t: (0, 0)),   # fused merge weight
            pl.BlockSpec((1, d_pad), lambda t: (0, 0)),           # merge bias
            pl.BlockSpec((2 * d_pad, h_pad), lambda t: (0, 0)),   # fused dense0 weight
            pl.BlockSpec((1, h_pad), lambda t: (0, 0)),           # dense0 bias
        ],
        out_specs=(pl.BlockSpec((tile_n, h_pad), lambda t: (t, 0)),
                   pl.BlockSpec((8, h_pad), lambda t: (t, 0))),
        compiler_params=cparams,
    )(x_pad, nbr_tbl, ew_tbl, deg_tbl,
      params["wm_cat"], params["bm"], params["w0_cat"], params["b0"])

    st0r = st0.reshape(num_tiles, 8, h_pad)
    scale0, shift0 = _bn_scale_shift(st0r[:, 0, :].sum(0, keepdims=True),
                                     st0r[:, 1, :].sum(0, keepdims=True),
                                     N, params["gamma0"], params["beta0"])

    # ---- stage B: BN0 apply -> dense1 -> LeakyReLU (+ partial BN1 stats), tiled ----
    kern_b = functools.partial(bn_dense1_kernel, tile_n=tile_n, n_valid=N)
    y, st1 = pl.pallas_call(
        kern_b,
        out_shape=(jax.ShapeDtypeStruct((n_pad, o_pad), jnp.float32),
                   jax.ShapeDtypeStruct((num_tiles * 8, o_pad), jnp.float32)),
        grid=(num_tiles,),
        in_specs=[
            pl.BlockSpec((tile_n, h_pad), lambda t: (t, 0)),      # h (bf16, per tile)
            pl.BlockSpec((1, h_pad), lambda t: (0, 0)),           # BN0 scale
            pl.BlockSpec((1, h_pad), lambda t: (0, 0)),           # BN0 shift
            pl.BlockSpec((h_pad, o_pad), lambda t: (0, 0)),       # dense1 weight
            pl.BlockSpec((1, o_pad), lambda t: (0, 0)),           # dense1 bias
        ],
        out_specs=(pl.BlockSpec((tile_n, o_pad), lambda t: (t, 0)),
                   pl.BlockSpec((8, o_pad), lambda t: (t, 0))),
        compiler_params=cparams,
    )(h_bf16, scale0, shift0, params["w1"], params["b1"])

    st1r = st1.reshape(num_tiles, 8, o_pad)
    scale1, shift1 = _bn_scale_shift(st1r[:, 0, :].sum(0, keepdims=True),
                                     st1r[:, 1, :].sum(0, keepdims=True),
                                     N, params["gamma1"], params["beta1"])

    # ---- stage C: BN1 apply, tiled ----
    out_pad = pl.pallas_call(
        bn_apply_kernel,
        out_shape=jax.ShapeDtypeStruct((n_pad, o_pad), jnp.float32),
        grid=(num_tiles,),
        in_specs=[pl.BlockSpec((tile_n, o_pad), lambda t: (t, 0)),
                  pl.BlockSpec((1, o_pad), lambda t: (0, 0)),
                  pl.BlockSpec((1, o_pad), lambda t: (0, 0))],
        out_specs=pl.BlockSpec((tile_n, o_pad), lambda t: (t, 0)),
        compiler_params=cparams,
    )(y, scale1, shift1)

    return out_pad[:N, :output_dim]


# -------------------------- host-side O(E) graph preprocessing ------------------------------


def build_neighbor_tables(edges, edge_weights, num_nodes, n_pad):
    """CSR-like padded per-node neighbor tables: neighbor ids, edge weights, in-degree.
    Memory is O(N * max_deg); no dense (E, N) one-hot matrices."""
    edges = np.asarray(edges)
    w = np.asarray(edge_weights, np.float32)
    assert int(edges.max()) < num_nodes
    deg = np.zeros(n_pad, np.int32)
    for dnode in edges[1]:
        deg[int(dnode)] += 1
    max_deg = max(1, int(deg.max()))

    nbr = np.zeros((n_pad, max_deg), np.int32)     # empty slots point at node 0 (weight 0)
    ew = np.zeros((n_pad, max_deg), np.float32)    # weight 0 -> no sum contribution
    fill = np.zeros(n_pad, np.int64)
    for e in range(edges.shape[1]):
        s, dnode = int(edges[0, e]), int(edges[1, e])
        k = int(fill[dnode]); fill[dnode] = k + 1
        nbr[dnode, k] = s
        ew[dnode, k] = w[e]
    return jnp.asarray(nbr), jnp.asarray(ew), jnp.asarray(deg.reshape(n_pad, 1))


# ---------------------------- deterministic parameters --------------------------------------


def init_params(key, input_dim, hidden_dim, output_dim):
    """PyTorch-Linear-style U(-1/sqrt(fan_in), 1/sqrt(fan_in)) init, then fused +
    zero-padded to 128-lane, MXU-ready (bf16) layouts.
    Note: bf16 MXU operands (f32 accumulation) -> ~1e-3 relative error vs an f32 torch ref."""
    D, H, OUT = input_dim, hidden_dim, output_dim
    Dp = Hp = Op = LANE
    ks = jax.random.split(key, 6)

    def lin(k, fan_in, shape):
        bound = 1.0 / float(np.sqrt(fan_in))
        return jax.random.uniform(k, shape, jnp.float32, -bound, bound)

    wm = lin(ks[0], 2 * D, (D, 2 * D))      # merge_layer: Linear(2D -> D), torch layout (D, 2D)
    bm = lin(ks[1], 2 * D, (D,))
    w0 = lin(ks[2], 2 * D, (H, 2 * D))      # dense0: Linear(2D -> H)
    b0 = lin(ks[3], 2 * D, (H,))
    w1 = lin(ks[4], H, (OUT, H))            # dense1: Linear(H -> OUT)
    b1 = lin(ks[5], H, (OUT,))

    wm_cat = jnp.zeros((2 * Dp, Dp), jnp.float32)
    wm_cat = wm_cat.at[0:D, 0:D].set(wm[:, :D].T)          # sum part
    wm_cat = wm_cat.at[Dp:Dp + D, 0:D].set(wm[:, D:].T)    # max part
    w0_cat = jnp.zeros((2 * Dp, Hp), jnp.float32)
    w0_cat = w0_cat.at[0:D, 0:H].set(w0[:, :D].T)          # center-x part
    w0_cat = w0_cat.at[Dp:Dp + D, 0:H].set(w0[:, D:].T)    # aggregated part
    w1_p = jnp.zeros((Hp, Op), jnp.float32).at[0:H, 0:OUT].set(w1.T)

    def padrow(v, n):
        return jnp.zeros((1, n), jnp.float32).at[0, :v.shape[0]].set(v)

    return {
        "wm_cat": wm_cat.astype(jnp.bfloat16), "bm": padrow(bm, Dp),
        "w0_cat": w0_cat.astype(jnp.bfloat16), "b0": padrow(b0, Hp),
        "gamma0": padrow(jnp.ones((H,), jnp.float32), Hp),
        "beta0": padrow(jnp.zeros((H,), jnp.float32), Hp),
        "w1": w1_p.astype(jnp.bfloat16), "b1": padrow(b1, Op),
        "gamma1": padrow(jnp.ones((OUT,), jnp.float32), Op),
        "beta1": padrow(jnp.zeros((OUT,), jnp.float32), Op),
    }


# -------------------------------------------- main ------------------------------------------

if __name__ == "__main__":
    N = 200      # node_num (not a tile multiple, to exercise the row-padding/masking path)
    D = 16       # input_dim
    H = 32       # backbone hidden_dim
    OUT = 8      # output_dim
    TILE_N = 128 # node tile (rows per grid step); 128 for v5e, 256 on v6e/v7x if VMEM allows

    key = jax.random.PRNGKey(0)
    k_x, k_w, k_p = jax.random.split(key, 3)

    x = jax.random.normal(k_x, (N, D), jnp.float32)

    # Deterministic graph: node i receives edges from (i+1)%N, (i+5)%N and, for even i,
    # also (i+11)%N -> in-degree 2 or 3, E = 500.
    src_l, dst_l = [], []
    for i in range(N):
        nbrs = [(i + 1) % N, (i + 5) % N] + ([(i + 11) % N] if i % 2 == 0 else [])
        for s in nbrs:
            src_l.append(s)
            dst_l.append(i)
    edges = np.asarray([src_l, dst_l], dtype=np.int32)                    # (2, E)
    E = edges.shape[1]
    edge_weights = jax.random.uniform(k_w, (E,), jnp.float32, 0.5, 1.5)

    n_pad = _round_up(N, TILE_N)
    nbr_tbl, ew_tbl, deg_tbl = build_neighbor_tables(
        edges, np.asarray(edge_weights), num_nodes=N, n_pad=n_pad)

    params = init_params(k_p, D, H, OUT)

    out = graph_conv_forward(x, nbr_tbl, ew_tbl, deg_tbl, params,
                             output_dim=OUT, tile_n=TILE_N)
    out = jax.block_until_ready(out)

    assert out.shape == (N, OUT) and bool(jnp.all(jnp.isfinite(out)))
    print("KERNEL_OK")
</pallas_src>

<mosaic_0001>
module attributes {stable_mosaic.version = 11 : i64} {
  func.func @graph_aggregate_kernel(%arg0: i32, %arg1: memref<256x128xbf16, #tpu.memory_space<vmem>>, %arg2: memref<128x3xi32, #tpu.memory_space<vmem>>, %arg3: memref<128x3xf32, #tpu.memory_space<vmem>>, %arg4: memref<128x1xi32, #tpu.memory_space<vmem>>, %arg5: memref<256x128xbf16, #tpu.memory_space<vmem>>, %arg6: memref<1x128xf32, #tpu.memory_space<vmem>>, %arg7: memref<256x128xbf16, #tpu.memory_space<vmem>>, %arg8: memref<1x128xf32, #tpu.memory_space<vmem>>, %arg9: memref<128x128xbf16, #tpu.memory_space<vmem>>, %arg10: memref<8x128xf32, #tpu.memory_space<vmem>>) attributes {dimension_semantics = [#tpu.dimension_semantics<parallel>], iteration_bounds = array<i64: 2>, scalar_prefetch = 0 : i64, scratch_operands = 0 : i64, tpu.core_type = #tpu.core_type<tc>, window_params = [{pipeline_mode = #tpu.pipeline_mode<synchronous>, transform_indices = @transform_0, window_bounds = array<i64: 256, 128>}, {transform_indices = @transform_1, window_bounds = array<i64: 128, 3>}, {transform_indices = @transform_2, window_bounds = array<i64: 128, 3>}, {transform_indices = @transform_3, window_bounds = array<i64: 128, 1>}, {pipeline_mode = #tpu.pipeline_mode<synchronous>, transform_indices = @transform_4, window_bounds = array<i64: 256, 128>}, {pipeline_mode = #tpu.pipeline_mode<synchronous>, transform_indices = @transform_5, window_bounds = array<i64: 1, 128>}, {pipeline_mode = #tpu.pipeline_mode<synchronous>, transform_indices = @transform_6, window_bounds = array<i64: 256, 128>}, {pipeline_mode = #tpu.pipeline_mode<synchronous>, transform_indices = @transform_7, window_bounds = array<i64: 1, 128>}, {transform_indices = @transform_8, window_bounds = array<i64: 128, 128>}, {transform_indices = @transform_9, window_bounds = array<i64: 8, 128>}]} {
    %c0 = arith.constant 0 : index
    %c0_0 = arith.constant 0 : index
    %0 = vector.load %arg1[%c0, %c0_0] : memref<256x128xbf16, #tpu.memory_space<vmem>>, vector<256x128xbf16>
    %c0_1 = arith.constant 0 : index
    %c0_2 = arith.constant 0 : index
    %1 = vector.load %arg2[%c0_1, %c0_2] : memref<128x3xi32, #tpu.memory_space<vmem>>, vector<128x3xi32>
    %c0_3 = arith.constant 0 : index
    %c0_4 = arith.constant 0 : index
    %2 = vector.load %arg3[%c0_3, %c0_4] : memref<128x3xf32, #tpu.memory_space<vmem>>, vector<128x3xf32>
    %c0_5 = arith.constant 0 : index
    %c0_6 = arith.constant 0 : index
    %3 = vector.load %arg4[%c0_5, %c0_6] : memref<128x1xi32, #tpu.memory_space<vmem>>, vector<128x1xi32>
    %4 = tpu.iota {dimensions = array<i32: 1>} : vector<128x256xi32>
    %cst = arith.constant 0.000000e+00 : f32
    %5 = vector.broadcast %cst : f32 to vector<128x128xf32>
    %cst_7 = arith.constant -1.000000e+30 : f32
    %6 = vector.broadcast %cst_7 : f32 to vector<128x128xf32>
    %7 = vector.extract_strided_slice %1 {offsets = [0, 0], sizes = [128, 1], strides = [1, 1]} : vector<128x3xi32> to vector<128x1xi32>
    %8 = vector.broadcast %7 : vector<128x1xi32> to vector<128x256xi32>
    %9 = arith.cmpi eq, %4, %8 : vector<128x256xi32>
    %cst_8 = arith.constant 1.000000e+00 : f32
    %cst_9 = arith.constant 0.000000e+00 : f32
    %10 = vector.broadcast %cst_8 : f32 to vector<128x256xf32>
    %11 = vector.broadcast %cst_9 : f32 to vector<128x256xf32>
    %12 = arith.select %9, %10, %11 : vector<128x256xi1>, vector<128x256xf32>
    %13 = arith.truncf %12 : vector<128x256xf32> to vector<128x256xbf16>
    %cst_10 = arith.constant dense<0.000000e+00> : vector<128x128xf32>
    %14 = tpu.matmul %13, %0, %cst_10 {dimension_numbers = #tpu.dot_dimension_numbers<[1], [0], [0], [1], [0, 0, 1, 1], [], []>} : vector<128x256xbf16>, vector<256x128xbf16>, vector<128x128xf32> -> vector<128x128xf32>
    %15 = vector.extract_strided_slice %2 {offsets = [0, 0], sizes = [128, 1], strides = [1, 1]} : vector<128x3xf32> to vector<128x1xf32>
    %16 = vector.broadcast %15 : vector<128x1xf32> to vector<128x128xf32>
    %17 = arith.mulf %14, %16 : vector<128x128xf32>
    %18 = arith.addf %5, %17 : vector<128x128xf32>
    %c0_i32 = arith.constant 0 : i32
    %19 = vector.broadcast %c0_i32 : i32 to vector<128x1xi32>
    %20 = arith.cmpi sgt, %3, %19 : vector<128x1xi32>
    %cst_11 = arith.constant -1.000000e+30 : f32
    %21 = vector.shape_cast %20 : vector<128x1xi1> to vector<128x1xi1>
    %22 = vector.broadcast %21 : vector<128x1xi1> to vector<128x128xi1>
    %23 = vector.broadcast %cst_11 : f32 to vector<128x128xf32>
    %24 = arith.select %22, %17, %23 : vector<128x128xi1>, vector<128x128xf32>
    %25 = arith.maximumf %6, %24 : vector<128x128xf32>
    %26 = vector.extract_strided_slice %1 {offsets = [0, 1], sizes = [128, 1], strides = [1, 1]} : vector<128x3xi32> to vector<128x1xi32>
    %27 = vector.broadcast %26 : vector<128x1xi32> to vector<128x256xi32>
    %28 = arith.cmpi eq, %4, %27 : vector<128x256xi32>
    %cst_12 = arith.constant 1.000000e+00 : f32
    %cst_13 = arith.constant 0.000000e+00 : f32
    %29 = vector.broadcast %cst_12 : f32 to vector<128x256xf32>
    %30 = vector.broadcast %cst_13 : f32 to vector<128x256xf32>
    %31 = arith.select %28, %29, %30 : vector<128x256xi1>, vector<128x256xf32>
    %32 = arith.truncf %31 : vector<128x256xf32> to vector<128x256xbf16>
    %cst_14 = arith.constant dense<0.000000e+00> : vector<128x128xf32>
    %33 = tpu.matmul %32, %0, %cst_14 {dimension_numbers = #tpu.dot_dimension_numbers<[1], [0], [0], [1], [0, 0, 1, 1], [], []>} : vector<128x256xbf16>, vector<256x128xbf16>, vector<128x128xf32> -> vector<128x128xf32>
    %34 = vector.extract_strided_slice %2 {offsets = [0, 1], sizes = [128, 1], strides = [1, 1]} : vector<128x3xf32> to vector<128x1xf32>
    %35 = vector.broadcast %34 : vector<128x1xf32> to vector<128x128xf32>
    %36 = arith.mulf %33, %35 : vector<128x128xf32>
    %37 = arith.addf %18, %36 : vector<128x128xf32>
    %c1_i32 = arith.constant 1 : i32
    %38 = vector.broadcast %c1_i32 : i32 to vector<128x1xi32>
    %39 = arith.cmpi sgt, %3, %38 : vector<128x1xi32>
    %cst_15 = arith.constant -1.000000e+30 : f32
    %40 = vector.shape_cast %39 : vector<128x1xi1> to vector<128x1xi1>
    %41 = vector.broadcast %40 : vector<128x1xi1> to vector<128x128xi1>
    %42 = vector.broadcast %cst_15 : f32 to vector<128x128xf32>
    %43 = arith.select %41, %36, %42 : vector<128x128xi1>, vector<128x128xf32>
    %44 = arith.maximumf %25, %43 : vector<128x128xf32>
    %45 = vector.extract_strided_slice %1 {offsets = [0, 2], sizes = [128, 1], strides = [1, 1]} : vector<128x3xi32> to vector<128x1xi32>
    %46 = vector.broadcast %45 : vector<128x1xi32> to vector<128x256xi32>
    %47 = arith.cmpi eq, %4, %46 : vector<128x256xi32>
    %cst_16 = arith.constant 1.000000e+00 : f32
    %cst_17 = arith.constant 0.000000e+00 : f32
    %48 = vector.broadcast %cst_16 : f32 to vector<128x256xf32>
    %49 = vector.broadcast %cst_17 : f32 to vector<128x256xf32>
    %50 = arith.select %47, %48, %49 : vector<128x256xi1>, vector<128x256xf32>
    %51 = arith.truncf %50 : vector<128x256xf32> to vector<128x256xbf16>
    %cst_18 = arith.constant dense<0.000000e+00> : vector<128x128xf32>
    %52 = tpu.matmul %51, %0, %cst_18 {dimension_numbers = #tpu.dot_dimension_numbers<[1], [0], [0], [1], [0, 0, 1, 1], [], []>} : vector<128x256xbf16>, vector<256x128xbf16>, vector<128x128xf32> -> vector<128x128xf32>
    %53 = vector.extract_strided_slice %2 {offsets = [0, 2], sizes = [128, 1], strides = [1, 1]} : vector<128x3xf32> to vector<128x1xf32>
    %54 = vector.broadcast %53 : vector<128x1xf32> to vector<128x128xf32>
    %55 = arith.mulf %52, %54 : vector<128x128xf32>
    %56 = arith.addf %37, %55 : vector<128x128xf32>
    %c2_i32 = arith.constant 2 : i32
    %57 = vector.broadcast %c2_i32 : i32 to vector<128x1xi32>
    %58 = arith.cmpi sgt, %3, %57 : vector<128x1xi32>
    %cst_19 = arith.constant -1.000000e+30 : f32
    %59 = vector.shape_cast %58 : vector<128x1xi1> to vector<128x1xi1>
    %60 = vector.broadcast %59 : vector<128x1xi1> to vector<128x128xi1>
    %61 = vector.broadcast %cst_19 : f32 to vector<128x128xf32>
    %62 = arith.select %60, %55, %61 : vector<128x128xi1>, vector<128x128xf32>
    %63 = arith.maximumf %44, %62 : vector<128x128xf32>
    %cst_20 = arith.constant -1.000000e+29 : f32
    %64 = vector.broadcast %cst_20 : f32 to vector<128x128xf32>
    %65 = arith.cmpf olt, %63, %64 : vector<128x128xf32>
    %cst_21 = arith.constant 0.000000e+00 : f32
    %66 = vector.broadcast %cst_21 : f32 to vector<128x128xf32>
    %67 = arith.select %65, %66, %63 : vector<128x128xi1>, vector<128x128xf32>
    %68 = tpu.concatenate %56, %67 in 1 : vector<128x128xf32>, vector<128x128xf32> -> vector<128x256xf32>
    %69 = arith.truncf %68 : vector<128x256xf32> to vector<128x256xbf16>
    %c0_22 = arith.constant 0 : index
    %c0_23 = arith.constant 0 : index
    %70 = vector.load %arg5[%c0_22, %c0_23] : memref<256x128xbf16, #tpu.memory_space<vmem>>, vector<256x128xbf16>
    %cst_24 = arith.constant dense<0.000000e+00> : vector<128x128xf32>
    %71 = tpu.matmul %69, %70, %cst_24 {dimension_numbers = #tpu.dot_dimension_numbers<[1], [0], [0], [1], [0, 0, 1, 1], [], []>} : vector<128x256xbf16>, vector<256x128xbf16>, vector<128x128xf32> -> vector<128x128xf32>
    %c0_25 = arith.constant 0 : index
    %c0_26 = arith.constant 0 : index
    %72 = vector.load %arg6[%c0_25, %c0_26] : memref<1x128xf32, #tpu.memory_space<vmem>>, vector<1x128xf32>
    %73 = vector.broadcast %72 : vector<1x128xf32> to vector<128x128xf32>
    %74 = arith.addf %71, %73 : vector<128x128xf32>
    %c128_i32 = arith.constant 128 : i32
    %75 = arith.muli %arg0, %c128_i32 : i32
    %76 = tpu.assume_multiple %75, 128 : i32
    %77 = arith.index_cast %76 : i32 to index
    %c0_27 = arith.constant 0 : index
    %78 = vector.load %arg1[%77, %c0_27] : memref<256x128xbf16, #tpu.memory_space<vmem>>, vector<128x128xbf16>
    %79 = arith.truncf %74 : vector<128x128xf32> to vector<128x128xbf16>
    %80 = tpu.concatenate %78, %79 in 1 : vector<128x128xbf16>, vector<128x128xbf16> -> vector<128x256xbf16>
    %c0_28 = arith.constant 0 : index
    %c0_29 = arith.constant 0 : index
    %81 = vector.load %arg7[%c0_28, %c0_29] : memref<256x128xbf16, #tpu.memory_space<vmem>>, vector<256x128xbf16>
    %cst_30 = arith.constant dense<0.000000e+00> : vector<128x128xf32>
    %82 = tpu.matmul %80, %81, %cst_30 {dimension_numbers = #tpu.dot_dimension_numbers<[1], [0], [0], [1], [0, 0, 1, 1], [], []>} : vector<128x256xbf16>, vector<256x128xbf16>, vector<128x128xf32> -> vector<128x128xf32>
    %c0_31 = arith.constant 0 : index
    %c0_32 = arith.constant 0 : index
    %83 = vector.load %arg8[%c0_31, %c0_32] : memref<1x128xf32, #tpu.memory_space<vmem>>, vector<1x128xf32>
    %84 = vector.broadcast %83 : vector<1x128xf32> to vector<128x128xf32>
    %85 = arith.addf %82, %84 : vector<128x128xf32>
    %cst_33 = arith.constant 0.000000e+00 : f32
    %86 = vector.broadcast %cst_33 : f32 to vector<128x128xf32>
    %87 = arith.cmpf ogt, %85, %86 : vector<128x128xf32>
    %cst_34 = arith.constant 0.00999999977 : f32
    %88 = vector.broadcast %cst_34 : f32 to vector<128x128xf32>
    %89 = arith.mulf %88, %85 : vector<128x128xf32>
    %90 = arith.select %87, %85, %89 : vector<128x128xi1>, vector<128x128xf32>
    %c128_i32_35 = arith.constant 128 : i32
    %91 = arith.muli %arg0, %c128_i32_35 : i32
    %92 = tpu.iota {dimensions = array<i32: 0>} : vector<128x1xi32>
    %93 = vector.broadcast %91 : i32 to vector<128x1xi32>
    %94 = arith.addi %93, %92 : vector<128x1xi32>
    %c200_i32 = arith.constant 200 : i32
    %95 = vector.broadcast %c200_i32 : i32 to vector<128x1xi32>
    %96 = arith.cmpi slt, %94, %95 : vector<128x1xi32>
    %cst_36 = arith.constant 0.000000e+00 : f32
    %97 = vector.shape_cast %96 : vector<128x1xi1> to vector<128x1xi1>
    %98 = vector.broadcast %97 : vector<128x1xi1> to vector<128x128xi1>
    %99 = vector.broadcast %cst_36 : f32 to vector<128x128xf32>
    %100 = arith.select %98, %90, %99 : vector<128x128xi1>, vector<128x128xf32>
    %101 = arith.truncf %100 : vector<128x128xf32> to vector<128x128xbf16>
    %c0_37 = arith.constant 0 : index
    %c0_38 = arith.constant 0 : index
    %102 = vector.load %arg9[%c0_37, %c0_38] : memref<128x128xbf16, #tpu.memory_space<vmem>>, vector<128x128xbf16>
    tpu.vector_store %arg9[%c0_37, %c0_38], %101 {strides = array<i32>} : memref<128x128xbf16, #tpu.memory_space<vmem>>, vector<128x128xbf16>,
    %cst_39 = arith.constant dense<0.000000e+00> : vector<128xf32>
    %103 = vector.multi_reduction <add>, %100, %cst_39 [0] : vector<128x128xf32> to vector<128xf32>
    %104 = vector.shape_cast %103 : vector<128xf32> to vector<1x128xf32>
    %105 = arith.mulf %100, %100 : vector<128x128xf32>
    %cst_40 = arith.constant dense<0.000000e+00> : vector<128xf32>
    %106 = vector.multi_reduction <add>, %105, %cst_40 [0] : vector<128x128xf32> to vector<128xf32>
    %107 = vector.shape_cast %106 : vector<128xf32> to vector<1x128xf32>
    %cst_41 = arith.constant 0.000000e+00 : f32
    %108 = vector.broadcast %cst_41 : f32 to vector<6x128xf32>
    %109 = tpu.concatenate %104, %107, %108 in 0 : vector<1x128xf32>, vector<1x128xf32>, vector<6x128xf32> -> vector<8x128xf32>
    %c0_42 = arith.constant 0 : index
    %c0_43 = arith.constant 0 : index
    %110 = vector.load %arg10[%c0_42, %c0_43] : memref<8x128xf32, #tpu.memory_space<vmem>>, vector<8x128xf32>
    tpu.vector_store %arg10[%c0_42, %c0_43], %109 {strides = array<i32>} : memref<8x128xf32, #tpu.memory_space<vmem>>, vector<8x128xf32>,
    return
  }
  func.func @transform_0(%arg0: i32) -> (i32, i32) {
    %c0_i32 = arith.constant 0 : i32
    %c0_i32_0 = arith.constant 0 : i32
    %c0_i32_1 = arith.constant 0 : i32
    return %c0_i32, %c0_i32_0 : i32, i32
  }
  func.func @transform_1(%arg0: i32) -> (i32, i32) {
    %c0_i32 = arith.constant 0 : i32
    %c0_i32_0 = arith.constant 0 : i32
    return %arg0, %c0_i32 : i32, i32
  }
  func.func @transform_2(%arg0: i32) -> (i32, i32) {
    %c0_i32 = arith.constant 0 : i32
    %c0_i32_0 = arith.constant 0 : i32
    return %arg0, %c0_i32 : i32, i32
  }
  func.func @transform_3(%arg0: i32) -> (i32, i32) {
    %c0_i32 = arith.constant 0 : i32
    %c0_i32_0 = arith.constant 0 : i32
    return %arg0, %c0_i32 : i32, i32
  }
  func.func @transform_4(%arg0: i32) -> (i32, i32) {
    %c0_i32 = arith.constant 0 : i32
    %c0_i32_0 = arith.constant 0 : i32
    %c0_i32_1 = arith.constant 0 : i32
    return %c0_i32, %c0_i32_0 : i32, i32
  }
  func.func @transform_5(%arg0: i32) -> (i32, i32) {
    %c0_i32 = arith.constant 0 : i32
    %c0_i32_0 = arith.constant 0 : i32
    %c0_i32_1 = arith.constant 0 : i32
    return %c0_i32, %c0_i32_0 : i32, i32
  }
  func.func @transform_6(%arg0: i32) -> (i32, i32) {
    %c0_i32 = arith.constant 0 : i32
    %c0_i32_0 = arith.constant 0 : i32
    %c0_i32_1 = arith.constant 0 : i32
    return %c0_i32, %c0_i32_0 : i32, i32
  }
  func.func @transform_7(%arg0: i32) -> (i32, i32) {
    %c0_i32 = arith.constant 0 : i32
    %c0_i32_0 = arith.constant 0 : i32
    %c0_i32_1 = arith.constant 0 : i32
    return %c0_i32, %c0_i32_0 : i32, i32
  }
  func.func @transform_8(%arg0: i32) -> (i32, i32) {
    %c0_i32 = arith.constant 0 : i32
    %c0_i32_0 = arith.constant 0 : i32
    return %arg0, %c0_i32 : i32, i32
  }
  func.func @transform_9(%arg0: i32) -> (i32, i32) {
    %c0_i32 = arith.constant 0 : i32
    %c0_i32_0 = arith.constant 0 : i32
    return %arg0, %c0_i32 : i32, i32
  }
}

module attributes {stable_mosaic.version = 11 : i64} {
  func.func @bn_dense1_kernel(%arg0: i32, %arg1: memref<128x128xbf16, #tpu.memory_space<vmem>>, %arg2: memref<1x128xf32, #tpu.memory_space<vmem>>, %arg3: memref<1x128xf32, #tpu.memory_space<vmem>>, %arg4: memref<128x128xbf16, #tpu.memory_space<vmem>>, %arg5: memref<1x128xf32, #tpu.memory_space<vmem>>, %arg6: memref<128x128xf32, #tpu.memory_space<vmem>>, %arg7: memref<8x128xf32, #tpu.memory_space<vmem>>) attributes {dimension_semantics = [#tpu.dimension_semantics<parallel>], iteration_bounds = array<i64: 2>, scalar_prefetch = 0 : i64, scratch_operands = 0 : i64, tpu.core_type = #tpu.core_type<tc>, window_params = [{transform_indices = @transform_0, window_bounds = array<i64: 128, 128>}, {pipeline_mode = #tpu.pipeline_mode<synchronous>, transform_indices = @transform_1, window_bounds = array<i64: 1, 128>}, {pipeline_mode = #tpu.pipeline_mode<synchronous>, transform_indices = @transform_2, window_bounds = array<i64: 1, 128>}, {pipeline_mode = #tpu.pipeline_mode<synchronous>, transform_indices = @transform_3, window_bounds = array<i64: 128, 128>}, {pipeline_mode = #tpu.pipeline_mode<synchronous>, transform_indices = @transform_4, window_bounds = array<i64: 1, 128>}, {transform_indices = @transform_5, window_bounds = array<i64: 128, 128>}, {transform_indices = @transform_6, window_bounds = array<i64: 8, 128>}]} {
    %c0 = arith.constant 0 : index
    %c0_0 = arith.constant 0 : index
    %0 = vector.load %arg1[%c0, %c0_0] : memref<128x128xbf16, #tpu.memory_space<vmem>>, vector<128x128xbf16>
    %1 = arith.extf %0 : vector<128x128xbf16> to vector<128x128xf32>
    %c0_1 = arith.constant 0 : index
    %c0_2 = arith.constant 0 : index
    %2 = vector.load %arg2[%c0_1, %c0_2] : memref<1x128xf32, #tpu.memory_space<vmem>>, vector<1x128xf32>
    %3 = vector.broadcast %2 : vector<1x128xf32> to vector<128x128xf32>
    %4 = arith.mulf %1, %3 : vector<128x128xf32>
    %c0_3 = arith.constant 0 : index
    %c0_4 = arith.constant 0 : index
    %5 = vector.load %arg3[%c0_3, %c0_4] : memref<1x128xf32, #tpu.memory_space<vmem>>, vector<1x128xf32>
    %6 = vector.broadcast %5 : vector<1x128xf32> to vector<128x128xf32>
    %7 = arith.addf %4, %6 : vector<128x128xf32>
    %8 = arith.truncf %7 : vector<128x128xf32> to vector<128x128xbf16>
    %c0_5 = arith.constant 0 : index
    %c0_6 = arith.constant 0 : index
    %9 = vector.load %arg4[%c0_5, %c0_6] : memref<128x128xbf16, #tpu.memory_space<vmem>>, vector<128x128xbf16>
    %cst = arith.constant dense<0.000000e+00> : vector<128x128xf32>
    %10 = tpu.matmul %8, %9, %cst {dimension_numbers = #tpu.dot_dimension_numbers<[1], [0], [0], [1], [0, 0, 1, 1], [], []>} : vector<128x128xbf16>, vector<128x128xbf16>, vector<128x128xf32> -> vector<128x128xf32>
    %c0_7 = arith.constant 0 : index
    %c0_8 = arith.constant 0 : index
    %11 = vector.load %arg5[%c0_7, %c0_8] : memref<1x128xf32, #tpu.memory_space<vmem>>, vector<1x128xf32>
    %12 = vector.broadcast %11 : vector<1x128xf32> to vector<128x128xf32>
    %13 = arith.addf %10, %12 : vector<128x128xf32>
    %cst_9 = arith.constant 0.000000e+00 : f32
    %14 = vector.broadcast %cst_9 : f32 to vector<128x128xf32>
    %15 = arith.cmpf ogt, %13, %14 : vector<128x128xf32>
    %cst_10 = arith.constant 0.00999999977 : f32
    %16 = vector.broadcast %cst_10 : f32 to vector<128x128xf32>
    %17 = arith.mulf %16, %13 : vector<128x128xf32>
    %18 = arith.select %15, %13, %17 : vector<128x128xi1>, vector<128x128xf32>
    %c128_i32 = arith.constant 128 : i32
    %19 = arith.muli %arg0, %c128_i32 : i32
    %20 = tpu.iota {dimensions = array<i32: 0>} : vector<128x1xi32>
    %21 = vector.broadcast %19 : i32 to vector<128x1xi32>
    %22 = arith.addi %21, %20 : vector<128x1xi32>
    %c200_i32 = arith.constant 200 : i32
    %23 = vector.broadcast %c200_i32 : i32 to vector<128x1xi32>
    %24 = arith.cmpi slt, %22, %23 : vector<128x1xi32>
    %cst_11 = arith.constant 0.000000e+00 : f32
    %25 = vector.shape_cast %24 : vector<128x1xi1> to vector<128x1xi1>
    %26 = vector.broadcast %25 : vector<128x1xi1> to vector<128x128xi1>
    %27 = vector.broadcast %cst_11 : f32 to vector<128x128xf32>
    %28 = arith.select %26, %18, %27 : vector<128x128xi1>, vector<128x128xf32>
    %c0_12 = arith.constant 0 : index
    %c0_13 = arith.constant 0 : index
    %29 = vector.load %arg6[%c0_12, %c0_13] : memref<128x128xf32, #tpu.memory_space<vmem>>, vector<128x128xf32>
    tpu.vector_store %arg6[%c0_12, %c0_13], %28 {strides = array<i32>} : memref<128x128xf32, #tpu.memory_space<vmem>>, vector<128x128xf32>,
    %cst_14 = arith.constant dense<0.000000e+00> : vector<128xf32>
    %30 = vector.multi_reduction <add>, %28, %cst_14 [0] : vector<128x128xf32> to vector<128xf32>
    %31 = vector.shape_cast %30 : vector<128xf32> to vector<1x128xf32>
    %32 = arith.mulf %28, %28 : vector<128x128xf32>
    %cst_15 = arith.constant dense<0.000000e+00> : vector<128xf32>
    %33 = vector.multi_reduction <add>, %32, %cst_15 [0] : vector<128x128xf32> to vector<128xf32>
    %34 = vector.shape_cast %33 : vector<128xf32> to vector<1x128xf32>
    %cst_16 = arith.constant 0.000000e+00 : f32
    %35 = vector.broadcast %cst_16 : f32 to vector<6x128xf32>
    %36 = tpu.concatenate %31, %34, %35 in 0 : vector<1x128xf32>, vector<1x128xf32>, vector<6x128xf32> -> vector<8x128xf32>
    %c0_17 = arith.constant 0 : index
    %c0_18 = arith.constant 0 : index
    %37 = vector.load %arg7[%c0_17, %c0_18] : memref<8x128xf32, #tpu.memory_space<vmem>>, vector<8x128xf32>
    tpu.vector_store %arg7[%c0_17, %c0_18], %36 {strides = array<i32>} : memref<8x128xf32, #tpu.memory_space<vmem>>, vector<8x128xf32>,
    return
  }
  func.func @transform_0(%arg0: i32) -> (i32, i32) {
    %c0_i32 = arith.constant 0 : i32
    %c0_i32_0 = arith.constant 0 : i32
    return %arg0, %c0_i32 : i32, i32
  }
  func.func @transform_1(%arg0: i32) -> (i32, i32) {
    %c0_i32 = arith.constant 0 : i32
    %c0_i32_0 = arith.constant 0 : i32
    %c0_i32_1 = arith.constant 0 : i32
    return %c0_i32, %c0_i32_0 : i32, i32
  }
  func.func @transform_2(%arg0: i32) -> (i32, i32) {
    %c0_i32 = arith.constant 0 : i32
    %c0_i32_0 = arith.constant 0 : i32
    %c0_i32_1 = arith.constant 0 : i32
    return %c0_i32, %c0_i32_0 : i32, i32
  }
  func.func @transform_3(%arg0: i32) -> (i32, i32) {
    %c0_i32 = arith.constant 0 : i32
    %c0_i32_0 = arith.constant 0 : i32
    %c0_i32_1 = arith.constant 0 : i32
    return %c0_i32, %c0_i32_0 : i32, i32
  }
  func.func @transform_4(%arg0: i32) -> (i32, i32) {
    %c0_i32 = arith.constant 0 : i32
    %c0_i32_0 = arith.constant 0 : i32
    %c0_i32_1 = arith.constant 0 : i32
    return %c0_i32, %c0_i32_0 : i32, i32
  }
  func.func @transform_5(%arg0: i32) -> (i32, i32) {
    %c0_i32 = arith.constant 0 : i32
    %c0_i32_0 = arith.constant 0 : i32
    return %arg0, %c0_i32 : i32, i32
  }
  func.func @transform_6(%arg0: i32) -> (i32, i32) {
    %c0_i32 = arith.constant 0 : i32
    %c0_i32_0 = arith.constant 0 : i32
    return %arg0, %c0_i32 : i32, i32
  }
}

module attributes {stable_mosaic.version = 11 : i64} {
  func.func @bn_apply_kernel(%arg0: i32, %arg1: memref<128x128xf32, #tpu.memory_space<vmem>>, %arg2: memref<1x128xf32, #tpu.memory_space<vmem>>, %arg3: memref<1x128xf32, #tpu.memory_space<vmem>>, %arg4: memref<128x128xf32, #tpu.memory_space<vmem>>) attributes {dimension_semantics = [#tpu.dimension_semantics<parallel>], iteration_bounds = array<i64: 2>, scalar_prefetch = 0 : i64, scratch_operands = 0 : i64, tpu.core_type = #tpu.core_type<tc>, window_params = [{transform_indices = @transform_0, window_bounds = array<i64: 128, 128>}, {pipeline_mode = #tpu.pipeline_mode<synchronous>, transform_indices = @transform_1, window_bounds = array<i64: 1, 128>}, {pipeline_mode = #tpu.pipeline_mode<synchronous>, transform_indices = @transform_2, window_bounds = array<i64: 1, 128>}, {transform_indices = @transform_3, window_bounds = array<i64: 128, 128>}]} {
    %c0 = arith.constant 0 : index
    %c0_0 = arith.constant 0 : index
    %0 = vector.load %arg1[%c0, %c0_0] : memref<128x128xf32, #tpu.memory_space<vmem>>, vector<128x128xf32>
    %c0_1 = arith.constant 0 : index
    %c0_2 = arith.constant 0 : index
    %1 = vector.load %arg2[%c0_1, %c0_2] : memref<1x128xf32, #tpu.memory_space<vmem>>, vector<1x128xf32>
    %2 = vector.broadcast %1 : vector<1x128xf32> to vector<128x128xf32>
    %3 = arith.mulf %0, %2 : vector<128x128xf32>
    %c0_3 = arith.constant 0 : index
    %c0_4 = arith.constant 0 : index
    %4 = vector.load %arg3[%c0_3, %c0_4] : memref<1x128xf32, #tpu.memory_space<vmem>>, vector<1x128xf32>
    %5 = vector.broadcast %4 : vector<1x128xf32> to vector<128x128xf32>
    %6 = arith.addf %3, %5 : vector<128x128xf32>
    %c0_5 = arith.constant 0 : index
    %c0_6 = arith.constant 0 : index
    %7 = vector.load %arg4[%c0_5, %c0_6] : memref<128x128xf32, #tpu.memory_space<vmem>>, vector<128x128xf32>
    tpu.vector_store %arg4[%c0_5, %c0_6], %6 {strides = array<i32>} : memref<128x128xf32, #tpu.memory_space<vmem>>, vector<128x128xf32>,
    return
  }
  func.func @transform_0(%arg0: i32) -> (i32, i32) {
    %c0_i32 = arith.constant 0 : i32
    %c0_i32_0 = arith.constant 0 : i32
    return %arg0, %c0_i32 : i32, i32
  }
  func.func @transform_1(%arg0: i32) -> (i32, i32) {
    %c0_i32 = arith.constant 0 : i32
    %c0_i32_0 = arith.constant 0 : i32
    %c0_i32_1 = arith.constant 0 : i32
    return %c0_i32, %c0_i32_0 : i32, i32
  }
  func.func @transform_2(%arg0: i32) -> (i32, i32) {
    %c0_i32 = arith.constant 0 : i32
    %c0_i32_0 = arith.constant 0 : i32
    %c0_i32_1 = arith.constant 0 : i32
    return %c0_i32, %c0_i32_0 : i32, i32
  }
  func.func @transform_3(%arg0: i32) -> (i32, i32) {
    %c0_i32 = arith.constant 0 : i32
    %c0_i32_0 = arith.constant 0 : i32
    return %arg0, %c0_i32 : i32, i32
  }
}

</mosaic_0001>

<llo_original>
// kernel: graph_conv_forward.5
$region0: #{graph_conv_forward.5}
  #allocation0 [shape = 'u32[]', space=smem, size = 0x4, offset = 0x4, fixed_abs, tag = 'smem constant byte address 0x4 - core index']
  #allocation1 [shape = 'u32[144,128]{1,0:T(1,128)}', space=vmem, size = 0x12000, scoped, tag = 'internal scratch']
  %s0 = inlined_call_operand.vmem [shape: f32[256,128], index: 0, kind: input, shape index: {}]
  %s1 = inlined_call_operand.vmem [shape: f32[1,128], index: 1, kind: input, shape index: {}]
  %s2 = inlined_call_operand.vmem [shape: f32[1,128], index: 2, kind: input, shape index: {}]
  %s3 = inlined_call_operand.vmem [shape: f32[256,128], index: 3, kind: output, shape index: {}]
  %s4 = sld [smem:[#allocation0]]
  $region45: #{graph_conv_forward.5} parent=0
    _
  %s6 = ssub.s32 1, %s4
  %s7 = scalar_select 0, %s6, %s4
  loop: start=0, step=1, limit=4
  $region2: #{graph_conv_forward.5} parent=0 // loop_pre_header
    _
  $region3: #{graph_conv_forward.5} parent=0 // loop_header
    %s9 = sphi 0, %s13
    %p10 = scmp.ge.s32.totalorder %s9, 4
    %s19 = sphi 0, %s21
    %s22 = sphi 0, %s19
    %s23 = sphi 0, %s22
    %s39 = sphi 0, %s23
    %s43 = sphi 0, %s43
    %s45 = sphi 0, %s43
    %s46 = sphi 0, %s45
    %s60 = sphi 0, %s46
    %s64 = sphi 0, %s64
    %s66 = sphi 0, %s64
    %s67 = sphi 0, %s66
    %s81 = sphi 0, %s67
    %s87 = sphi 0, %s89
    %s90 = sphi 0, %s87
    %s91 = sphi 0, %s90
    %s107 = sphi 0, %s91
  $region4: #{graph_conv_forward.5} parent=0 // loop_header_branch
    %12 = sbr.rel (%p10) target = $region8
  $region5: #{graph_conv_forward.5} parent=0 // loop_body
    %s14 = ssub.s32 %s9, 1
    %s15 = ssub.s32 %s9, 2
    %s16 = sadd.s32 %s9, 1
    %s17 = ssub.s32 %s9, %s16
    %p18 = scmp.eq.s32.totalorder %s17, 0
    %s20 = sadd.s32 %s19, 1
    %s21 = scalar_select %p18, %s19, %s20
    %p24 = pneg %p18
    %p25 = scmp.eq.s32.totalorder %s9, 1
    %p26 = por %p24, %p25
    %p27 = scmp.ne.s32.totalorder %s19, %s22
    %p28 = scmp.eq.s32.totalorder %s9, 0
    %p29 = por %p27, %p28
    %p30 = scmp.ne.s32.totalorder %s19, %s22
    %p31 = scmp.eq.s32.totalorder %s14, 1
    %p32 = por %p30, %p31
    %p33 = scmp.ne.s32.totalorder %s22, %s23
    %p34 = scmp.eq.s32.totalorder %s14, 0
    %p35 = por %p33, %p34
    %p36 = scmp.ne.s32.totalorder %s22, %s23
    %p37 = scmp.eq.s32.totalorder %s15, 1
    %p38 = por %p36, %p37
    %p40 = scmp.ne.s32.totalorder %s23, %s39
    %p41 = scmp.eq.s32.totalorder %s15, 0
    %p42 = por %p40, %p41
    %s44 = sadd.s32 %s43, 1
    %p47 = scmp.eq.s32.totalorder %s9, 1
    %p48 = scmp.ne.s32.totalorder %s43, %s45
    %p49 = scmp.eq.s32.totalorder %s9, 0
    %p50 = por %p48, %p49
    %p51 = scmp.ne.s32.totalorder %s43, %s45
    %p52 = scmp.eq.s32.totalorder %s14, 1
    %p53 = por %p51, %p52
    %p54 = scmp.ne.s32.totalorder %s45, %s46
    %p55 = scmp.eq.s32.totalorder %s14, 0
    %p56 = por %p54, %p55
    %p57 = scmp.ne.s32.totalorder %s45, %s46
    %p58 = scmp.eq.s32.totalorder %s15, 1
    %p59 = por %p57, %p58
    %p61 = scmp.ne.s32.totalorder %s46, %s60
    %p62 = scmp.eq.s32.totalorder %s15, 0
    %p63 = por %p61, %p62
    %s65 = sadd.s32 %s64, 1
    %p68 = scmp.eq.s32.totalorder %s9, 1
    %p69 = scmp.ne.s32.totalorder %s64, %s66
    %p70 = scmp.eq.s32.totalorder %s9, 0
    %p71 = por %p69, %p70
    %p72 = scmp.ne.s32.totalorder %s64, %s66
    %p73 = scmp.eq.s32.totalorder %s14, 1
    %p74 = por %p72, %p73
    %p75 = scmp.ne.s32.totalorder %s66, %s67
    %p76 = scmp.eq.s32.totalorder %s14, 0
    %p77 = por %p75, %p76
    %p78 = scmp.ne.s32.totalorder %s66, %s67
    %p79 = scmp.eq.s32.totalorder %s15, 1
    %p80 = por %p78, %p79
    %p82 = scmp.ne.s32.totalorder %s67, %s81
    %p83 = scmp.eq.s32.totalorder %s15, 0
    %p84 = por %p82, %p83
    %s85 = ssub.s32 %s9, %s16
    %p86 = scmp.eq.s32.totalorder %s85, 0
    %s88 = sadd.s32 %s87, 1
    %s89 = scalar_select %p86, %s87, %s88
    %p92 = pneg %p86
    %p93 = scmp.eq.s32.totalorder %s9, 1
    %p94 = por %p92, %p93
    %p95 = scmp.ne.s32.totalorder %s87, %s90
    %p96 = scmp.eq.s32.totalorder %s9, 0
    %p97 = por %p95, %p96
    %p98 = scmp.ne.s32.totalorder %s87, %s90
    %p99 = scmp.eq.s32.totalorder %s14, 1
    %p100 = por %p98, %p99
    %p101 = scmp.ne.s32.totalorder %s90, %s91
    %p102 = scmp.eq.s32.totalorder %s14, 0
    %p103 = por %p101, %p102
    %p104 = scmp.ne.s32.totalorder %s90, %s91
    %p105 = scmp.eq.s32.totalorder %s15, 1
    %p106 = por %p104, %p105
    %p108 = scmp.ne.s32.totalorder %s91, %s107
    %p109 = scmp.eq.s32.totalorder %s15, 0
    %p110 = por %p108, %p109
    %p111 = scmp.le.s32.totalorder 1, %s9
    %p112 = scmp.lt.s32.totalorder %s9, 3
    %p113 = pnand %p111, %p112
    %p114 = pneg %p113
    // Predicated region
    $region9: #{graph_conv_forward.5} parent=5 // pred_check
      _
    $region10: #{graph_conv_forward.5} parent=5 // pred_check_branch
      %116 = sbr.rel (%p113) target = $region12
    $region11: #{graph_conv_forward.5} parent=5 // pred_region
      %s117 = ssub.s32 %s9, 1
      // Predicated region
      $region13: #{graph_conv_forward.5} parent=11 // pred_check
        %p118 = pneg %p56
      $region14: #{graph_conv_forward.5} parent=11 // pred_check_branch
        %120 = sbr.rel (%p118) target = $region16
      $region15: #{graph_conv_forward.5} parent=11 // pred_region
        _
      $region16: #{graph_conv_forward.5} parent=11 // pred_fallthru
        _
      // Predicated region
      $region17: #{graph_conv_forward.5} parent=11 // pred_check
        %p121 = pneg %p77
      $region18: #{graph_conv_forward.5} parent=11 // pred_check_branch
        %123 = sbr.rel (%p121) target = $region20
      $region19: #{graph_conv_forward.5} parent=11 // pred_region
        _
      $region20: #{graph_conv_forward.5} parent=11 // pred_fallthru
        _
    $region12: #{graph_conv_forward.5} parent=5 // pred_fallthru
      _
    %p124 = scmp.lt.s32.totalorder %s9, 2
    // Predicated region
    $region21: #{graph_conv_forward.5} parent=5 // pred_check
      %p125 = pneg %p124
    $region22: #{graph_conv_forward.5} parent=5 // pred_check_branch
      %127 = sbr.rel (%p125) target = $region24
    $region23: #{graph_conv_forward.5} parent=5 // pred_region
      // Predicated region
      $region25: #{graph_conv_forward.5} parent=23 // pred_check
        %p128 = pneg %p29
      $region26: #{graph_conv_forward.5} parent=23 // pred_check_branch
        %130 = sbr.rel (%p128) target = $region28
      $region27: #{graph_conv_forward.5} parent=23 // pred_region
        %s131 = smul.u32 16, %s9
        %p132 = scmp.lt.s32.totalorder %s131, 31
        %s133 = scalar_select %p132, %s131, 31
        %s134 = smul.addr %s133, 8
        %s135 = scalar_lea.vmem %s0, %s134
        %s136 = smul.u32 16, %s9
      $region28: #{graph_conv_forward.5} parent=23 // pred_fallthru
        _
    $region24: #{graph_conv_forward.5} parent=5 // pred_fallthru
      _
    %p137 = scmp.le.s32.totalorder 1, %s9
    %p138 = scmp.lt.s32.totalorder %s9, 3
    %p139 = pnand %p137, %p138
    %p140 = pneg %p139
    // Predicated region
    $region29: #{graph_conv_forward.5} parent=5 // pred_check
      _
    $region30: #{graph_conv_forward.5} parent=5 // pred_check_branch
      %142 = sbr.rel (%p139) target = $region32
    $region31: #{graph_conv_forward.5} parent=5 // pred_region
      %s143 = ssub.s32 %s9, 1
      %s144 = smul.u32 16, %s14
      %p145 = scmp.lt.s32.totalorder %s144, 31
      %s146 = scalar_select %p145, %s144, 31
      %s147 = smul.addr %s146, 8
      %s148 = scalar_lea.vmem %s0, %s147
      %p149 = pneg %p35
      %p150 = pneg %p32
      %p151 = pneg %p56
      %p152 = pneg %p53
      %p153 = pneg %p77
      %p154 = pneg %p74
      %p155 = pneg %p103
      %p156 = pneg %p100
      %s157 = smul.u32 16, %s14
      %p158 = scmp.lt.s32.totalorder %s157, 31
      %s159 = scalar_select %p158, %s157, 31
      %s160 = smul.addr %s159, 8
      %s161 = scalar_lea.vmem %s3, %s160
      %s162 = smul.u32 16, %s14
      %p163 = scmp.lt.s32.totalorder %s162, 31
      %s164 = scalar_select %p163, %s162, 31
      %s165 = smul.addr %s164, 8
      %s166 = scalar_lea.vmem %s0, %s165
      %s167 = smul.u32 16, %s14
      %s168 = smul.u32 16, %s14
      %p169 = scmp.lt.s32.totalorder %s168, 31
      %s170 = scalar_select %p169, %s168, 31
      %s171 = smul.addr %s170, 8
      %s172 = scalar_lea.vmem %s3, %s171
      %s173 = smul.u32 16, %s14
      %v174 = vld [vmem:[%s166] sm:$0xff]
      %v175 = vld [vmem:[%s166 + $0x8] sm:$0xff]
      %v176 = vld [vmem:[%s166 + $0x10] sm:$0xff]
      %v177 = vld [vmem:[%s166 + $0x18] sm:$0xff]
      %v178 = vld [vmem:[%s166 + $0x20] sm:$0xff]
      %v179 = vld [vmem:[%s166 + $0x28] sm:$0xff]
      %v180 = vld [vmem:[%s166 + $0x30] sm:$0xff]
      %v181 = vld [vmem:[%s166 + $0x38] sm:$0xff]
      %v182 = vld [vmem:[%s166 + $0x40] sm:$0xff]
      %v183 = vld [vmem:[%s166 + $0x48] sm:$0xff]
      %v184 = vld [vmem:[%s166 + $0x50] sm:$0xff]
      %v185 = vld [vmem:[%s166 + $0x58] sm:$0xff]
      %v186 = vld [vmem:[%s166 + $0x60] sm:$0xff]
      %v187 = vld [vmem:[%s166 + $0x68] sm:$0xff]
      %v188 = vld [vmem:[%s166 + $0x70] sm:$0xff]
      %v189 = vld [vmem:[%s166 + $0x78] sm:$0xff]
      %v190 = vld [vmem:[%s1] sm:$0x1]
      %v192 = vlaneseq
      %v193 = vshrl.u32 %v192, 7
      %v194 = vsub.s32 0, %v193
      %v195 = vrot.slane %v190, %v194
      %v197 = vmul.f32 %v174, %v195
      %v198 = vmul.f32 %v175, %v195
      %v199 = vmul.f32 %v176, %v195
      %v200 = vmul.f32 %v177, %v195
      %v201 = vmul.f32 %v178, %v195
      %v202 = vmul.f32 %v179, %v195
      %v203 = vmul.f32 %v180, %v195
      %v204 = vmul.f32 %v181, %v195
      %v205 = vmul.f32 %v182, %v195
      %v206 = vmul.f32 %v183, %v195
      %v207 = vmul.f32 %v184, %v195
      %v208 = vmul.f32 %v185, %v195
      %v209 = vmul.f32 %v186, %v195
      %v210 = vmul.f32 %v187, %v195
      %v211 = vmul.f32 %v188, %v195
      %v212 = vmul.f32 %v189, %v195
      %v213 = vld [vmem:[%s2] sm:$0x1]
      %v215 = vlaneseq
      %v216 = vshrl.u32 %v215, 7
      %v217 = vsub.s32 0, %v216
      %v218 = vrot.slane %v213, %v217
      %v220 = vadd.f32 %v197, %v218
      %v221 = vadd.f32 %v198, %v218
      %v222 = vadd.f32 %v199, %v218
      %v223 = vadd.f32 %v200, %v218
      %v224 = vadd.f32 %v201, %v218
      %v225 = vadd.f32 %v202, %v218
      %v226 = vadd.f32 %v203, %v218
      %v227 = vadd.f32 %v204, %v218
      %v228 = vadd.f32 %v205, %v218
      %v229 = vadd.f32 %v206, %v218
      %v230 = vadd.f32 %v207, %v218
      %v231 = vadd.f32 %v208, %v218
      %v232 = vadd.f32 %v209, %v218
      %v233 = vadd.f32 %v210, %v218
      %v234 = vadd.f32 %v211, %v218
      %v235 = vadd.f32 %v212, %v218
      %236 = vst [vmem:[%s172] sm:$0xff] %v220
      %237 = vst [vmem:[%s172 + $0x8] sm:$0xff] %v221
      %238 = vst [vmem:[%s172 + $0x10] sm:$0xff] %v222
      %239 = vst [vmem:[%s172 + $0x18] sm:$0xff] %v223
      %240 = vst [vmem:[%s172 + $0x20] sm:$0xff] %v224
      %241 = vst [vmem:[%s172 + $0x28] sm:$0xff] %v225
      %242 = vst [vmem:[%s172 + $0x30] sm:$0xff] %v226
      %243 = vst [vmem:[%s172 + $0x38] sm:$0xff] %v227
      %244 = vst [vmem:[%s172 + $0x40] sm:$0xff] %v228
      %245 = vst [vmem:[%s172 + $0x48] sm:$0xff] %v229
      %246 = vst [vmem:[%s172 + $0x50] sm:$0xff] %v230
      %247 = vst [vmem:[%s172 + $0x58] sm:$0xff] %v231
      %248 = vst [vmem:[%s172 + $0x60] sm:$0xff] %v232
      %249 = vst [vmem:[%s172 + $0x68] sm:$0xff] %v233
      %250 = vst [vmem:[%s172 + $0x70] sm:$0xff] %v234
      %251 = vst [vmem:[%s172 + $0x78] sm:$0xff] %v235
      %s252 = smul.u32 16, %s14
      %p253 = scmp.lt.s32.totalorder %s252, 31
      %s254 = scalar_select %p253, %s252, 31
      %s255 = smul.addr %s254, 8
      %s256 = scalar_lea.vmem %s3, %s255
      // Predicated region
      $region33: #{graph_conv_forward.5} parent=31 // pred_check
        %p257 = pneg %p100
      $region34: #{graph_conv_forward.5} parent=31 // pred_check_branch
        %259 = sbr.rel (%p257) target = $region36
      $region35: #{graph_conv_forward.5} parent=31 // pred_region
        %s260 = smul.u32 16, %s14
      $region36: #{graph_conv_forward.5} parent=31 // pred_fallthru
        _
    $region32: #{graph_conv_forward.5} parent=5 // pred_fallthru
      _
    %p261 = scmp.le.s32.totalorder 2, %s9
    // Predicated region
    $region37: #{graph_conv_forward.5} parent=5 // pred_check
      %p262 = pneg %p261
    $region38: #{graph_conv_forward.5} parent=5 // pred_check_branch
      %264 = sbr.rel (%p262) target = $region40
    $region39: #{graph_conv_forward.5} parent=5 // pred_region
      %s265 = ssub.s32 %s9, 2
      // Predicated region
      $region41: #{graph_conv_forward.5} parent=39 // pred_check
        %p266 = pneg %p106
      $region42: #{graph_conv_forward.5} parent=39 // pred_check_branch
        %268 = sbr.rel (%p266) target = $region44
      $region43: #{graph_conv_forward.5} parent=39 // pred_region
        %s269 = smul.u32 16, %s15
        %p270 = scmp.lt.s32.totalorder %s269, 31
        %s271 = scalar_select %p270, %s269, 31
        %s272 = smul.addr %s271, 8
        %s273 = scalar_lea.vmem %s3, %s272
      $region44: #{graph_conv_forward.5} parent=39 // pred_fallthru
        _
    $region40: #{graph_conv_forward.5} parent=5 // pred_fallthru
      _
  $region6: #{graph_conv_forward.5} parent=0 // loop_footer
    %s13 = sadd.s32 1, %s9
  $region7: #{graph_conv_forward.5} parent=0 // loop_footer_branch
    %8 = sbr.rel target = $region3
  $region8: #{graph_conv_forward.5} parent=0 // loop_exit
    _

// kernel: graph_conv_forward.4
$region0: #{graph_conv_forward.4}
  #allocation0 [shape = 'u32[]', space=smem, size = 0x4, offset = 0x4, fixed_abs, tag = 'smem constant byte address 0x4 - core index']
  #allocation1 [shape = 'u32[144,128]{1,0:T(1,128)}', space=vmem, size = 0x12000, scoped, tag = 'internal scratch']
  %s0 = inlined_call_operand.vmem [shape: bf16[256,128], index: 0, kind: input, shape index: {}]
  %s1 = inlined_call_operand.vmem [shape: f32[1,128], index: 1, kind: input, shape index: {}]
  %s2 = inlined_call_operand.vmem [shape: f32[1,128], index: 2, kind: input, shape index: {}]
  %s3 = inlined_call_operand.vmem [shape: bf16[128,128], index: 3, kind: input, shape index: {}]
  %s4 = inlined_call_operand.vmem [shape: f32[1,128], index: 4, kind: input, shape index: {}]
  %s5 = inlined_call_operand.vmem [shape: f32[256,128], index: 5, kind: output, shape index: {0}]
  %s6 = inlined_call_operand.vmem [shape: f32[16,128], index: 6, kind: output, shape index: {1}]
  %7 = xla_tuple %s5, %s6
  %s8 = sld [smem:[#allocation0]]
  $region61: #{graph_conv_forward.4} parent=0
    _
  %s10 = ssub.s32 1, %s8
  %s11 = scalar_select 0, %s10, %s8
  loop: start=0, step=1, limit=4
  $region2: #{graph_conv_forward.4} parent=0 // loop_pre_header
    _
  $region3: #{graph_conv_forward.4} parent=0 // loop_header
    %s13 = sphi 0, %s17
    %p14 = scmp.ge.s32.totalorder %s13, 4
    %s23 = sphi 0, %s25
    %s26 = sphi 0, %s23
    %s27 = sphi 0, %s26
    %s43 = sphi 0, %s27
    %s47 = sphi 0, %s47
    %s49 = sphi 0, %s47
    %s50 = sphi 0, %s49
    %s64 = sphi 0, %s50
    %s68 = sphi 0, %s68
    %s70 = sphi 0, %s68
    %s71 = sphi 0, %s70
    %s85 = sphi 0, %s71
    %s89 = sphi 0, %s89
    %s91 = sphi 0, %s89
    %s92 = sphi 0, %s91
    %s106 = sphi 0, %s92
    %s110 = sphi 0, %s110
    %s112 = sphi 0, %s110
    %s113 = sphi 0, %s112
    %s127 = sphi 0, %s113
    %s133 = sphi 0, %s135
    %s136 = sphi 0, %s133
    %s137 = sphi 0, %s136
    %s153 = sphi 0, %s137
    %s159 = sphi 0, %s161
    %s162 = sphi 0, %s159
    %s163 = sphi 0, %s162
    %s179 = sphi 0, %s163
  $region4: #{graph_conv_forward.4} parent=0 // loop_header_branch
    %16 = sbr.rel (%p14) target = $region8
  $region5: #{graph_conv_forward.4} parent=0 // loop_body
    %s18 = ssub.s32 %s13, 1
    %s19 = ssub.s32 %s13, 2
    %s20 = sadd.s32 %s13, 1
    %s21 = ssub.s32 %s13, %s20
    %p22 = scmp.eq.s32.totalorder %s21, 0
    %s24 = sadd.s32 %s23, 1
    %s25 = scalar_select %p22, %s23, %s24
    %p28 = pneg %p22
    %p29 = scmp.eq.s32.totalorder %s13, 1
    %p30 = por %p28, %p29
    %p31 = scmp.ne.s32.totalorder %s23, %s26
    %p32 = scmp.eq.s32.totalorder %s13, 0
    %p33 = por %p31, %p32
    %p34 = scmp.ne.s32.totalorder %s23, %s26
    %p35 = scmp.eq.s32.totalorder %s18, 1
    %p36 = por %p34, %p35
    %p37 = scmp.ne.s32.totalorder %s26, %s27
    %p38 = scmp.eq.s32.totalorder %s18, 0
    %p39 = por %p37, %p38
    %p40 = scmp.ne.s32.totalorder %s26, %s27
    %p41 = scmp.eq.s32.totalorder %s19, 1
    %p42 = por %p40, %p41
    %p44 = scmp.ne.s32.totalorder %s27, %s43
    %p45 = scmp.eq.s32.totalorder %s19, 0
    %p46 = por %p44, %p45
    %s48 = sadd.s32 %s47, 1
    %p51 = scmp.eq.s32.totalorder %s13, 1
    %p52 = scmp.ne.s32.totalorder %s47, %s49
    %p53 = scmp.eq.s32.totalorder %s13, 0
    %p54 = por %p52, %p53
    %p55 = scmp.ne.s32.totalorder %s47, %s49
    %p56 = scmp.eq.s32.totalorder %s18, 1
    %p57 = por %p55, %p56
    %p58 = scmp.ne.s32.totalorder %s49, %s50
    %p59 = scmp.eq.s32.totalorder %s18, 0
    %p60 = por %p58, %p59
    %p61 = scmp.ne.s32.totalorder %s49, %s50
    %p62 = scmp.eq.s32.totalorder %s19, 1
    %p63 = por %p61, %p62
    %p65 = scmp.ne.s32.totalorder %s50, %s64
    %p66 = scmp.eq.s32.totalorder %s19, 0
    %p67 = por %p65, %p66
    %s69 = sadd.s32 %s68, 1
    %p72 = scmp.eq.s32.totalorder %s13, 1
    %p73 = scmp.ne.s32.totalorder %s68, %s70
    %p74 = scmp.eq.s32.totalorder %s13, 0
    %p75 = por %p73, %p74
    %p76 = scmp.ne.s32.totalorder %s68, %s70
    %p77 = scmp.eq.s32.totalorder %s18, 1
    %p78 = por %p76, %p77
    %p79 = scmp.ne.s32.totalorder %s70, %s71
    %p80 = scmp.eq.s32.totalorder %s18, 0
    %p81 = por %p79, %p80
    %p82 = scmp.ne.s32.totalorder %s70, %s71
    %p83 = scmp.eq.s32.totalorder %s19, 1
    %p84 = por %p82, %p83
    %p86 = scmp.ne.s32.totalorder %s71, %s85
    %p87 = scmp.eq.s32.totalorder %s19, 0
    %p88 = por %p86, %p87
    %s90 = sadd.s32 %s89, 1
    %p93 = scmp.eq.s32.totalorder %s13, 1
    %p94 = scmp.ne.s32.totalorder %s89, %s91
    %p95 = scmp.eq.s32.totalorder %s13, 0
    %p96 = por %p94, %p95
    %p97 = scmp.ne.s32.totalorder %s89, %s91
    %p98 = scmp.eq.s32.totalorder %s18, 1
    %p99 = por %p97, %p98
    %p100 = scmp.ne.s32.totalorder %s91, %s92
    %p101 = scmp.eq.s32.totalorder %s18, 0
    %p102 = por %p100, %p101
    %p103 = scmp.ne.s32.totalorder %s91, %s92
    %p104 = scmp.eq.s32.totalorder %s19, 1
    %p105 = por %p103, %p104
    %p107 = scmp.ne.s32.totalorder %s92, %s106
    %p108 = scmp.eq.s32.totalorder %s19, 0
    %p109 = por %p107, %p108
    %s111 = sadd.s32 %s110, 1
    %p114 = scmp.eq.s32.totalorder %s13, 1
    %p115 = scmp.ne.s32.totalorder %s110, %s112
    %p116 = scmp.eq.s32.totalorder %s13, 0
    %p117 = por %p115, %p116
    %p118 = scmp.ne.s32.totalorder %s110, %s112
    %p119 = scmp.eq.s32.totalorder %s18, 1
    %p120 = por %p118, %p119
    %p121 = scmp.ne.s32.totalorder %s112, %s113
    %p122 = scmp.eq.s32.totalorder %s18, 0
    %p123 = por %p121, %p122
    %p124 = scmp.ne.s32.totalorder %s112, %s113
    %p125 = scmp.eq.s32.totalorder %s19, 1
    %p126 = por %p124, %p125
    %p128 = scmp.ne.s32.totalorder %s113, %s127
    %p129 = scmp.eq.s32.totalorder %s19, 0
    %p130 = por %p128, %p129
    %s131 = ssub.s32 %s13, %s20
    %p132 = scmp.eq.s32.totalorder %s131, 0
    %s134 = sadd.s32 %s133, 1
    %s135 = scalar_select %p132, %s133, %s134
    %p138 = pneg %p132
    %p139 = scmp.eq.s32.totalorder %s13, 1
    %p140 = por %p138, %p139
    %p141 = scmp.ne.s32.totalorder %s133, %s136
    %p142 = scmp.eq.s32.totalorder %s13, 0
    %p143 = por %p141, %p142
    %p144 = scmp.ne.s32.totalorder %s133, %s136
    %p145 = scmp.eq.s32.totalorder %s18, 1
    %p146 = por %p144, %p145
    %p147 = scmp.ne.s32.totalorder %s136, %s137
    %p148 = scmp.eq.s32.totalorder %s18, 0
    %p149 = por %p147, %p148
    %p150 = scmp.ne.s32.totalorder %s136, %s137
    %p151 = scmp.eq.s32.totalorder %s19, 1
    %p152 = por %p150, %p151
    %p154 = scmp.ne.s32.totalorder %s137, %s153
    %p155 = scmp.eq.s32.totalorder %s19, 0
    %p156 = por %p154, %p155
    %s157 = ssub.s32 %s13, %s20
    %p158 = scmp.eq.s32.totalorder %s157, 0
    %s160 = sadd.s32 %s159, 1
    %s161 = scalar_select %p158, %s159, %s160
    %p164 = pneg %p158
    %p165 = scmp.eq.s32.totalorder %s13, 1
    %p166 = por %p164, %p165
    %p167 = scmp.ne.s32.totalorder %s159, %s162
    %p168 = scmp.eq.s32.totalorder %s13, 0
    %p169 = por %p167, %p168
    %p170 = scmp.ne.s32.totalorder %s159, %s162
    %p171 = scmp.eq.s32.totalorder %s18, 1
    %p172 = por %p170, %p171
    %p173 = scmp.ne.s32.totalorder %s162, %s163
    %p174 = scmp.eq.s32.totalorder %s18, 0
    %p175 = por %p173, %p174
    %p176 = scmp.ne.s32.totalorder %s162, %s163
    %p177 = scmp.eq.s32.totalorder %s19, 1
    %p178 = por %p176, %p177
    %p180 = scmp.ne.s32.totalorder %s163, %s179
    %p181 = scmp.eq.s32.totalorder %s19, 0
    %p182 = por %p180, %p181
    %p183 = scmp.le.s32.totalorder 1, %s13
    %p184 = scmp.lt.s32.totalorder %s13, 3
    %p185 = pnand %p183, %p184
    %p186 = pneg %p185
    // Predicated region
    $region9: #{graph_conv_forward.4} parent=5 // pred_check
      _
    $region10: #{graph_conv_forward.4} parent=5 // pred_check_branch
      %188 = sbr.rel (%p185) target = $region12
    $region11: #{graph_conv_forward.4} parent=5 // pred_region
      %s189 = ssub.s32 %s13, 1
      // Predicated region
      $region13: #{graph_conv_forward.4} parent=11 // pred_check
        %p190 = pneg %p60
      $region14: #{graph_conv_forward.4} parent=11 // pred_check_branch
        %192 = sbr.rel (%p190) target = $region16
      $region15: #{graph_conv_forward.4} parent=11 // pred_region
        _
      $region16: #{graph_conv_forward.4} parent=11 // pred_fallthru
        _
      // Predicated region
      $region17: #{graph_conv_forward.4} parent=11 // pred_check
        %p193 = pneg %p81
      $region18: #{graph_conv_forward.4} parent=11 // pred_check_branch
        %195 = sbr.rel (%p193) target = $region20
      $region19: #{graph_conv_forward.4} parent=11 // pred_region
        _
      $region20: #{graph_conv_forward.4} parent=11 // pred_fallthru
        _
      // Predicated region
      $region21: #{graph_conv_forward.4} parent=11 // pred_check
        %p196 = pneg %p102
      $region22: #{graph_conv_forward.4} parent=11 // pred_check_branch
        %198 = sbr.rel (%p196) target = $region24
      $region23: #{graph_conv_forward.4} parent=11 // pred_region
        _
      $region24: #{graph_conv_forward.4} parent=11 // pred_fallthru
        _
      // Predicated region
      $region25: #{graph_conv_forward.4} parent=11 // pred_check
        %p199 = pneg %p123
      $region26: #{graph_conv_forward.4} parent=11 // pred_check_branch
        %201 = sbr.rel (%p199) target = $region28
      $region27: #{graph_conv_forward.4} parent=11 // pred_region
        _
      $region28: #{graph_conv_forward.4} parent=11 // pred_fallthru
        _
    $region12: #{graph_conv_forward.4} parent=5 // pred_fallthru
      _
    %p202 = scmp.lt.s32.totalorder %s13, 2
    // Predicated region
    $region29: #{graph_conv_forward.4} parent=5 // pred_check
      %p203 = pneg %p202
    $region30: #{graph_conv_forward.4} parent=5 // pred_check_branch
      %205 = sbr.rel (%p203) target = $region32
    $region31: #{graph_conv_forward.4} parent=5 // pred_region
      // Predicated region
      $region33: #{graph_conv_forward.4} parent=31 // pred_check
        %p206 = pneg %p33
      $region34: #{graph_conv_forward.4} parent=31 // pred_check_branch
        %208 = sbr.rel (%p206) target = $region36
      $region35: #{graph_conv_forward.4} parent=31 // pred_region
        %s209 = smul.u32 16, %s13
        %p210 = scmp.lt.s32.totalorder %s209, 31
        %s211 = scalar_select %p210, %s209, 31
        %s212 = smul.addr %s211, 4
        %s213 = scalar_lea.vmem %s0, %s212
        %s214 = smul.u32 16, %s13
      $region36: #{graph_conv_forward.4} parent=31 // pred_fallthru
        _
    $region32: #{graph_conv_forward.4} parent=5 // pred_fallthru
      _
    %p215 = scmp.le.s32.totalorder 1, %s13
    %p216 = scmp.lt.s32.totalorder %s13, 3
    %p217 = pnand %p215, %p216
    %p218 = pneg %p217
    // Predicated region
    $region37: #{graph_conv_forward.4} parent=5 // pred_check
      _
    $region38: #{graph_conv_forward.4} parent=5 // pred_check_branch
      %220 = sbr.rel (%p217) target = $region40
    $region39: #{graph_conv_forward.4} parent=5 // pred_region
      %s221 = ssub.s32 %s13, 1
      %s222 = smul.u32 16, %s18
      %p223 = scmp.lt.s32.totalorder %s222, 31
      %s224 = scalar_select %p223, %s222, 31
      %s225 = smul.addr %s224, 4
      %s226 = scalar_lea.vmem %s0, %s225
      %p227 = pneg %p39
      %p228 = pneg %p36
      %p229 = pneg %p60
      %p230 = pneg %p57
      %p231 = pneg %p81
      %p232 = pneg %p78
      %p233 = pneg %p102
      %p234 = pneg %p99
      %p235 = pneg %p123
      %p236 = pneg %p120
      %p237 = pneg %p149
      %p238 = pneg %p146
      %s239 = smul.u32 16, %s18
      %p240 = scmp.lt.s32.totalorder %s239, 31
      %s241 = scalar_select %p240, %s239, 31
      %s242 = smul.addr %s241, 8
      %s243 = scalar_lea.vmem %s5, %s242
      %p244 = pneg %p175
      %p245 = pneg %p172
      %p246 = scmp.lt.s32.totalorder %s18, 1
      %s247 = scalar_select %p246, %s18, 1
      %s248 = smul.addr %s247, 8
      %s249 = scalar_lea.vmem %s6, %s248
      %s250 = smul.u32 16, %s18
      %p251 = scmp.lt.s32.totalorder %s250, 31
      %s252 = scalar_select %p251, %s250, 31
      %s253 = smul.addr %s252, 4
      %s254 = scalar_lea.vmem %s0, %s253
      %s255 = smul.u32 16, %s18
      %s256 = smul.u32 16, %s18
      %p257 = scmp.lt.s32.totalorder %s256, 31
      %s258 = scalar_select %p257, %s256, 31
      %s259 = smul.addr %s258, 8
      %s260 = scalar_lea.vmem %s5, %s259
      %s261 = smul.u32 16, %s18
      %p262 = scmp.lt.s32.totalorder %s18, 1
      %s263 = scalar_select %p262, %s18, 1
      %s264 = smul.addr %s263, 8
      %s265 = scalar_lea.vmem %s6, %s264
      %v267 = vld [vmem:[%s254] sm:$0xf]
      %v268 = vld [vmem:[%s254 + $0x4] sm:$0xf]
      %v269 = vld [vmem:[%s254 + $0x8] sm:$0xf]
      %v270 = vld [vmem:[%s254 + $0xc] sm:$0xf]
      %v271 = vld [vmem:[%s254 + $0x10] sm:$0xf]
      %v272 = vld [vmem:[%s254 + $0x14] sm:$0xf]
      %v273 = vld [vmem:[%s254 + $0x18] sm:$0xf]
      %v274 = vld [vmem:[%s254 + $0x1c] sm:$0xf]
      %v275 = vld [vmem:[%s254 + $0x20] sm:$0xf]
      %v276 = vld [vmem:[%s254 + $0x24] sm:$0xf]
      %v277 = vld [vmem:[%s254 + $0x28] sm:$0xf]
      %v278 = vld [vmem:[%s254 + $0x2c] sm:$0xf]
      %v279 = vld [vmem:[%s254 + $0x30] sm:$0xf]
      %v280 = vld [vmem:[%s254 + $0x34] sm:$0xf]
      %v281 = vld [vmem:[%s254 + $0x38] sm:$0xf]
      %v282 = vld [vmem:[%s254 + $0x3c] sm:$0xf]
      %v283 = vunpack.c.l.bf16 %v267
      %v284 = vunpack.c.l.bf16 %v268
      %v285 = vunpack.c.l.bf16 %v269
      %v286 = vunpack.c.l.bf16 %v270
      %v287 = vunpack.c.l.bf16 %v271
      %v288 = vunpack.c.l.bf16 %v272
      %v289 = vunpack.c.l.bf16 %v273
      %v290 = vunpack.c.l.bf16 %v274
      %v291 = vunpack.c.l.bf16 %v275
      %v292 = vunpack.c.l.bf16 %v276
      %v293 = vunpack.c.l.bf16 %v277
      %v294 = vunpack.c.l.bf16 %v278
      %v295 = vunpack.c.l.bf16 %v279
      %v296 = vunpack.c.l.bf16 %v280
      %v297 = vunpack.c.l.bf16 %v281
      %v298 = vunpack.c.l.bf16 %v282
      %v299 = vld [vmem:[%s1] sm:$0x1]
      %v301 = vlaneseq
      %v302 = vshrl.u32 %v301, 7
      %v303 = vsub.s32 0, %v302
      %v304 = vrot.slane %v299, %v303
      %v306 = vmul.f32 %v283, %v304
      %v307 = vmul.f32 %v284, %v304
      %v308 = vmul.f32 %v285, %v304
      %v309 = vmul.f32 %v286, %v304
      %v310 = vmul.f32 %v287, %v304
      %v311 = vmul.f32 %v288, %v304
      %v312 = vmul.f32 %v289, %v304
      %v313 = vmul.f32 %v290, %v304
      %v314 = vmul.f32 %v291, %v304
      %v315 = vmul.f32 %v292, %v304
      %v316 = vmul.f32 %v293, %v304
      %v317 = vmul.f32 %v294, %v304
      %v318 = vmul.f32 %v295, %v304
      %v319 = vmul.f32 %v296, %v304
      %v320 = vmul.f32 %v297, %v304
      %v321 = vmul.f32 %v298, %v304
      %v322 = vld [vmem:[%s2] sm:$0x1]
      %v324 = vlaneseq
      %v325 = vshrl.u32 %v324, 7
      %v326 = vsub.s32 0, %v325
      %v327 = vrot.slane %v322, %v326
      %v329 = vadd.f32 %v306, %v327
      %v330 = vadd.f32 %v307, %v327
      %v331 = vadd.f32 %v308, %v327
      %v332 = vadd.f32 %v309, %v327
      %v333 = vadd.f32 %v310, %v327
      %v334 = vadd.f32 %v311, %v327
      %v335 = vadd.f32 %v312, %v327
      %v336 = vadd.f32 %v313, %v327
      %v337 = vadd.f32 %v314, %v327
      %v338 = vadd.f32 %v315, %v327
      %v339 = vadd.f32 %v316, %v327
      %v340 = vadd.f32 %v317, %v327
      %v341 = vadd.f32 %v318, %v327
      %v342 = vadd.f32 %v319, %v327
      %v343 = vadd.f32 %v320, %v327
      %v344 = vadd.f32 %v321, %v327
      %v345 = vpack.c.bf16 %v330, %v329
      %v346 = vpack.c.bf16 %v332, %v331
      %v347 = vpack.c.bf16 %v334, %v333
      %v348 = vpack.c.bf16 %v336, %v335
      %v349 = vpack.c.bf16 %v338, %v337
      %v350 = vpack.c.bf16 %v340, %v339
      %v351 = vpack.c.bf16 %v342, %v341
      %v352 = vpack.c.bf16 %v344, %v343
      %v353 = vld [vmem:[%s3] sm:$0xf]
      %v354 = vld [vmem:[%s3 + $0x4] sm:$0xf]
      %v355 = vld [vmem:[%s3 + $0x8] sm:$0xf]
      %v356 = vld [vmem:[%s3 + $0xc] sm:$0xf]
      %v357 = vld [vmem:[%s3 + $0x10] sm:$0xf]
      %v358 = vld [vmem:[%s3 + $0x14] sm:$0xf]
      %v359 = vld [vmem:[%s3 + $0x18] sm:$0xf]
      %v360 = vld [vmem:[%s3 + $0x1c] sm:$0xf]
      %v361 = vld [vmem:[%s3 + $0x20] sm:$0xf]
      %v362 = vld [vmem:[%s3 + $0x24] sm:$0xf]
      %v363 = vld [vmem:[%s3 + $0x28] sm:$0xf]
      %v364 = vld [vmem:[%s3 + $0x2c] sm:$0xf]
      %v365 = vld [vmem:[%s3 + $0x30] sm:$0xf]
      %v366 = vld [vmem:[%s3 + $0x34] sm:$0xf]
      %v367 = vld [vmem:[%s3 + $0x38] sm:$0xf]
      %v368 = vld [vmem:[%s3 + $0x3c] sm:$0xf]
      %v369 = vld [vmem:[%s4] sm:$0x1]
      %v371 = vlaneseq
      %v372 = vshrl.u32 %v371, 7
      %v373 = vsub.s32 0, %v372
      %v374 = vrot.slane %v369, %v373
      %v392 = vunpack.c.l.b16 %v353
      %v393 = vunpack.c.l.b16 %v354
      %v394 = vunpack.c.l.b16 %v355
      %v395 = vunpack.c.l.b16 %v356
      %v396 = vunpack.c.l.b16 %v357
      %v397 = vunpack.c.l.b16 %v358
      %v398 = vunpack.c.l.b16 %v359
      %v399 = vunpack.c.l.b16 %v360
      %v400 = vunpack.c.l.b16 %v361
      %v401 = vunpack.c.l.b16 %v362
      %v402 = vunpack.c.l.b16 %v363
      %v403 = vunpack.c.l.b16 %v364
      %v404 = vunpack.c.l.b16 %v365
      %v405 = vunpack.c.l.b16 %v366
      %v406 = vunpack.c.l.b16 %v367
      %v407 = vunpack.c.l.b16 %v368
      %v408 = vpack.c.b16 %v393, %v392
      %v409 = vpack.c.b16 %v395, %v394
      %v410 = vpack.c.b16 %v397, %v396
      %v411 = vpack.c.b16 %v399, %v398
      %v412 = vpack.c.b16 %v401, %v400
      %v413 = vpack.c.b16 %v403, %v402
      %v414 = vpack.c.b16 %v405, %v404
      %v415 = vpack.c.b16 %v407, %v406
      %424 = vmatprep.subr.bf16.mxu0 0
      %425 = vmatpush1.bf16.msra.mxu0 %v415
      %426 = vmatprep.subr.bf16.mxu0 0
      %427 = vmatpush1.bf16.msra.mxu0 %v414
      %428 = vmatprep.subr.bf16.mxu0 0
      %429 = vmatpush1.bf16.msra.mxu0 %v413
      %430 = vmatprep.subr.bf16.mxu0 0
      %431 = vmatpush1.bf16.msra.mxu0 %v412
      %432 = vmatprep.subr.bf16.mxu0 0
      %433 = vmatpush1.bf16.msra.mxu0 %v411
      %434 = vmatprep.subr.bf16.mxu0 0
      %435 = vmatpush1.bf16.msra.mxu0 %v410
      %436 = vmatprep.subr.bf16.mxu0 0
      %437 = vmatpush1.bf16.msra.mxu0 %v409
      %438 = vmatprep.subr.bf16.mxu0 0
      %439 = vmatpush1.bf16.msra.mxu0 %v408
      %440 = vmatprep.subr.bf16.mxu0 0
      %441 = vmatpush2.bf16.msra.mxu0 0
      %442 = vmatprep.subr.bf16.mxu0 0
      %443 = vmatpush2.bf16.msra.mxu0 0
      %444 = vmatprep.subr.bf16.mxu0 0
      %445 = vmatpush2.bf16.msra.mxu0 0
      %446 = vmatprep.subr.bf16.mxu0 0
      %447 = vmatpush2.bf16.msra.mxu0 0
      %448 = vmatprep.subr.bf16.mxu0 0
      %449 = vmatpush2.bf16.msra.mxu0 0
      %450 = vmatprep.subr.bf16.mxu0 0
      %451 = vmatpush2.bf16.msra.mxu0 0
      %452 = vmatprep.subr.bf16.mxu0 0
      %453 = vmatpush2.bf16.msra.mxu0 0
      %454 = vmatprep.subr.bf16.mxu0 0
      %455 = vmatpush2.bf16.msra.mxu0 0
      %456 = vmatprep.mubr.bf16.mxu0 0
      %457 = vmatmul.mubr.bf16.gmra.mxu0 %v345
      %v458 = vpop.f32.mrf.mxu0
      %v459 = vadd.f32 %v374, %v458
      %v460 = vpop.f32.mrf.mxu0
      %v461 = vpop.f32.mrf.mxu0
      %v462 = vadd.f32 %v374, %v461
      %v463 = vpop.f32.mrf.mxu0
      %464 = vmatprep.mubr.bf16.mxu0 0
      %465 = vmatmul.mubr.bf16.gmra.mxu0 %v346
      %v466 = vpop.f32.mrf.mxu0
      %v467 = vadd.f32 %v374, %v466
      %v468 = vpop.f32.mrf.mxu0
      %v469 = vpop.f32.mrf.mxu0
      %v470 = vadd.f32 %v374, %v469
      %v471 = vpop.f32.mrf.mxu0
      %472 = vmatprep.mubr.bf16.mxu0 0
      %473 = vmatmul.mubr.bf16.gmra.mxu0 %v347
      %v474 = vpop.f32.mrf.mxu0
      %v475 = vadd.f32 %v374, %v474
      %v476 = vpop.f32.mrf.mxu0
      %v477 = vpop.f32.mrf.mxu0
      %v478 = vadd.f32 %v374, %v477
      %v479 = vpop.f32.mrf.mxu0
      %480 = vmatprep.mubr.bf16.mxu0 0
      %481 = vmatmul.mubr.bf16.gmra.mxu0 %v348
      %v482 = vpop.f32.mrf.mxu0
      %v483 = vadd.f32 %v374, %v482
      %v484 = vpop.f32.mrf.mxu0
      %v485 = vpop.f32.mrf.mxu0
      %v486 = vadd.f32 %v374, %v485
      %v487 = vpop.f32.mrf.mxu0
      %488 = vmatprep.mubr.bf16.mxu0 0
      %489 = vmatmul.mubr.bf16.gmra.mxu0 %v349
      %v490 = vpop.f32.mrf.mxu0
      %v491 = vadd.f32 %v374, %v490
      %v492 = vpop.f32.mrf.mxu0
      %v493 = vpop.f32.mrf.mxu0
      %v494 = vadd.f32 %v374, %v493
      %v495 = vpop.f32.mrf.mxu0
      %496 = vmatprep.mubr.bf16.mxu0 0
      %497 = vmatmul.mubr.bf16.gmra.mxu0 %v350
      %v498 = vpop.f32.mrf.mxu0
      %v499 = vadd.f32 %v374, %v498
      %v500 = vpop.f32.mrf.mxu0
      %v501 = vpop.f32.mrf.mxu0
      %v502 = vadd.f32 %v374, %v501
      %v503 = vpop.f32.mrf.mxu0
      %504 = vmatprep.mubr.bf16.mxu0 0
      %505 = vmatmul.mubr.bf16.gmra.mxu0 %v351
      %v506 = vpop.f32.mrf.mxu0
      %v507 = vadd.f32 %v374, %v506
      %v508 = vpop.f32.mrf.mxu0
      %v509 = vpop.f32.mrf.mxu0
      %v510 = vadd.f32 %v374, %v509
      %v511 = vpop.f32.mrf.mxu0
      %512 = vmatprep.mubr.bf16.mxu0 0
      %513 = vmatmul.mubr.bf16.gmra.mxu0 %v352
      %v514 = vpop.f32.mrf.mxu0
      %v515 = vadd.f32 %v374, %v514
      %v516 = vpop.f32.mrf.mxu0
      %v517 = vpop.f32.mrf.mxu0
      %v518 = vadd.f32 %v374, %v517
      %v519 = vpop.f32.mrf.mxu0
      %520 = vdwg.mxu0
      %vm521 = vcmp.gt.f32.partialorder %v459, 0.0
      %vm522 = vcmp.gt.f32.partialorder %v462, 0.0
      %vm523 = vcmp.gt.f32.partialorder %v467, 0.0
      %vm524 = vcmp.gt.f32.partialorder %v470, 0.0
      %vm525 = vcmp.gt.f32.partialorder %v475, 0.0
      %vm526 = vcmp.gt.f32.partialorder %v478, 0.0
      %vm527 = vcmp.gt.f32.partialorder %v483, 0.0
      %vm528 = vcmp.gt.f32.partialorder %v486, 0.0
      %vm529 = vcmp.gt.f32.partialorder %v491, 0.0
      %vm530 = vcmp.gt.f32.partialorder %v494, 0.0
      %vm531 = vcmp.gt.f32.partialorder %v499, 0.0
      %vm532 = vcmp.gt.f32.partialorder %v502, 0.0
      %vm533 = vcmp.gt.f32.partialorder %v507, 0.0
      %vm534 = vcmp.gt.f32.partialorder %v510, 0.0
      %vm535 = vcmp.gt.f32.partialorder %v515, 0.0
      %vm536 = vcmp.gt.f32.partialorder %v518, 0.0
      %v537 = vmul.f32 %v459, 0.01
      %v538 = vmul.f32 %v462, 0.01
      %v539 = vmul.f32 %v467, 0.01
      %v540 = vmul.f32 %v470, 0.01
      %v541 = vmul.f32 %v475, 0.01
      %v542 = vmul.f32 %v478, 0.01
      %v543 = vmul.f32 %v483, 0.01
      %v544 = vmul.f32 %v486, 0.01
      %v545 = vmul.f32 %v491, 0.01
      %v546 = vmul.f32 %v494, 0.01
      %v547 = vmul.f32 %v499, 0.01
      %v548 = vmul.f32 %v502, 0.01
      %v549 = vmul.f32 %v507, 0.01
      %v550 = vmul.f32 %v510, 0.01
      %v551 = vmul.f32 %v515, 0.01
      %v552 = vmul.f32 %v518, 0.01
      %v553 = vsel %vm521, %v459, %v537
      %v554 = vsel %vm522, %v462, %v538
      %v555 = vsel %vm523, %v467, %v539
      %v556 = vsel %vm524, %v470, %v540
      %v557 = vsel %vm525, %v475, %v541
      %v558 = vsel %vm526, %v478, %v542
      %v559 = vsel %vm527, %v483, %v543
      %v560 = vsel %vm528, %v486, %v544
      %v561 = vsel %vm529, %v491, %v545
      %v562 = vsel %vm530, %v494, %v546
      %v563 = vsel %vm531, %v499, %v547
      %v564 = vsel %vm532, %v502, %v548
      %v565 = vsel %vm533, %v507, %v549
      %v566 = vsel %vm534, %v510, %v550
      %v567 = vsel %vm535, %v515, %v551
      %v568 = vsel %vm536, %v518, %v552
      %s569 = smul.u32 %s18, 128
      %v570 = vlaneseq
      %v571 = vshrl.u32 %v570, 7
      %v572 = vadd.s32 %v571, 8
      %v573 = vadd.s32 %v571, 16
      %v574 = vadd.s32 %v571, 24
      %v575 = vadd.s32 %v571, 32
      %v576 = vadd.s32 %v571, 40
      %v577 = vadd.s32 %v571, 48
      %v578 = vadd.s32 %v571, 56
      %v579 = vadd.s32 %v571, 64
      %v580 = vadd.s32 %v571, 72
      %v581 = vadd.s32 %v571, 80
      %v582 = vadd.s32 %v571, 88
      %v583 = vadd.s32 %v571, 96
      %v584 = vadd.s32 %v571, 104
      %v585 = vadd.s32 %v571, 112
      %v586 = vadd.s32 %v571, 120
      %v587 = vstv %s569
      %v588 = vadd.s32 %v587, %v571
      %v589 = vadd.s32 %v587, %v572
      %v590 = vadd.s32 %v587, %v573
      %v591 = vadd.s32 %v587, %v574
      %v592 = vadd.s32 %v587, %v575
      %v593 = vadd.s32 %v587, %v576
      %v594 = vadd.s32 %v587, %v577
      %v595 = vadd.s32 %v587, %v578
      %v596 = vadd.s32 %v587, %v579
      %v597 = vadd.s32 %v587, %v580
      %v598 = vadd.s32 %v587, %v581
      %v599 = vadd.s32 %v587, %v582
      %v600 = vadd.s32 %v587, %v583
      %v601 = vadd.s32 %v587, %v584
      %v602 = vadd.s32 %v587, %v585
      %v603 = vadd.s32 %v587, %v586
      %vm604 = vcmp.lt.s32.totalorder %v588, 200
      %vm605 = vcmp.lt.s32.totalorder %v589, 200
      %vm606 = vcmp.lt.s32.totalorder %v590, 200
      %vm607 = vcmp.lt.s32.totalorder %v591, 200
      %vm608 = vcmp.lt.s32.totalorder %v592, 200
      %vm609 = vcmp.lt.s32.totalorder %v593, 200
      %vm610 = vcmp.lt.s32.totalorder %v594, 200
      %vm611 = vcmp.lt.s32.totalorder %v595, 200
      %vm612 = vcmp.lt.s32.totalorder %v596, 200
      %vm613 = vcmp.lt.s32.totalorder %v597, 200
      %vm614 = vcmp.lt.s32.totalorder %v598, 200
      %vm615 = vcmp.lt.s32.totalorder %v599, 200
      %vm616 = vcmp.lt.s32.totalorder %v600, 200
      %vm617 = vcmp.lt.s32.totalorder %v601, 200
      %vm618 = vcmp.lt.s32.totalorder %v602, 200
      %vm619 = vcmp.lt.s32.totalorder %v603, 200
      %v620 = vsel %vm604, 1, 0
      %v621 = vsel %vm605, 1, 0
      %v622 = vsel %vm606, 1, 0
      %v623 = vsel %vm607, 1, 0
      %v624 = vsel %vm608, 1, 0
      %v625 = vsel %vm609, 1, 0
      %v626 = vsel %vm610, 1, 0
      %v627 = vsel %vm611, 1, 0
      %v628 = vsel %vm612, 1, 0
      %v629 = vsel %vm613, 1, 0
      %v630 = vsel %vm614, 1, 0
      %v631 = vsel %vm615, 1, 0
      %v632 = vsel %vm616, 1, 0
      %v633 = vsel %vm617, 1, 0
      %v634 = vsel %vm618, 1, 0
      %v635 = vsel %vm619, 1, 0
      %vm636 = vcmp.eq.s32.totalorder %v620, 1
      %vm637 = vcmp.eq.s32.totalorder %v621, 1
      %vm638 = vcmp.eq.s32.totalorder %v622, 1
      %vm639 = vcmp.eq.s32.totalorder %v623, 1
      %vm640 = vcmp.eq.s32.totalorder %v624, 1
      %vm641 = vcmp.eq.s32.totalorder %v625, 1
      %vm642 = vcmp.eq.s32.totalorder %v626, 1
      %vm643 = vcmp.eq.s32.totalorder %v627, 1
      %vm644 = vcmp.eq.s32.totalorder %v628, 1
      %vm645 = vcmp.eq.s32.totalorder %v629, 1
      %vm646 = vcmp.eq.s32.totalorder %v630, 1
      %vm647 = vcmp.eq.s32.totalorder %v631, 1
      %vm648 = vcmp.eq.s32.totalorder %v632, 1
      %vm649 = vcmp.eq.s32.totalorder %v633, 1
      %vm650 = vcmp.eq.s32.totalorder %v634, 1
      %vm651 = vcmp.eq.s32.totalorder %v635, 1
      %v652 = vsel %vm636, %v553, 0.0
      %v653 = vsel %vm637, %v554, 0.0
      %v654 = vsel %vm638, %v555, 0.0
      %v655 = vsel %vm639, %v556, 0.0
      %v656 = vsel %vm640, %v557, 0.0
      %v657 = vsel %vm641, %v558, 0.0
      %v658 = vsel %vm642, %v559, 0.0
      %v659 = vsel %vm643, %v560, 0.0
      %v660 = vsel %vm644, %v561, 0.0
      %v661 = vsel %vm645, %v562, 0.0
      %v662 = vsel %vm646, %v563, 0.0
      %v663 = vsel %vm647, %v564, 0.0
      %v664 = vsel %vm648, %v565, 0.0
      %v665 = vsel %vm649, %v566, 0.0
      %v666 = vsel %vm650, %v567, 0.0
      %v667 = vsel %vm651, %v568, 0.0
      %668 = vst [vmem:[%s260] sm:$0xff] %v652
      %669 = vst [vmem:[%s260 + $0x8] sm:$0xff] %v653
      %670 = vst [vmem:[%s260 + $0x10] sm:$0xff] %v654
      %671 = vst [vmem:[%s260 + $0x18] sm:$0xff] %v655
      %672 = vst [vmem:[%s260 + $0x20] sm:$0xff] %v656
      %673 = vst [vmem:[%s260 + $0x28] sm:$0xff] %v657
      %674 = vst [vmem:[%s260 + $0x30] sm:$0xff] %v658
      %675 = vst [vmem:[%s260 + $0x38] sm:$0xff] %v659
      %676 = vst [vmem:[%s260 + $0x40] sm:$0xff] %v660
      %677 = vst [vmem:[%s260 + $0x48] sm:$0xff] %v661
      %678 = vst [vmem:[%s260 + $0x50] sm:$0xff] %v662
      %679 = vst [vmem:[%s260 + $0x58] sm:$0xff] %v663
      %680 = vst [vmem:[%s260 + $0x60] sm:$0xff] %v664
      %681 = vst [vmem:[%s260 + $0x68] sm:$0xff] %v665
      %682 = vst [vmem:[%s260 + $0x70] sm:$0xff] %v666
      %683 = vst [vmem:[%s260 + $0x78] sm:$0xff] %v667
      %v684 = vadd.f32 %v652, %v653
      %v685 = vadd.f32 %v684, %v654
      %v686 = vadd.f32 %v685, %v655
      %v687 = vadd.f32 %v686, %v656
      %v688 = vadd.f32 %v687, %v657
      %v689 = vadd.f32 %v688, %v658
      %v690 = vadd.f32 %v689, %v659
      %v691 = vadd.f32 %v690, %v660
      %v692 = vadd.f32 %v691, %v661
      %v693 = vadd.f32 %v692, %v662
      %v694 = vadd.f32 %v693, %v663
      %v695 = vadd.f32 %v694, %v664
      %v696 = vadd.f32 %v695, %v665
      %v697 = vadd.f32 %v696, %v666
      %v698 = vadd.f32 %v697, %v667
      %v699 = vrot.slane %v698, 4
      %v700 = vadd.f32 %v698, %v699
      %v701 = vrot.slane %v700, 2
      %v702 = vadd.f32 %v700, %v701
      %v703 = vrot.slane %v702, 1
      %v704 = vadd.f32 %v702, %v703
      %v705 = vmul.f32 %v652, %v652
      %v706 = vmul.f32 %v653, %v653
      %v707 = vmul.f32 %v654, %v654
      %v708 = vmul.f32 %v655, %v655
      %v709 = vmul.f32 %v656, %v656
      %v710 = vmul.f32 %v657, %v657
      %v711 = vmul.f32 %v658, %v658
      %v712 = vmul.f32 %v659, %v659
      %v713 = vmul.f32 %v660, %v660
      %v714 = vmul.f32 %v661, %v661
      %v715 = vmul.f32 %v662, %v662
      %v716 = vmul.f32 %v663, %v663
      %v717 = vmul.f32 %v664, %v664
      %v718 = vmul.f32 %v665, %v665
      %v719 = vmul.f32 %v666, %v666
      %v720 = vmul.f32 %v667, %v667
      %v721 = vadd.f32 %v705, %v706
      %v722 = vadd.f32 %v721, %v707
      %v723 = vadd.f32 %v722, %v708
      %v724 = vadd.f32 %v723, %v709
      %v725 = vadd.f32 %v724, %v710
      %v726 = vadd.f32 %v725, %v711
      %v727 = vadd.f32 %v726, %v712
      %v728 = vadd.f32 %v727, %v713
      %v729 = vadd.f32 %v728, %v714
      %v730 = vadd.f32 %v729, %v715
      %v731 = vadd.f32 %v730, %v716
      %v732 = vadd.f32 %v731, %v717
      %v733 = vadd.f32 %v732, %v718
      %v734 = vadd.f32 %v733, %v719
      %v735 = vadd.f32 %v734, %v720
      %v736 = vrot.slane %v735, 4
      %v737 = vadd.f32 %v735, %v736
      %v738 = vrot.slane %v737, 2
      %v739 = vadd.f32 %v737, %v738
      %v740 = vrot.slane %v739, 1
      %v741 = vadd.f32 %v739, %v740
      %vm742 = vcmask 1040384
      %v743 = vsel %vm742, %v704, %v741
      %vm744 = vcmask 1041408
      %v745 = vsel %vm744, %v743, 0.0
      %746 = vst [vmem:[%s265] sm:$0xff] %v745
      %s747 = smul.u32 16, %s18
      %p748 = scmp.lt.s32.totalorder %s747, 31
      %s749 = scalar_select %p748, %s747, 31
      %s750 = smul.addr %s749, 8
      %s751 = scalar_lea.vmem %s5, %s750
      %p752 = scmp.lt.s32.totalorder %s18, 1
      %s753 = scalar_select %p752, %s18, 1
      %s754 = smul.addr %s753, 8
      %s755 = scalar_lea.vmem %s6, %s754
      // Predicated region
      $region41: #{graph_conv_forward.4} parent=39 // pred_check
        %p756 = pneg %p146
      $region42: #{graph_conv_forward.4} parent=39 // pred_check_branch
        %758 = sbr.rel (%p756) target = $region44
      $region43: #{graph_conv_forward.4} parent=39 // pred_region
        %s759 = smul.u32 16, %s18
      $region44: #{graph_conv_forward.4} parent=39 // pred_fallthru
        _
      // Predicated region
      $region45: #{graph_conv_forward.4} parent=39 // pred_check
        %p760 = pneg %p172
      $region46: #{graph_conv_forward.4} parent=39 // pred_check_branch
        %762 = sbr.rel (%p760) target = $region48
      $region47: #{graph_conv_forward.4} parent=39 // pred_region
        _
      $region48: #{graph_conv_forward.4} parent=39 // pred_fallthru
        _
    $region40: #{graph_conv_forward.4} parent=5 // pred_fallthru
      _
    %p763 = scmp.le.s32.totalorder 2, %s13
    // Predicated region
    $region49: #{graph_conv_forward.4} parent=5 // pred_check
      %p764 = pneg %p763
    $region50: #{graph_conv_forward.4} parent=5 // pred_check_branch
      %766 = sbr.rel (%p764) target = $region52
    $region51: #{graph_conv_forward.4} parent=5 // pred_region
      %s767 = ssub.s32 %s13, 2
      // Predicated region
      $region53: #{graph_conv_forward.4} parent=51 // pred_check
        %p768 = pneg %p152
      $region54: #{graph_conv_forward.4} parent=51 // pred_check_branch
        %770 = sbr.rel (%p768) target = $region56
      $region55: #{graph_conv_forward.4} parent=51 // pred_region
        %s771 = smul.u32 16, %s19
        %p772 = scmp.lt.s32.totalorder %s771, 31
        %s773 = scalar_select %p772, %s771, 31
        %s774 = smul.addr %s773, 8
        %s775 = scalar_lea.vmem %s5, %s774
      $region56: #{graph_conv_forward.4} parent=51 // pred_fallthru
        _
      // Predicated region
      $region57: #{graph_conv_forward.4} parent=51 // pred_check
        %p776 = pneg %p178
      $region58: #{graph_conv_forward.4} parent=51 // pred_check_branch
        %778 = sbr.rel (%p776) target = $region60
      $region59: #{graph_conv_forward.4} parent=51 // pred_region
        %p779 = scmp.lt.s32.totalorder %s19, 1
        %s780 = scalar_select %p779, %s19, 1
        %s781 = smul.addr %s780, 8
        %s782 = scalar_lea.vmem %s6, %s781
      $region60: #{graph_conv_forward.4} parent=51 // pred_fallthru
        _
    $region52: #{graph_conv_forward.4} parent=5 // pred_fallthru
      _
  $region6: #{graph_conv_forward.4} parent=0 // loop_footer
    %s17 = sadd.s32 1, %s13
  $region7: #{graph_conv_forward.4} parent=0 // loop_footer_branch
    %12 = sbr.rel target = $region3
  $region8: #{graph_conv_forward.4} parent=0 // loop_exit
    _

// kernel: graph_conv_forward.3
$region0: #{graph_conv_forward.3}
  #allocation0 [shape = 'u32[]', space=smem, size = 0x4, offset = 0x4, fixed_abs, tag = 'smem constant byte address 0x4 - core index']
  #allocation1 [shape = 'u32[144,128]{1,0:T(1,128)}', space=vmem, size = 0x12000, scoped, tag = 'internal scratch']
  %s0 = inlined_call_operand.vmem [shape: bf16[256,128], index: 0, kind: input, shape index: {}]
  %s1 = inlined_call_operand.vmem [shape: s32[256,3], index: 1, kind: input, shape index: {}]
  %s2 = inlined_call_operand.vmem [shape: f32[256,3], index: 2, kind: input, shape index: {}]
  %s3 = inlined_call_operand.vmem [shape: s32[256,1], index: 3, kind: input, shape index: {}]
  %s4 = inlined_call_operand.vmem [shape: bf16[256,128], index: 4, kind: input, shape index: {}]
  %s5 = inlined_call_operand.vmem [shape: f32[1,128], index: 5, kind: input, shape index: {}]
  %s6 = inlined_call_operand.vmem [shape: bf16[256,128], index: 6, kind: input, shape index: {}]
  %s7 = inlined_call_operand.vmem [shape: f32[1,128], index: 7, kind: input, shape index: {}]
  %s8 = inlined_call_operand.vmem [shape: bf16[256,128], index: 8, kind: output, shape index: {0}]
  %s9 = inlined_call_operand.vmem [shape: f32[16,128], index: 9, kind: output, shape index: {1}]
  %10 = xla_tuple %s8, %s9
  %s11 = sld [smem:[#allocation0]]
  $region73: #{graph_conv_forward.3} parent=0
    _
  %s13 = ssub.s32 1, %s11
  %s14 = scalar_select 0, %s13, %s11
  loop: start=0, step=1, limit=4
  $region2: #{graph_conv_forward.3} parent=0 // loop_pre_header
    _
  $region3: #{graph_conv_forward.3} parent=0 // loop_header
    %s16 = sphi 0, %s20
    %p17 = scmp.ge.s32.totalorder %s16, 4
    %s24 = sphi 0, %s24
    %s26 = sphi 0, %s24
    %s27 = sphi 0, %s26
    %s41 = sphi 0, %s27
    %s47 = sphi 0, %s49
    %s50 = sphi 0, %s47
    %s51 = sphi 0, %s50
    %s67 = sphi 0, %s51
    %s73 = sphi 0, %s75
    %s76 = sphi 0, %s73
    %s77 = sphi 0, %s76
    %s93 = sphi 0, %s77
    %s99 = sphi 0, %s101
    %s102 = sphi 0, %s99
    %s103 = sphi 0, %s102
    %s119 = sphi 0, %s103
    %s123 = sphi 0, %s123
    %s125 = sphi 0, %s123
    %s126 = sphi 0, %s125
    %s140 = sphi 0, %s126
    %s144 = sphi 0, %s144
    %s146 = sphi 0, %s144
    %s147 = sphi 0, %s146
    %s161 = sphi 0, %s147
    %s165 = sphi 0, %s165
    %s167 = sphi 0, %s165
    %s168 = sphi 0, %s167
    %s182 = sphi 0, %s168
    %s186 = sphi 0, %s186
    %s188 = sphi 0, %s186
    %s189 = sphi 0, %s188
    %s203 = sphi 0, %s189
    %s209 = sphi 0, %s211
    %s212 = sphi 0, %s209
    %s213 = sphi 0, %s212
    %s229 = sphi 0, %s213
    %s235 = sphi 0, %s237
    %s238 = sphi 0, %s235
    %s239 = sphi 0, %s238
    %s255 = sphi 0, %s239
  $region4: #{graph_conv_forward.3} parent=0 // loop_header_branch
    %19 = sbr.rel (%p17) target = $region8
  $region5: #{graph_conv_forward.3} parent=0 // loop_body
    %s21 = ssub.s32 %s16, 1
    %s22 = ssub.s32 %s16, 2
    %s23 = sadd.s32 %s16, 1
    %s25 = sadd.s32 %s24, 1
    %p28 = scmp.eq.s32.totalorder %s16, 1
    %p29 = scmp.ne.s32.totalorder %s24, %s26
    %p30 = scmp.eq.s32.totalorder %s16, 0
    %p31 = por %p29, %p30
    %p32 = scmp.ne.s32.totalorder %s24, %s26
    %p33 = scmp.eq.s32.totalorder %s21, 1
    %p34 = por %p32, %p33
    %p35 = scmp.ne.s32.totalorder %s26, %s27
    %p36 = scmp.eq.s32.totalorder %s21, 0
    %p37 = por %p35, %p36
    %p38 = scmp.ne.s32.totalorder %s26, %s27
    %p39 = scmp.eq.s32.totalorder %s22, 1
    %p40 = por %p38, %p39
    %p42 = scmp.ne.s32.totalorder %s27, %s41
    %p43 = scmp.eq.s32.totalorder %s22, 0
    %p44 = por %p42, %p43
    %s45 = ssub.s32 %s16, %s23
    %p46 = scmp.eq.s32.totalorder %s45, 0
    %s48 = sadd.s32 %s47, 1
    %s49 = scalar_select %p46, %s47, %s48
    %p52 = pneg %p46
    %p53 = scmp.eq.s32.totalorder %s16, 1
    %p54 = por %p52, %p53
    %p55 = scmp.ne.s32.totalorder %s47, %s50
    %p56 = scmp.eq.s32.totalorder %s16, 0
    %p57 = por %p55, %p56
    %p58 = scmp.ne.s32.totalorder %s47, %s50
    %p59 = scmp.eq.s32.totalorder %s21, 1
    %p60 = por %p58, %p59
    %p61 = scmp.ne.s32.totalorder %s50, %s51
    %p62 = scmp.eq.s32.totalorder %s21, 0
    %p63 = por %p61, %p62
    %p64 = scmp.ne.s32.totalorder %s50, %s51
    %p65 = scmp.eq.s32.totalorder %s22, 1
    %p66 = por %p64, %p65
    %p68 = scmp.ne.s32.totalorder %s51, %s67
    %p69 = scmp.eq.s32.totalorder %s22, 0
    %p70 = por %p68, %p69
    %s71 = ssub.s32 %s16, %s23
    %p72 = scmp.eq.s32.totalorder %s71, 0
    %s74 = sadd.s32 %s73, 1
    %s75 = scalar_select %p72, %s73, %s74
    %p78 = pneg %p72
    %p79 = scmp.eq.s32.totalorder %s16, 1
    %p80 = por %p78, %p79
    %p81 = scmp.ne.s32.totalorder %s73, %s76
    %p82 = scmp.eq.s32.totalorder %s16, 0
    %p83 = por %p81, %p82
    %p84 = scmp.ne.s32.totalorder %s73, %s76
    %p85 = scmp.eq.s32.totalorder %s21, 1
    %p86 = por %p84, %p85
    %p87 = scmp.ne.s32.totalorder %s76, %s77
    %p88 = scmp.eq.s32.totalorder %s21, 0
    %p89 = por %p87, %p88
    %p90 = scmp.ne.s32.totalorder %s76, %s77
    %p91 = scmp.eq.s32.totalorder %s22, 1
    %p92 = por %p90, %p91
    %p94 = scmp.ne.s32.totalorder %s77, %s93
    %p95 = scmp.eq.s32.totalorder %s22, 0
    %p96 = por %p94, %p95
    %s97 = ssub.s32 %s16, %s23
    %p98 = scmp.eq.s32.totalorder %s97, 0
    %s100 = sadd.s32 %s99, 1
    %s101 = scalar_select %p98, %s99, %s100
    %p104 = pneg %p98
    %p105 = scmp.eq.s32.totalorder %s16, 1
    %p106 = por %p104, %p105
    %p107 = scmp.ne.s32.totalorder %s99, %s102
    %p108 = scmp.eq.s32.totalorder %s16, 0
    %p109 = por %p107, %p108
    %p110 = scmp.ne.s32.totalorder %s99, %s102
    %p111 = scmp.eq.s32.totalorder %s21, 1
    %p112 = por %p110, %p111
    %p113 = scmp.ne.s32.totalorder %s102, %s103
    %p114 = scmp.eq.s32.totalorder %s21, 0
    %p115 = por %p113, %p114
    %p116 = scmp.ne.s32.totalorder %s102, %s103
    %p117 = scmp.eq.s32.totalorder %s22, 1
    %p118 = por %p116, %p117
    %p120 = scmp.ne.s32.totalorder %s103, %s119
    %p121 = scmp.eq.s32.totalorder %s22, 0
    %p122 = por %p120, %p121
    %s124 = sadd.s32 %s123, 1
    %p127 = scmp.eq.s32.totalorder %s16, 1
    %p128 = scmp.ne.s32.totalorder %s123, %s125
    %p129 = scmp.eq.s32.totalorder %s16, 0
    %p130 = por %p128, %p129
    %p131 = scmp.ne.s32.totalorder %s123, %s125
    %p132 = scmp.eq.s32.totalorder %s21, 1
    %p133 = por %p131, %p132
    %p134 = scmp.ne.s32.totalorder %s125, %s126
    %p135 = scmp.eq.s32.totalorder %s21, 0
    %p136 = por %p134, %p135
    %p137 = scmp.ne.s32.totalorder %s125, %s126
    %p138 = scmp.eq.s32.totalorder %s22, 1
    %p139 = por %p137, %p138
    %p141 = scmp.ne.s32.totalorder %s126, %s140
    %p142 = scmp.eq.s32.totalorder %s22, 0
    %p143 = por %p141, %p142
    %s145 = sadd.s32 %s144, 1
    %p148 = scmp.eq.s32.totalorder %s16, 1
    %p149 = scmp.ne.s32.totalorder %s144, %s146
    %p150 = scmp.eq.s32.totalorder %s16, 0
    %p151 = por %p149, %p150
    %p152 = scmp.ne.s32.totalorder %s144, %s146
    %p153 = scmp.eq.s32.totalorder %s21, 1
    %p154 = por %p152, %p153
    %p155 = scmp.ne.s32.totalorder %s146, %s147
    %p156 = scmp.eq.s32.totalorder %s21, 0
    %p157 = por %p155, %p156
    %p158 = scmp.ne.s32.totalorder %s146, %s147
    %p159 = scmp.eq.s32.totalorder %s22, 1
    %p160 = por %p158, %p159
    %p162 = scmp.ne.s32.totalorder %s147, %s161
    %p163 = scmp.eq.s32.totalorder %s22, 0
    %p164 = por %p162, %p163
    %s166 = sadd.s32 %s165, 1
    %p169 = scmp.eq.s32.totalorder %s16, 1
    %p170 = scmp.ne.s32.totalorder %s165, %s167
    %p171 = scmp.eq.s32.totalorder %s16, 0
    %p172 = por %p170, %p171
    %p173 = scmp.ne.s32.totalorder %s165, %s167
    %p174 = scmp.eq.s32.totalorder %s21, 1
    %p175 = por %p173, %p174
    %p176 = scmp.ne.s32.totalorder %s167, %s168
    %p177 = scmp.eq.s32.totalorder %s21, 0
    %p178 = por %p176, %p177
    %p179 = scmp.ne.s32.totalorder %s167, %s168
    %p180 = scmp.eq.s32.totalorder %s22, 1
    %p181 = por %p179, %p180
    %p183 = scmp.ne.s32.totalorder %s168, %s182
    %p184 = scmp.eq.s32.totalorder %s22, 0
    %p185 = por %p183, %p184
    %s187 = sadd.s32 %s186, 1
    %p190 = scmp.eq.s32.totalorder %s16, 1
    %p191 = scmp.ne.s32.totalorder %s186, %s188
    %p192 = scmp.eq.s32.totalorder %s16, 0
    %p193 = por %p191, %p192
    %p194 = scmp.ne.s32.totalorder %s186, %s188
    %p195 = scmp.eq.s32.totalorder %s21, 1
    %p196 = por %p194, %p195
    %p197 = scmp.ne.s32.totalorder %s188, %s189
    %p198 = scmp.eq.s32.totalorder %s21, 0
    %p199 = por %p197, %p198
    %p200 = scmp.ne.s32.totalorder %s188, %s189
    %p201 = scmp.eq.s32.totalorder %s22, 1
    %p202 = por %p200, %p201
    %p204 = scmp.ne.s32.totalorder %s189, %s203
    %p205 = scmp.eq.s32.totalorder %s22, 0
    %p206 = por %p204, %p205
    %s207 = ssub.s32 %s16, %s23
    %p208 = scmp.eq.s32.totalorder %s207, 0
    %s210 = sadd.s32 %s209, 1
    %s211 = scalar_select %p208, %s209, %s210
    %p214 = pneg %p208
    %p215 = scmp.eq.s32.totalorder %s16, 1
    %p216 = por %p214, %p215
    %p217 = scmp.ne.s32.totalorder %s209, %s212
    %p218 = scmp.eq.s32.totalorder %s16, 0
    %p219 = por %p217, %p218
    %p220 = scmp.ne.s32.totalorder %s209, %s212
    %p221 = scmp.eq.s32.totalorder %s21, 1
    %p222 = por %p220, %p221
    %p223 = scmp.ne.s32.totalorder %s212, %s213
    %p224 = scmp.eq.s32.totalorder %s21, 0
    %p225 = por %p223, %p224
    %p226 = scmp.ne.s32.totalorder %s212, %s213
    %p227 = scmp.eq.s32.totalorder %s22, 1
    %p228 = por %p226, %p227
    %p230 = scmp.ne.s32.totalorder %s213, %s229
    %p231 = scmp.eq.s32.totalorder %s22, 0
    %p232 = por %p230, %p231
    %s233 = ssub.s32 %s16, %s23
    %p234 = scmp.eq.s32.totalorder %s233, 0
    %s236 = sadd.s32 %s235, 1
    %s237 = scalar_select %p234, %s235, %s236
    %p240 = pneg %p234
    %p241 = scmp.eq.s32.totalorder %s16, 1
    %p242 = por %p240, %p241
    %p243 = scmp.ne.s32.totalorder %s235, %s238
    %p244 = scmp.eq.s32.totalorder %s16, 0
    %p245 = por %p243, %p244
    %p246 = scmp.ne.s32.totalorder %s235, %s238
    %p247 = scmp.eq.s32.totalorder %s21, 1
    %p248 = por %p246, %p247
    %p249 = scmp.ne.s32.totalorder %s238, %s239
    %p250 = scmp.eq.s32.totalorder %s21, 0
    %p251 = por %p249, %p250
    %p252 = scmp.ne.s32.totalorder %s238, %s239
    %p253 = scmp.eq.s32.totalorder %s22, 1
    %p254 = por %p252, %p253
    %p256 = scmp.ne.s32.totalorder %s239, %s255
    %p257 = scmp.eq.s32.totalorder %s22, 0
    %p258 = por %p256, %p257
    %p259 = scmp.le.s32.totalorder 1, %s16
    %p260 = scmp.lt.s32.totalorder %s16, 3
    %p261 = pnand %p259, %p260
    %p262 = pneg %p261
    // Predicated region
    $region9: #{graph_conv_forward.3} parent=5 // pred_check
      _
    $region10: #{graph_conv_forward.3} parent=5 // pred_check_branch
      %264 = sbr.rel (%p261) target = $region12
    $region11: #{graph_conv_forward.3} parent=5 // pred_region
      %s265 = ssub.s32 %s16, 1
      // Predicated region
      $region13: #{graph_conv_forward.3} parent=11 // pred_check
        %p266 = pneg %p37
      $region14: #{graph_conv_forward.3} parent=11 // pred_check_branch
        %268 = sbr.rel (%p266) target = $region16
      $region15: #{graph_conv_forward.3} parent=11 // pred_region
        _
      $region16: #{graph_conv_forward.3} parent=11 // pred_fallthru
        _
      // Predicated region
      $region17: #{graph_conv_forward.3} parent=11 // pred_check
        %p269 = pneg %p136
      $region18: #{graph_conv_forward.3} parent=11 // pred_check_branch
        %271 = sbr.rel (%p269) target = $region20
      $region19: #{graph_conv_forward.3} parent=11 // pred_region
        _
      $region20: #{graph_conv_forward.3} parent=11 // pred_fallthru
        _
      // Predicated region
      $region21: #{graph_conv_forward.3} parent=11 // pred_check
        %p272 = pneg %p157
      $region22: #{graph_conv_forward.3} parent=11 // pred_check_branch
        %274 = sbr.rel (%p272) target = $region24
      $region23: #{graph_conv_forward.3} parent=11 // pred_region
        _
      $region24: #{graph_conv_forward.3} parent=11 // pred_fallthru
        _
      // Predicated region
      $region25: #{graph_conv_forward.3} parent=11 // pred_check
        %p275 = pneg %p178
      $region26: #{graph_conv_forward.3} parent=11 // pred_check_branch
        %277 = sbr.rel (%p275) target = $region28
      $region27: #{graph_conv_forward.3} parent=11 // pred_region
        _
      $region28: #{graph_conv_forward.3} parent=11 // pred_fallthru
        _
      // Predicated region
      $region29: #{graph_conv_forward.3} parent=11 // pred_check
        %p278 = pneg %p199
      $region30: #{graph_conv_forward.3} parent=11 // pred_check_branch
        %280 = sbr.rel (%p278) target = $region32
      $region31: #{graph_conv_forward.3} parent=11 // pred_region
        _
      $region32: #{graph_conv_forward.3} parent=11 // pred_fallthru
        _
    $region12: #{graph_conv_forward.3} parent=5 // pred_fallthru
      _
    %p281 = scmp.lt.s32.totalorder %s16, 2
    // Predicated region
    $region33: #{graph_conv_forward.3} parent=5 // pred_check
      %p282 = pneg %p281
    $region34: #{graph_conv_forward.3} parent=5 // pred_check_branch
      %284 = sbr.rel (%p282) target = $region36
    $region35: #{graph_conv_forward.3} parent=5 // pred_region
      // Predicated region
      $region37: #{graph_conv_forward.3} parent=35 // pred_check
        %p285 = pneg %p57
      $region38: #{graph_conv_forward.3} parent=35 // pred_check_branch
        %287 = sbr.rel (%p285) target = $region40
      $region39: #{graph_conv_forward.3} parent=35 // pred_region
        %s288 = smul.u32 16, %s16
        %p289 = scmp.lt.s32.totalorder %s288, 31
        %s290 = scalar_select %p289, %s288, 31
        %s291 = smul.addr %s290, 8
        %s292 = scalar_lea.vmem %s1, %s291
        %s293 = smul.u32 16, %s16
      $region40: #{graph_conv_forward.3} parent=35 // pred_fallthru
        _
      // Predicated region
      $region41: #{graph_conv_forward.3} parent=35 // pred_check
        %p294 = pneg %p83
      $region42: #{graph_conv_forward.3} parent=35 // pred_check_branch
        %296 = sbr.rel (%p294) target = $region44
      $region43: #{graph_conv_forward.3} parent=35 // pred_region
        %s297 = smul.u32 16, %s16
        %p298 = scmp.lt.s32.totalorder %s297, 31
        %s299 = scalar_select %p298, %s297, 31
        %s300 = smul.addr %s299, 8
        %s301 = scalar_lea.vmem %s2, %s300
        %s302 = smul.u32 16, %s16
      $region44: #{graph_conv_forward.3} parent=35 // pred_fallthru
        _
      // Predicated region
      $region45: #{graph_conv_forward.3} parent=35 // pred_check
        %p303 = pneg %p109
      $region46: #{graph_conv_forward.3} parent=35 // pred_check_branch
        %305 = sbr.rel (%p303) target = $region48
      $region47: #{graph_conv_forward.3} parent=35 // pred_region
        %s306 = smul.u32 16, %s16
        %p307 = scmp.lt.s32.totalorder %s306, 31
        %s308 = scalar_select %p307, %s306, 31
        %s309 = smul.addr %s308, 8
        %s310 = scalar_lea.vmem %s3, %s309
        %s311 = smul.u32 16, %s16
      $region48: #{graph_conv_forward.3} parent=35 // pred_fallthru
        _
    $region36: #{graph_conv_forward.3} parent=5 // pred_fallthru
      _
    %p312 = scmp.le.s32.totalorder 1, %s16
    %p313 = scmp.lt.s32.totalorder %s16, 3
    %p314 = pnand %p312, %p313
    %p315 = pneg %p314
    // Predicated region
    $region49: #{graph_conv_forward.3} parent=5 // pred_check
      _
    $region50: #{graph_conv_forward.3} parent=5 // pred_check_branch
      %317 = sbr.rel (%p314) target = $region52
    $region51: #{graph_conv_forward.3} parent=5 // pred_region
      %s318 = ssub.s32 %s16, 1
      %p319 = pneg %p37
      %p320 = pneg %p34
      %s321 = smul.u32 16, %s21
      %p322 = scmp.lt.s32.totalorder %s321, 31
      %s323 = scalar_select %p322, %s321, 31
      %s324 = smul.addr %s323, 8
      %s325 = scalar_lea.vmem %s1, %s324
      %p326 = pneg %p63
      %p327 = pneg %p60
      %s328 = smul.u32 16, %s21
      %p329 = scmp.lt.s32.totalorder %s328, 31
      %s330 = scalar_select %p329, %s328, 31
      %s331 = smul.addr %s330, 8
      %s332 = scalar_lea.vmem %s2, %s331
      %p333 = pneg %p89
      %p334 = pneg %p86
      %s335 = smul.u32 16, %s21
      %p336 = scmp.lt.s32.totalorder %s335, 31
      %s337 = scalar_select %p336, %s335, 31
      %s338 = smul.addr %s337, 8
      %s339 = scalar_lea.vmem %s3, %s338
      %p340 = pneg %p115
      %p341 = pneg %p112
      %p342 = pneg %p136
      %p343 = pneg %p133
      %p344 = pneg %p157
      %p345 = pneg %p154
      %p346 = pneg %p178
      %p347 = pneg %p175
      %p348 = pneg %p199
      %p349 = pneg %p196
      %p350 = pneg %p225
      %p351 = pneg %p222
      %s352 = smul.u32 16, %s21
      %p353 = scmp.lt.s32.totalorder %s352, 31
      %s354 = scalar_select %p353, %s352, 31
      %s355 = smul.addr %s354, 4
      %s356 = scalar_lea.vmem %s8, %s355
      %p357 = pneg %p251
      %p358 = pneg %p248
      %p359 = scmp.lt.s32.totalorder %s21, 1
      %s360 = scalar_select %p359, %s21, 1
      %s361 = smul.addr %s360, 8
      %s362 = scalar_lea.vmem %s9, %s361
      %s363 = smul.u32 16, %s21
      %p364 = scmp.lt.s32.totalorder %s363, 31
      %s365 = scalar_select %p364, %s363, 31
      %s366 = smul.addr %s365, 8
      %s367 = scalar_lea.vmem %s1, %s366
      %s368 = smul.u32 16, %s21
      %s369 = smul.u32 16, %s21
      %p370 = scmp.lt.s32.totalorder %s369, 31
      %s371 = scalar_select %p370, %s369, 31
      %s372 = smul.addr %s371, 8
      %s373 = scalar_lea.vmem %s2, %s372
      %s374 = smul.u32 16, %s21
      %s375 = smul.u32 16, %s21
      %p376 = scmp.lt.s32.totalorder %s375, 31
      %s377 = scalar_select %p376, %s375, 31
      %s378 = smul.addr %s377, 8
      %s379 = scalar_lea.vmem %s3, %s378
      %s380 = smul.u32 16, %s21
      %s381 = smul.u32 16, %s21
      %p382 = scmp.lt.s32.totalorder %s381, 31
      %s383 = scalar_select %p382, %s381, 31
      %s384 = smul.addr %s383, 4
      %s385 = scalar_lea.vmem %s8, %s384
      %s386 = smul.u32 16, %s21
      %p387 = scmp.lt.s32.totalorder %s21, 1
      %s388 = scalar_select %p387, %s21, 1
      %s389 = smul.addr %s388, 8
      %s390 = scalar_lea.vmem %s9, %s389
      %v392 = vld [vmem:[%s0] sm:$0xf]
      %v393 = vld [vmem:[%s0 + $0x4] sm:$0xf]
      %v394 = vld [vmem:[%s0 + $0x8] sm:$0xf]
      %v395 = vld [vmem:[%s0 + $0xc] sm:$0xf]
      %v396 = vld [vmem:[%s0 + $0x10] sm:$0xf]
      %v397 = vld [vmem:[%s0 + $0x14] sm:$0xf]
      %v398 = vld [vmem:[%s0 + $0x18] sm:$0xf]
      %v399 = vld [vmem:[%s0 + $0x1c] sm:$0xf]
      %v400 = vld [vmem:[%s0 + $0x20] sm:$0xf]
      %v401 = vld [vmem:[%s0 + $0x24] sm:$0xf]
      %v402 = vld [vmem:[%s0 + $0x28] sm:$0xf]
      %v403 = vld [vmem:[%s0 + $0x2c] sm:$0xf]
      %v404 = vld [vmem:[%s0 + $0x30] sm:$0xf]
      %v405 = vld [vmem:[%s0 + $0x34] sm:$0xf]
      %v406 = vld [vmem:[%s0 + $0x38] sm:$0xf]
      %v407 = vld [vmem:[%s0 + $0x3c] sm:$0xf]
      %v408 = vld [vmem:[%s0 + $0x40] sm:$0xf]
      %v409 = vld [vmem:[%s0 + $0x44] sm:$0xf]
      %v410 = vld [vmem:[%s0 + $0x48] sm:$0xf]
      %v411 = vld [vmem:[%s0 + $0x4c] sm:$0xf]
      %v412 = vld [vmem:[%s0 + $0x50] sm:$0xf]
      %v413 = vld [vmem:[%s0 + $0x54] sm:$0xf]
      %v414 = vld [vmem:[%s0 + $0x58] sm:$0xf]
      %v415 = vld [vmem:[%s0 + $0x5c] sm:$0xf]
      %v416 = vld [vmem:[%s0 + $0x60] sm:$0xf]
      %v417 = vld [vmem:[%s0 + $0x64] sm:$0xf]
      %v418 = vld [vmem:[%s0 + $0x68] sm:$0xf]
      %v419 = vld [vmem:[%s0 + $0x6c] sm:$0xf]
      %v420 = vld [vmem:[%s0 + $0x70] sm:$0xf]
      %v421 = vld [vmem:[%s0 + $0x74] sm:$0xf]
      %v422 = vld [vmem:[%s0 + $0x78] sm:$0xf]
      %v423 = vld [vmem:[%s0 + $0x7c] sm:$0xf]
      %v424 = vld [vmem:[%s367] sm:$0xff]
      %v425 = vld [vmem:[%s367 + $0x8] sm:$0xff]
      %v426 = vld [vmem:[%s367 + $0x10] sm:$0xff]
      %v427 = vld [vmem:[%s367 + $0x18] sm:$0xff]
      %v428 = vld [vmem:[%s367 + $0x20] sm:$0xff]
      %v429 = vld [vmem:[%s367 + $0x28] sm:$0xff]
      %v430 = vld [vmem:[%s367 + $0x30] sm:$0xff]
      %v431 = vld [vmem:[%s367 + $0x38] sm:$0xff]
      %v432 = vld [vmem:[%s367 + $0x40] sm:$0xff]
      %v433 = vld [vmem:[%s367 + $0x48] sm:$0xff]
      %v434 = vld [vmem:[%s367 + $0x50] sm:$0xff]
      %v435 = vld [vmem:[%s367 + $0x58] sm:$0xff]
      %v436 = vld [vmem:[%s367 + $0x60] sm:$0xff]
      %v437 = vld [vmem:[%s367 + $0x68] sm:$0xff]
      %v438 = vld [vmem:[%s367 + $0x70] sm:$0xff]
      %v439 = vld [vmem:[%s367 + $0x78] sm:$0xff]
      %v440 = vld [vmem:[%s373] sm:$0xff]
      %v441 = vld [vmem:[%s373 + $0x8] sm:$0xff]
      %v442 = vld [vmem:[%s373 + $0x10] sm:$0xff]
      %v443 = vld [vmem:[%s373 + $0x18] sm:$0xff]
      %v444 = vld [vmem:[%s373 + $0x20] sm:$0xff]
      %v445 = vld [vmem:[%s373 + $0x28] sm:$0xff]
      %v446 = vld [vmem:[%s373 + $0x30] sm:$0xff]
      %v447 = vld [vmem:[%s373 + $0x38] sm:$0xff]
      %v448 = vld [vmem:[%s373 + $0x40] sm:$0xff]
      %v449 = vld [vmem:[%s373 + $0x48] sm:$0xff]
      %v450 = vld [vmem:[%s373 + $0x50] sm:$0xff]
      %v451 = vld [vmem:[%s373 + $0x58] sm:$0xff]
      %v452 = vld [vmem:[%s373 + $0x60] sm:$0xff]
      %v453 = vld [vmem:[%s373 + $0x68] sm:$0xff]
      %v454 = vld [vmem:[%s373 + $0x70] sm:$0xff]
      %v455 = vld [vmem:[%s373 + $0x78] sm:$0xff]
      %v456 = vld [vmem:[%s379] sm:$0xff]
      %v457 = vld [vmem:[%s379 + $0x8] sm:$0xff]
      %v458 = vld [vmem:[%s379 + $0x10] sm:$0xff]
      %v459 = vld [vmem:[%s379 + $0x18] sm:$0xff]
      %v460 = vld [vmem:[%s379 + $0x20] sm:$0xff]
      %v461 = vld [vmem:[%s379 + $0x28] sm:$0xff]
      %v462 = vld [vmem:[%s379 + $0x30] sm:$0xff]
      %v463 = vld [vmem:[%s379 + $0x38] sm:$0xff]
      %v464 = vld [vmem:[%s379 + $0x40] sm:$0xff]
      %v465 = vld [vmem:[%s379 + $0x48] sm:$0xff]
      %v466 = vld [vmem:[%s379 + $0x50] sm:$0xff]
      %v467 = vld [vmem:[%s379 + $0x58] sm:$0xff]
      %v468 = vld [vmem:[%s379 + $0x60] sm:$0xff]
      %v469 = vld [vmem:[%s379 + $0x68] sm:$0xff]
      %v470 = vld [vmem:[%s379 + $0x70] sm:$0xff]
      %v471 = vld [vmem:[%s379 + $0x78] sm:$0xff]
      %v472 = vlaneseq
      %v473 = vand.u32 %v472, 127
      %v474 = vadd.s32 %v473, 128
      %475 = vset.pattern.permute.xlu0 0
      %476 = vperm.xlu0 %475, %v424
      %v477 = vpop.permute.xlu0 %476
      %478 = vset.pattern.permute.xlu0 0
      %479 = vperm.xlu0 %478, %v425
      %v480 = vpop.permute.xlu0 %479
      %481 = vset.pattern.permute.xlu0 0
      %482 = vperm.xlu0 %481, %v426
      %v483 = vpop.permute.xlu0 %482
      %484 = vset.pattern.permute.xlu0 0
      %485 = vperm.xlu0 %484, %v427
      %v486 = vpop.permute.xlu0 %485
      %487 = vset.pattern.permute.xlu0 0
      %488 = vperm.xlu0 %487, %v428
      %v489 = vpop.permute.xlu0 %488
      %490 = vset.pattern.permute.xlu0 0
      %491 = vperm.xlu0 %490, %v429
      %v492 = vpop.permute.xlu0 %491
      %493 = vset.pattern.permute.xlu0 0
      %494 = vperm.xlu0 %493, %v430
      %v495 = vpop.permute.xlu0 %494
      %496 = vset.pattern.permute.xlu0 0
      %497 = vperm.xlu0 %496, %v431
      %v498 = vpop.permute.xlu0 %497
      %499 = vset.pattern.permute.xlu0 0
      %500 = vperm.xlu0 %499, %v432
      %v501 = vpop.permute.xlu0 %500
      %502 = vset.pattern.permute.xlu0 0
      %503 = vperm.xlu0 %502, %v433
      %v504 = vpop.permute.xlu0 %503
      %505 = vset.pattern.permute.xlu0 0
      %506 = vperm.xlu0 %505, %v434
      %v507 = vpop.permute.xlu0 %506
      %508 = vset.pattern.permute.xlu0 0
      %509 = vperm.xlu0 %508, %v435
      %v510 = vpop.permute.xlu0 %509
      %511 = vset.pattern.permute.xlu0 0
      %512 = vperm.xlu0 %511, %v436
      %v513 = vpop.permute.xlu0 %512
      %514 = vset.pattern.permute.xlu0 0
      %515 = vperm.xlu0 %514, %v437
      %v516 = vpop.permute.xlu0 %515
      %517 = vset.pattern.permute.xlu0 0
      %518 = vperm.xlu0 %517, %v438
      %v519 = vpop.permute.xlu0 %518
      %520 = vset.pattern.permute.xlu0 0
      %521 = vperm.xlu0 %520, %v439
      %v522 = vpop.permute.xlu0 %521
      %vm523 = vcmp.eq.s32.totalorder %v473, %v477
      %vm524 = vcmp.eq.s32.totalorder %v474, %v477
      %vm525 = vcmp.eq.s32.totalorder %v473, %v480
      %vm526 = vcmp.eq.s32.totalorder %v474, %v480
      %vm527 = vcmp.eq.s32.totalorder %v473, %v483
      %vm528 = vcmp.eq.s32.totalorder %v474, %v483
      %vm529 = vcmp.eq.s32.totalorder %v473, %v486
      %vm530 = vcmp.eq.s32.totalorder %v474, %v486
      %vm531 = vcmp.eq.s32.totalorder %v473, %v489
      %vm532 = vcmp.eq.s32.totalorder %v474, %v489
      %vm533 = vcmp.eq.s32.totalorder %v473, %v492
      %vm534 = vcmp.eq.s32.totalorder %v474, %v492
      %vm535 = vcmp.eq.s32.totalorder %v473, %v495
      %vm536 = vcmp.eq.s32.totalorder %v474, %v495
      %vm537 = vcmp.eq.s32.totalorder %v473, %v498
      %vm538 = vcmp.eq.s32.totalorder %v474, %v498
      %vm539 = vcmp.eq.s32.totalorder %v473, %v501
      %vm540 = vcmp.eq.s32.totalorder %v474, %v501
      %vm541 = vcmp.eq.s32.totalorder %v473, %v504
      %vm542 = vcmp.eq.s32.totalorder %v474, %v504
      %vm543 = vcmp.eq.s32.totalorder %v473, %v507
      %vm544 = vcmp.eq.s32.totalorder %v474, %v507
      %vm545 = vcmp.eq.s32.totalorder %v473, %v510
      %vm546 = vcmp.eq.s32.totalorder %v474, %v510
      %vm547 = vcmp.eq.s32.totalorder %v473, %v513
      %vm548 = vcmp.eq.s32.totalorder %v474, %v513
      %vm549 = vcmp.eq.s32.totalorder %v473, %v516
      %vm550 = vcmp.eq.s32.totalorder %v474, %v516
      %vm551 = vcmp.eq.s32.totalorder %v473, %v519
      %vm552 = vcmp.eq.s32.totalorder %v474, %v519
      %vm553 = vcmp.eq.s32.totalorder %v473, %v522
      %vm554 = vcmp.eq.s32.totalorder %v474, %v522
      %v555 = vsel %vm523, 1.0, 0.0
      %v556 = vsel %vm524, 1.0, 0.0
      %v557 = vsel %vm525, 1.0, 0.0
      %v558 = vsel %vm526, 1.0, 0.0
      %v559 = vsel %vm527, 1.0, 0.0
      %v560 = vsel %vm528, 1.0, 0.0
      %v561 = vsel %vm529, 1.0, 0.0
      %v562 = vsel %vm530, 1.0, 0.0
      %v563 = vsel %vm531, 1.0, 0.0
      %v564 = vsel %vm532, 1.0, 0.0
      %v565 = vsel %vm533, 1.0, 0.0
      %v566 = vsel %vm534, 1.0, 0.0
      %v567 = vsel %vm535, 1.0, 0.0
      %v568 = vsel %vm536, 1.0, 0.0
      %v569 = vsel %vm537, 1.0, 0.0
      %v570 = vsel %vm538, 1.0, 0.0
      %v571 = vsel %vm539, 1.0, 0.0
      %v572 = vsel %vm540, 1.0, 0.0
      %v573 = vsel %vm541, 1.0, 0.0
      %v574 = vsel %vm542, 1.0, 0.0
      %v575 = vsel %vm543, 1.0, 0.0
      %v576 = vsel %vm544, 1.0, 0.0
      %v577 = vsel %vm545, 1.0, 0.0
      %v578 = vsel %vm546, 1.0, 0.0
      %v579 = vsel %vm547, 1.0, 0.0
      %v580 = vsel %vm548, 1.0, 0.0
      %v581 = vsel %vm549, 1.0, 0.0
      %v582 = vsel %vm550, 1.0, 0.0
      %v583 = vsel %vm551, 1.0, 0.0
      %v584 = vsel %vm552, 1.0, 0.0
      %v585 = vsel %vm553, 1.0, 0.0
      %v586 = vsel %vm554, 1.0, 0.0
      %v587 = vpack.c.bf16 %v557, %v555
      %v588 = vpack.c.bf16 %v558, %v556
      %v589 = vpack.c.bf16 %v561, %v559
      %v590 = vpack.c.bf16 %v562, %v560
      %v591 = vpack.c.bf16 %v565, %v563
      %v592 = vpack.c.bf16 %v566, %v564
      %v593 = vpack.c.bf16 %v569, %v567
      %v594 = vpack.c.bf16 %v570, %v568
      %v595 = vpack.c.bf16 %v573, %v571
      %v596 = vpack.c.bf16 %v574, %v572
      %v597 = vpack.c.bf16 %v577, %v575
      %v598 = vpack.c.bf16 %v578, %v576
      %v599 = vpack.c.bf16 %v581, %v579
      %v600 = vpack.c.bf16 %v582, %v580
      %v601 = vpack.c.bf16 %v585, %v583
      %v602 = vpack.c.bf16 %v586, %v584
      %v635 = vunpack.c.l.b16 %v392
      %v636 = vunpack.c.l.b16 %v393
      %v637 = vunpack.c.l.b16 %v394
      %v638 = vunpack.c.l.b16 %v395
      %v639 = vunpack.c.l.b16 %v396
      %v640 = vunpack.c.l.b16 %v397
      %v641 = vunpack.c.l.b16 %v398
      %v642 = vunpack.c.l.b16 %v399
      %v643 = vunpack.c.l.b16 %v400
      %v644 = vunpack.c.l.b16 %v401
      %v645 = vunpack.c.l.b16 %v402
      %v646 = vunpack.c.l.b16 %v403
      %v647 = vunpack.c.l.b16 %v404
      %v648 = vunpack.c.l.b16 %v405
      %v649 = vunpack.c.l.b16 %v406
      %v650 = vunpack.c.l.b16 %v407
      %v651 = vunpack.c.l.b16 %v408
      %v652 = vunpack.c.l.b16 %v409
      %v653 = vunpack.c.l.b16 %v410
      %v654 = vunpack.c.l.b16 %v411
      %v655 = vunpack.c.l.b16 %v412
      %v656 = vunpack.c.l.b16 %v413
      %v657 = vunpack.c.l.b16 %v414
      %v658 = vunpack.c.l.b16 %v415
      %v659 = vunpack.c.l.b16 %v416
      %v660 = vunpack.c.l.b16 %v417
      %v661 = vunpack.c.l.b16 %v418
      %v662 = vunpack.c.l.b16 %v419
      %v663 = vunpack.c.l.b16 %v420
      %v664 = vunpack.c.l.b16 %v421
      %v665 = vunpack.c.l.b16 %v422
      %v666 = vunpack.c.l.b16 %v423
      %v667 = vpack.c.b16 %v636, %v635
      %v668 = vpack.c.b16 %v638, %v637
      %v669 = vpack.c.b16 %v640, %v639
      %v670 = vpack.c.b16 %v642, %v641
      %v671 = vpack.c.b16 %v644, %v643
      %v672 = vpack.c.b16 %v646, %v645
      %v673 = vpack.c.b16 %v648, %v647
      %v674 = vpack.c.b16 %v650, %v649
      %v675 = vpack.c.b16 %v652, %v651
      %v676 = vpack.c.b16 %v654, %v653
      %v677 = vpack.c.b16 %v656, %v655
      %v678 = vpack.c.b16 %v658, %v657
      %v679 = vpack.c.b16 %v660, %v659
      %v680 = vpack.c.b16 %v662, %v661
      %v681 = vpack.c.b16 %v664, %v663
      %v682 = vpack.c.b16 %v666, %v665
      %699 = vmatprep.subr.bf16.mxu0 0
      %700 = vmatpush1.bf16.msra.mxu0 %v674
      %701 = vmatprep.subr.bf16.mxu0 0
      %702 = vmatpush1.bf16.msra.mxu0 %v673
      %703 = vmatprep.subr.bf16.mxu0 0
      %704 = vmatpush1.bf16.msra.mxu0 %v672
      %705 = vmatprep.subr.bf16.mxu0 0
      %706 = vmatpush1.bf16.msra.mxu0 %v671
      %707 = vmatprep.subr.bf16.mxu0 0
      %708 = vmatpush1.bf16.msra.mxu0 %v670
      %709 = vmatprep.subr.bf16.mxu0 0
      %710 = vmatpush1.bf16.msra.mxu0 %v669
      %711 = vmatprep.subr.bf16.mxu0 0
      %712 = vmatpush1.bf16.msra.mxu0 %v668
      %713 = vmatprep.subr.bf16.mxu0 0
      %714 = vmatpush1.bf16.msra.mxu0 %v667
      %715 = vmatprep.subr.bf16.mxu0 0
      %716 = vmatpush2.bf16.msra.mxu0 %v682
      %717 = vmatprep.subr.bf16.mxu0 0
      %718 = vmatpush2.bf16.msra.mxu0 %v681
      %719 = vmatprep.subr.bf16.mxu0 0
      %720 = vmatpush2.bf16.msra.mxu0 %v680
      %721 = vmatprep.subr.bf16.mxu0 0
      %722 = vmatpush2.bf16.msra.mxu0 %v679
      %723 = vmatprep.subr.bf16.mxu0 0
      %724 = vmatpush2.bf16.msra.mxu0 %v678
      %725 = vmatprep.subr.bf16.mxu0 0
      %726 = vmatpush2.bf16.msra.mxu0 %v677
      %727 = vmatprep.subr.bf16.mxu0 0
      %728 = vmatpush2.bf16.msra.mxu0 %v676
      %729 = vmatprep.subr.bf16.mxu0 0
      %730 = vmatpush2.bf16.msra.mxu0 %v675
      %731 = vmatprep.mubr.bf16.mxu0 %v588
      %732 = vmatmul.mubr.bf16.gmra.mxu0 %v587
      %v733 = vpop.f32.mrf.mxu0
      %v734 = vadd.f32 0.0, %v733
      %v735 = vpop.f32.mrf.mxu0
      %v736 = vpop.f32.mrf.mxu0
      %v737 = vadd.f32 0.0, %v736
      %v738 = vpop.f32.mrf.mxu0
      %739 = vmatprep.mubr.bf16.mxu0 %v590
      %740 = vmatmul.mubr.bf16.gmra.mxu0 %v589
      %v741 = vpop.f32.mrf.mxu0
      %v742 = vadd.f32 0.0, %v741
      %v743 = vpop.f32.mrf.mxu0
      %v744 = vpop.f32.mrf.mxu0
      %v745 = vadd.f32 0.0, %v744
      %v746 = vpop.f32.mrf.mxu0
      %747 = vmatprep.mubr.bf16.mxu0 %v592
      %748 = vmatmul.mubr.bf16.gmra.mxu0 %v591
      %v749 = vpop.f32.mrf.mxu0
      %v750 = vadd.f32 0.0, %v749
      %v751 = vpop.f32.mrf.mxu0
      %v752 = vpop.f32.mrf.mxu0
      %v753 = vadd.f32 0.0, %v752
      %v754 = vpop.f32.mrf.mxu0
      %755 = vmatprep.mubr.bf16.mxu0 %v594
      %756 = vmatmul.mubr.bf16.gmra.mxu0 %v593
      %v757 = vpop.f32.mrf.mxu0
      %v758 = vadd.f32 0.0, %v757
      %v759 = vpop.f32.mrf.mxu0
      %v760 = vpop.f32.mrf.mxu0
      %v761 = vadd.f32 0.0, %v760
      %v762 = vpop.f32.mrf.mxu0
      %763 = vmatprep.mubr.bf16.mxu0 %v596
      %764 = vmatmul.mubr.bf16.gmra.mxu0 %v595
      %v765 = vpop.f32.mrf.mxu0
      %v766 = vadd.f32 0.0, %v765
      %v767 = vpop.f32.mrf.mxu0
      %v768 = vpop.f32.mrf.mxu0
      %v769 = vadd.f32 0.0, %v768
      %v770 = vpop.f32.mrf.mxu0
      %771 = vmatprep.mubr.bf16.mxu0 %v598
      %772 = vmatmul.mubr.bf16.gmra.mxu0 %v597
      %v773 = vpop.f32.mrf.mxu0
      %v774 = vadd.f32 0.0, %v773
      %v775 = vpop.f32.mrf.mxu0
      %v776 = vpop.f32.mrf.mxu0
      %v777 = vadd.f32 0.0, %v776
      %v778 = vpop.f32.mrf.mxu0
      %779 = vmatprep.mubr.bf16.mxu0 %v600
      %780 = vmatmul.mubr.bf16.gmra.mxu0 %v599
      %v781 = vpop.f32.mrf.mxu0
      %v782 = vadd.f32 0.0, %v781
      %v783 = vpop.f32.mrf.mxu0
      %v784 = vpop.f32.mrf.mxu0
      %v785 = vadd.f32 0.0, %v784
      %v786 = vpop.f32.mrf.mxu0
      %787 = vmatprep.mubr.bf16.mxu0 %v602
      %788 = vmatmul.mubr.bf16.gmra.mxu0 %v601
      %v789 = vpop.f32.mrf.mxu0
      %v790 = vadd.f32 0.0, %v789
      %v791 = vpop.f32.mrf.mxu0
      %v792 = vpop.f32.mrf.mxu0
      %v793 = vadd.f32 0.0, %v792
      %v794 = vpop.f32.mrf.mxu0
      %795 = vdwg.mxu0
      %797 = vset.pattern.permute.xlu0 0
      %798 = vperm.xlu0 %797, %v440
      %v799 = vpop.permute.xlu0 %798
      %802 = vset.pattern.permute.xlu0 0
      %803 = vperm.xlu0 %802, %v441
      %v804 = vpop.permute.xlu0 %803
      %807 = vset.pattern.permute.xlu0 0
      %808 = vperm.xlu0 %807, %v442
      %v809 = vpop.permute.xlu0 %808
      %812 = vset.pattern.permute.xlu0 0
      %813 = vperm.xlu0 %812, %v443
      %v814 = vpop.permute.xlu0 %813
      %817 = vset.pattern.permute.xlu0 0
      %818 = vperm.xlu0 %817, %v444
      %v819 = vpop.permute.xlu0 %818
      %822 = vset.pattern.permute.xlu0 0
      %823 = vperm.xlu0 %822, %v445
      %v824 = vpop.permute.xlu0 %823
      %827 = vset.pattern.permute.xlu0 0
      %828 = vperm.xlu0 %827, %v446
      %v829 = vpop.permute.xlu0 %828
      %832 = vset.pattern.permute.xlu0 0
      %833 = vperm.xlu0 %832, %v447
      %v834 = vpop.permute.xlu0 %833
      %837 = vset.pattern.permute.xlu0 0
      %838 = vperm.xlu0 %837, %v448
      %v839 = vpop.permute.xlu0 %838
      %842 = vset.pattern.permute.xlu0 0
      %843 = vperm.xlu0 %842, %v449
      %v844 = vpop.permute.xlu0 %843
      %847 = vset.pattern.permute.xlu0 0
      %848 = vperm.xlu0 %847, %v450
      %v849 = vpop.permute.xlu0 %848
      %852 = vset.pattern.permute.xlu0 0
      %853 = vperm.xlu0 %852, %v451
      %v854 = vpop.permute.xlu0 %853
      %857 = vset.pattern.permute.xlu0 0
      %858 = vperm.xlu0 %857, %v452
      %v859 = vpop.permute.xlu0 %858
      %862 = vset.pattern.permute.xlu0 0
      %863 = vperm.xlu0 %862, %v453
      %v864 = vpop.permute.xlu0 %863
      %867 = vset.pattern.permute.xlu0 0
      %868 = vperm.xlu0 %867, %v454
      %v869 = vpop.permute.xlu0 %868
      %872 = vset.pattern.permute.xlu0 0
      %873 = vperm.xlu0 %872, %v455
      %v874 = vpop.permute.xlu0 %873
      %v876 = vmul.f32 %v734, %v799
      %v877 = vmul.f32 %v737, %v804
      %v878 = vmul.f32 %v742, %v809
      %v879 = vmul.f32 %v745, %v814
      %v880 = vmul.f32 %v750, %v819
      %v881 = vmul.f32 %v753, %v824
      %v882 = vmul.f32 %v758, %v829
      %v883 = vmul.f32 %v761, %v834
      %v884 = vmul.f32 %v766, %v839
      %v885 = vmul.f32 %v769, %v844
      %v886 = vmul.f32 %v774, %v849
      %v887 = vmul.f32 %v777, %v854
      %v888 = vmul.f32 %v782, %v859
      %v889 = vmul.f32 %v785, %v864
      %v890 = vmul.f32 %v790, %v869
      %v891 = vmul.f32 %v793, %v874
      %v892 = vadd.f32 %v876, 0.0
      %v893 = vadd.f32 %v877, 0.0
      %v894 = vadd.f32 %v878, 0.0
      %v895 = vadd.f32 %v879, 0.0
      %v896 = vadd.f32 %v880, 0.0
      %v897 = vadd.f32 %v881, 0.0
      %v898 = vadd.f32 %v882, 0.0
      %v899 = vadd.f32 %v883, 0.0
      %v900 = vadd.f32 %v884, 0.0
      %v901 = vadd.f32 %v885, 0.0
      %v902 = vadd.f32 %v886, 0.0
      %v903 = vadd.f32 %v887, 0.0
      %v904 = vadd.f32 %v888, 0.0
      %v905 = vadd.f32 %v889, 0.0
      %v906 = vadd.f32 %v890, 0.0
      %v907 = vadd.f32 %v891, 0.0
      %vm908 = vcmp.gt.s32.totalorder %v456, 0
      %vm909 = vcmp.gt.s32.totalorder %v457, 0
      %vm910 = vcmp.gt.s32.totalorder %v458, 0
      %vm911 = vcmp.gt.s32.totalorder %v459, 0
      %vm912 = vcmp.gt.s32.totalorder %v460, 0
      %vm913 = vcmp.gt.s32.totalorder %v461, 0
      %vm914 = vcmp.gt.s32.totalorder %v462, 0
      %vm915 = vcmp.gt.s32.totalorder %v463, 0
      %vm916 = vcmp.gt.s32.totalorder %v464, 0
      %vm917 = vcmp.gt.s32.totalorder %v465, 0
      %vm918 = vcmp.gt.s32.totalorder %v466, 0
      %vm919 = vcmp.gt.s32.totalorder %v467, 0
      %vm920 = vcmp.gt.s32.totalorder %v468, 0
      %vm921 = vcmp.gt.s32.totalorder %v469, 0
      %vm922 = vcmp.gt.s32.totalorder %v470, 0
      %vm923 = vcmp.gt.s32.totalorder %v471, 0
      %v924 = vsel %vm908, 1, 0
      %v925 = vsel %vm909, 1, 0
      %v926 = vsel %vm910, 1, 0
      %v927 = vsel %vm911, 1, 0
      %v928 = vsel %vm912, 1, 0
      %v929 = vsel %vm913, 1, 0
      %v930 = vsel %vm914, 1, 0
      %v931 = vsel %vm915, 1, 0
      %v932 = vsel %vm916, 1, 0
      %v933 = vsel %vm917, 1, 0
      %v934 = vsel %vm918, 1, 0
      %v935 = vsel %vm919, 1, 0
      %v936 = vsel %vm920, 1, 0
      %v937 = vsel %vm921, 1, 0
      %v938 = vsel %vm922, 1, 0
      %v939 = vsel %vm923, 1, 0
      %940 = vset.pattern.permute.xlu0 0
      %941 = vperm.xlu0 %940, %v924
      %v942 = vpop.permute.xlu0 %941
      %943 = vset.pattern.permute.xlu0 0
      %944 = vperm.xlu0 %943, %v925
      %v945 = vpop.permute.xlu0 %944
      %946 = vset.pattern.permute.xlu0 0
      %947 = vperm.xlu0 %946, %v926
      %v948 = vpop.permute.xlu0 %947
      %949 = vset.pattern.permute.xlu0 0
      %950 = vperm.xlu0 %949, %v927
      %v951 = vpop.permute.xlu0 %950
      %952 = vset.pattern.permute.xlu0 0
      %953 = vperm.xlu0 %952, %v928
      %v954 = vpop.permute.xlu0 %953
      %955 = vset.pattern.permute.xlu0 0
      %956 = vperm.xlu0 %955, %v929
      %v957 = vpop.permute.xlu0 %956
      %958 = vset.pattern.permute.xlu0 0
      %959 = vperm.xlu0 %958, %v930
      %v960 = vpop.permute.xlu0 %959
      %961 = vset.pattern.permute.xlu0 0
      %962 = vperm.xlu0 %961, %v931
      %v963 = vpop.permute.xlu0 %962
      %964 = vset.pattern.permute.xlu0 0
      %965 = vperm.xlu0 %964, %v932
      %v966 = vpop.permute.xlu0 %965
      %967 = vset.pattern.permute.xlu0 0
      %968 = vperm.xlu0 %967, %v933
      %v969 = vpop.permute.xlu0 %968
      %970 = vset.pattern.permute.xlu0 0
      %971 = vperm.xlu0 %970, %v934
      %v972 = vpop.permute.xlu0 %971
      %973 = vset.pattern.permute.xlu0 0
      %974 = vperm.xlu0 %973, %v935
      %v975 = vpop.permute.xlu0 %974
      %976 = vset.pattern.permute.xlu0 0
      %977 = vperm.xlu0 %976, %v936
      %v978 = vpop.permute.xlu0 %977
      %979 = vset.pattern.permute.xlu0 0
      %980 = vperm.xlu0 %979, %v937
      %v981 = vpop.permute.xlu0 %980
      %982 = vset.pattern.permute.xlu0 0
      %983 = vperm.xlu0 %982, %v938
      %v984 = vpop.permute.xlu0 %983
      %985 = vset.pattern.permute.xlu0 0
      %986 = vperm.xlu0 %985, %v939
      %v987 = vpop.permute.xlu0 %986
      %vm988 = vcmp.eq.s32.totalorder %v942, 1
      %vm989 = vcmp.eq.s32.totalorder %v945, 1
      %vm990 = vcmp.eq.s32.totalorder %v948, 1
      %vm991 = vcmp.eq.s32.totalorder %v951, 1
      %vm992 = vcmp.eq.s32.totalorder %v954, 1
      %vm993 = vcmp.eq.s32.totalorder %v957, 1
      %vm994 = vcmp.eq.s32.totalorder %v960, 1
      %vm995 = vcmp.eq.s32.totalorder %v963, 1
      %vm996 = vcmp.eq.s32.totalorder %v966, 1
      %vm997 = vcmp.eq.s32.totalorder %v969, 1
      %vm998 = vcmp.eq.s32.totalorder %v972, 1
      %vm999 = vcmp.eq.s32.totalorder %v975, 1
      %vm1000 = vcmp.eq.s32.totalorder %v978, 1
      %vm1001 = vcmp.eq.s32.totalorder %v981, 1
      %vm1002 = vcmp.eq.s32.totalorder %v984, 1
      %vm1003 = vcmp.eq.s32.totalorder %v987, 1
      %v1004 = vsel %vm988, %v876, -1e+30
      %v1005 = vsel %vm989, %v877, -1e+30
      %v1006 = vsel %vm990, %v878, -1e+30
      %v1007 = vsel %vm991, %v879, -1e+30
      %v1008 = vsel %vm992, %v880, -1e+30
      %v1009 = vsel %vm993, %v881, -1e+30
      %v1010 = vsel %vm994, %v882, -1e+30
      %v1011 = vsel %vm995, %v883, -1e+30
      %v1012 = vsel %vm996, %v884, -1e+30
      %v1013 = vsel %vm997, %v885, -1e+30
      %v1014 = vsel %vm998, %v886, -1e+30
      %v1015 = vsel %vm999, %v887, -1e+30
      %v1016 = vsel %vm1000, %v888, -1e+30
      %v1017 = vsel %vm1001, %v889, -1e+30
      %v1018 = vsel %vm1002, %v890, -1e+30
      %v1019 = vsel %vm1003, %v891, -1e+30
      %v1020 = vmax.f32 %v1004, -1e+30
      %v1021 = vmax.f32 %v1005, -1e+30
      %v1022 = vmax.f32 %v1006, -1e+30
      %v1023 = vmax.f32 %v1007, -1e+30
      %v1024 = vmax.f32 %v1008, -1e+30
      %v1025 = vmax.f32 %v1009, -1e+30
      %v1026 = vmax.f32 %v1010, -1e+30
      %v1027 = vmax.f32 %v1011, -1e+30
      %v1028 = vmax.f32 %v1012, -1e+30
      %v1029 = vmax.f32 %v1013, -1e+30
      %v1030 = vmax.f32 %v1014, -1e+30
      %v1031 = vmax.f32 %v1015, -1e+30
      %v1032 = vmax.f32 %v1016, -1e+30
      %v1033 = vmax.f32 %v1017, -1e+30
      %v1034 = vmax.f32 %v1018, -1e+30
      %v1035 = vmax.f32 %v1019, -1e+30
      %1036 = vset.pattern.permute.xlu0 1
      %1037 = vperm.xlu0 %1036, %v424
      %v1038 = vpop.permute.xlu0 %1037
      %1039 = vset.pattern.permute.xlu0 1
      %1040 = vperm.xlu0 %1039, %v425
      %v1041 = vpop.permute.xlu0 %1040
      %1042 = vset.pattern.permute.xlu0 1
      %1043 = vperm.xlu0 %1042, %v426
      %v1044 = vpop.permute.xlu0 %1043
      %1045 = vset.pattern.permute.xlu0 1
      %1046 = vperm.xlu0 %1045, %v427
      %v1047 = vpop.permute.xlu0 %1046
      %1048 = vset.pattern.permute.xlu0 1
      %1049 = vperm.xlu0 %1048, %v428
      %v1050 = vpop.permute.xlu0 %1049
      %1051 = vset.pattern.permute.xlu0 1
      %1052 = vperm.xlu0 %1051, %v429
      %v1053 = vpop.permute.xlu0 %1052
      %1054 = vset.pattern.permute.xlu0 1
      %1055 = vperm.xlu0 %1054, %v430
      %v1056 = vpop.permute.xlu0 %1055
      %1057 = vset.pattern.permute.xlu0 1
      %1058 = vperm.xlu0 %1057, %v431
      %v1059 = vpop.permute.xlu0 %1058
      %1060 = vset.pattern.permute.xlu0 1
      %1061 = vperm.xlu0 %1060, %v432
      %v1062 = vpop.permute.xlu0 %1061
      %1063 = vset.pattern.permute.xlu0 1
      %1064 = vperm.xlu0 %1063, %v433
      %v1065 = vpop.permute.xlu0 %1064
      %1066 = vset.pattern.permute.xlu0 1
      %1067 = vperm.xlu0 %1066, %v434
      %v1068 = vpop.permute.xlu0 %1067
      %1069 = vset.pattern.permute.xlu0 1
      %1070 = vperm.xlu0 %1069, %v435
      %v1071 = vpop.permute.xlu0 %1070
      %1072 = vset.pattern.permute.xlu0 1
      %1073 = vperm.xlu0 %1072, %v436
      %v1074 = vpop.permute.xlu0 %1073
      %1075 = vset.pattern.permute.xlu0 1
      %1076 = vperm.xlu0 %1075, %v437
      %v1077 = vpop.permute.xlu0 %1076
      %1078 = vset.pattern.permute.xlu0 1
      %1079 = vperm.xlu0 %1078, %v438
      %v1080 = vpop.permute.xlu0 %1079
      %1081 = vset.pattern.permute.xlu0 1
      %1082 = vperm.xlu0 %1081, %v439
      %v1083 = vpop.permute.xlu0 %1082
      %vm1084 = vcmp.eq.s32.totalorder %v473, %v1038
      %vm1085 = vcmp.eq.s32.totalorder %v474, %v1038
      %vm1086 = vcmp.eq.s32.totalorder %v473, %v1041
      %vm1087 = vcmp.eq.s32.totalorder %v474, %v1041
      %vm1088 = vcmp.eq.s32.totalorder %v473, %v1044
      %vm1089 = vcmp.eq.s32.totalorder %v474, %v1044
      %vm1090 = vcmp.eq.s32.totalorder %v473, %v1047
      %vm1091 = vcmp.eq.s32.totalorder %v474, %v1047
      %vm1092 = vcmp.eq.s32.totalorder %v473, %v1050
      %vm1093 = vcmp.eq.s32.totalorder %v474, %v1050
      %vm1094 = vcmp.eq.s32.totalorder %v473, %v1053
      %vm1095 = vcmp.eq.s32.totalorder %v474, %v1053
      %vm1096 = vcmp.eq.s32.totalorder %v473, %v1056
      %vm1097 = vcmp.eq.s32.totalorder %v474, %v1056
      %vm1098 = vcmp.eq.s32.totalorder %v473, %v1059
      %vm1099 = vcmp.eq.s32.totalorder %v474, %v1059
      %vm1100 = vcmp.eq.s32.totalorder %v473, %v1062
      %vm1101 = vcmp.eq.s32.totalorder %v474, %v1062
      %vm1102 = vcmp.eq.s32.totalorder %v473, %v1065
      %vm1103 = vcmp.eq.s32.totalorder %v474, %v1065
      %vm1104 = vcmp.eq.s32.totalorder %v473, %v1068
      %vm1105 = vcmp.eq.s32.totalorder %v474, %v1068
      %vm1106 = vcmp.eq.s32.totalorder %v473, %v1071
      %vm1107 = vcmp.eq.s32.totalorder %v474, %v1071
      %vm1108 = vcmp.eq.s32.totalorder %v473, %v1074
      %vm1109 = vcmp.eq.s32.totalorder %v474, %v1074
      %vm1110 = vcmp.eq.s32.totalorder %v473, %v1077
      %vm1111 = vcmp.eq.s32.totalorder %v474, %v1077
      %vm1112 = vcmp.eq.s32.totalorder %v473, %v1080
      %vm1113 = vcmp.eq.s32.totalorder %v474, %v1080
      %vm1114 = vcmp.eq.s32.totalorder %v473, %v1083
      %vm1115 = vcmp.eq.s32.totalorder %v474, %v1083
      %v1116 = vsel %vm1084, 1.0, 0.0
      %v1117 = vsel %vm1085, 1.0, 0.0
      %v1118 = vsel %vm1086, 1.0, 0.0
      %v1119 = vsel %vm1087, 1.0, 0.0
      %v1120 = vsel %vm1088, 1.0, 0.0
      %v1121 = vsel %vm1089, 1.0, 0.0
      %v1122 = vsel %vm1090, 1.0, 0.0
      %v1123 = vsel %vm1091, 1.0, 0.0
      %v1124 = vsel %vm1092, 1.0, 0.0
      %v1125 = vsel %vm1093, 1.0, 0.0
      %v1126 = vsel %vm1094, 1.0, 0.0
      %v1127 = vsel %vm1095, 1.0, 0.0
      %v1128 = vsel %vm1096, 1.0, 0.0
      %v1129 = vsel %vm1097, 1.0, 0.0
      %v1130 = vsel %vm1098, 1.0, 0.0
      %v1131 = vsel %vm1099, 1.0, 0.0
      %v1132 = vsel %vm1100, 1.0, 0.0
      %v1133 = vsel %vm1101, 1.0, 0.0
      %v1134 = vsel %vm1102, 1.0, 0.0
      %v1135 = vsel %vm1103, 1.0, 0.0
      %v1136 = vsel %vm1104, 1.0, 0.0
      %v1137 = vsel %vm1105, 1.0, 0.0
      %v1138 = vsel %vm1106, 1.0, 0.0
      %v1139 = vsel %vm1107, 1.0, 0.0
      %v1140 = vsel %vm1108, 1.0, 0.0
      %v1141 = vsel %vm1109, 1.0, 0.0
      %v1142 = vsel %vm1110, 1.0, 0.0
      %v1143 = vsel %vm1111, 1.0, 0.0
      %v1144 = vsel %vm1112, 1.0, 0.0
      %v1145 = vsel %vm1113, 1.0, 0.0
      %v1146 = vsel %vm1114, 1.0, 0.0
      %v1147 = vsel %vm1115, 1.0, 0.0
      %v1148 = vpack.c.bf16 %v1118, %v1116
      %v1149 = vpack.c.bf16 %v1119, %v1117
      %v1150 = vpack.c.bf16 %v1122, %v1120
      %v1151 = vpack.c.bf16 %v1123, %v1121
      %v1152 = vpack.c.bf16 %v1126, %v1124
      %v1153 = vpack.c.bf16 %v1127, %v1125
      %v1154 = vpack.c.bf16 %v1130, %v1128
      %v1155 = vpack.c.bf16 %v1131, %v1129
      %v1156 = vpack.c.bf16 %v1134, %v1132
      %v1157 = vpack.c.bf16 %v1135, %v1133
      %v1158 = vpack.c.bf16 %v1138, %v1136
      %v1159 = vpack.c.bf16 %v1139, %v1137
      %v1160 = vpack.c.bf16 %v1142, %v1140
      %v1161 = vpack.c.bf16 %v1143, %v1141
      %v1162 = vpack.c.bf16 %v1146, %v1144
      %v1163 = vpack.c.bf16 %v1147, %v1145
      %1164 = vmatprep.subr.bf16.mxu0 0
      %1165 = vmatpush1.bf16.msra.mxu0 %v674
      %1166 = vmatprep.subr.bf16.mxu0 0
      %1167 = vmatpush1.bf16.msra.mxu0 %v673
      %1168 = vmatprep.subr.bf16.mxu0 0
      %1169 = vmatpush1.bf16.msra.mxu0 %v672
      %1170 = vmatprep.subr.bf16.mxu0 0
      %1171 = vmatpush1.bf16.msra.mxu0 %v671
      %1172 = vmatprep.subr.bf16.mxu0 0
      %1173 = vmatpush1.bf16.msra.mxu0 %v670
      %1174 = vmatprep.subr.bf16.mxu0 0
      %1175 = vmatpush1.bf16.msra.mxu0 %v669
      %1176 = vmatprep.subr.bf16.mxu0 0
      %1177 = vmatpush1.bf16.msra.mxu0 %v668
      %1178 = vmatprep.subr.bf16.mxu0 0
      %1179 = vmatpush1.bf16.msra.mxu0 %v667
      %1180 = vmatprep.subr.bf16.mxu0 0
      %1181 = vmatpush2.bf16.msra.mxu0 %v682
      %1182 = vmatprep.subr.bf16.mxu0 0
      %1183 = vmatpush2.bf16.msra.mxu0 %v681
      %1184 = vmatprep.subr.bf16.mxu0 0
      %1185 = vmatpush2.bf16.msra.mxu0 %v680
      %1186 = vmatprep.subr.bf16.mxu0 0
      %1187 = vmatpush2.bf16.msra.mxu0 %v679
      %1188 = vmatprep.subr.bf16.mxu0 0
      %1189 = vmatpush2.bf16.msra.mxu0 %v678
      %1190 = vmatprep.subr.bf16.mxu0 0
      %1191 = vmatpush2.bf16.msra.mxu0 %v677
      %1192 = vmatprep.subr.bf16.mxu0 0
      %1193 = vmatpush2.bf16.msra.mxu0 %v676
      %1194 = vmatprep.subr.bf16.mxu0 0
      %1195 = vmatpush2.bf16.msra.mxu0 %v675
      %1196 = vmatprep.mubr.bf16.mxu0 %v1149
      %1197 = vmatmul.mubr.bf16.gmra.mxu0 %v1148
      %v1198 = vpop.f32.mrf.mxu0
      %v1199 = vadd.f32 0.0, %v1198
      %v1200 = vpop.f32.mrf.mxu0
      %v1201 = vpop.f32.mrf.mxu0
      %v1202 = vadd.f32 0.0, %v1201
      %v1203 = vpop.f32.mrf.mxu0
      %1204 = vmatprep.mubr.bf16.mxu0 %v1151
      %1205 = vmatmul.mubr.bf16.gmra.mxu0 %v1150
      %v1206 = vpop.f32.mrf.mxu0
      %v1207 = vadd.f32 0.0, %v1206
      %v1208 = vpop.f32.mrf.mxu0
      %v1209 = vpop.f32.mrf.mxu0
      %v1210 = vadd.f32 0.0, %v1209
      %v1211 = vpop.f32.mrf.mxu0
      %1212 = vmatprep.mubr.bf16.mxu0 %v1153
      %1213 = vmatmul.mubr.bf16.gmra.mxu0 %v1152
      %v1214 = vpop.f32.mrf.mxu0
      %v1215 = vadd.f32 0.0, %v1214
      %v1216 = vpop.f32.mrf.mxu0
      %v1217 = vpop.f32.mrf.mxu0
      %v1218 = vadd.f32 0.0, %v1217
      %v1219 = vpop.f32.mrf.mxu0
      %1220 = vmatprep.mubr.bf16.mxu0 %v1155
      %1221 = vmatmul.mubr.bf16.gmra.mxu0 %v1154
      %v1222 = vpop.f32.mrf.mxu0
      %v1223 = vadd.f32 0.0, %v1222
      %v1224 = vpop.f32.mrf.mxu0
      %v1225 = vpop.f32.mrf.mxu0
      %v1226 = vadd.f32 0.0, %v1225
      %v1227 = vpop.f32.mrf.mxu0
      %1228 = vmatprep.mubr.bf16.mxu0 %v1157
      %1229 = vmatmul.mubr.bf16.gmra.mxu0 %v1156
      %v1230 = vpop.f32.mrf.mxu0
      %v1231 = vadd.f32 0.0, %v1230
      %v1232 = vpop.f32.mrf.mxu0
      %v1233 = vpop.f32.mrf.mxu0
      %v1234 = vadd.f32 0.0, %v1233
      %v1235 = vpop.f32.mrf.mxu0
      %1236 = vmatprep.mubr.bf16.mxu0 %v1159
      %1237 = vmatmul.mubr.bf16.gmra.mxu0 %v1158
      %v1238 = vpop.f32.mrf.mxu0
      %v1239 = vadd.f32 0.0, %v1238
      %v1240 = vpop.f32.mrf.mxu0
      %v1241 = vpop.f32.mrf.mxu0
      %v1242 = vadd.f32 0.0, %v1241
      %v1243 = vpop.f32.mrf.mxu0
      %1244 = vmatprep.mubr.bf16.mxu0 %v1161
      %1245 = vmatmul.mubr.bf16.gmra.mxu0 %v1160
      %v1246 = vpop.f32.mrf.mxu0
      %v1247 = vadd.f32 0.0, %v1246
      %v1248 = vpop.f32.mrf.mxu0
      %v1249 = vpop.f32.mrf.mxu0
      %v1250 = vadd.f32 0.0, %v1249
      %v1251 = vpop.f32.mrf.mxu0
      %1252 = vmatprep.mubr.bf16.mxu0 %v1163
      %1253 = vmatmul.mubr.bf16.gmra.mxu0 %v1162
      %v1254 = vpop.f32.mrf.mxu0
      %v1255 = vadd.f32 0.0, %v1254
      %v1256 = vpop.f32.mrf.mxu0
      %v1257 = vpop.f32.mrf.mxu0
      %v1258 = vadd.f32 0.0, %v1257
      %v1259 = vpop.f32.mrf.mxu0
      %1260 = vdwg.mxu0
      %1261 = vset.pattern.permute.xlu0 1
      %1262 = vperm.xlu0 %1261, %v440
      %v1263 = vpop.permute.xlu0 %1262
      %1265 = vset.pattern.permute.xlu0 1
      %1266 = vperm.xlu0 %1265, %v441
      %v1267 = vpop.permute.xlu0 %1266
      %1269 = vset.pattern.permute.xlu0 1
      %1270 = vperm.xlu0 %1269, %v442
      %v1271 = vpop.permute.xlu0 %1270
      %1273 = vset.pattern.permute.xlu0 1
      %1274 = vperm.xlu0 %1273, %v443
      %v1275 = vpop.permute.xlu0 %1274
      %1277 = vset.pattern.permute.xlu0 1
      %1278 = vperm.xlu0 %1277, %v444
      %v1279 = vpop.permute.xlu0 %1278
      %1281 = vset.pattern.permute.xlu0 1
      %1282 = vperm.xlu0 %1281, %v445
      %v1283 = vpop.permute.xlu0 %1282
      %1285 = vset.pattern.permute.xlu0 1
      %1286 = vperm.xlu0 %1285, %v446
      %v1287 = vpop.permute.xlu0 %1286
      %1289 = vset.pattern.permute.xlu0 1
      %1290 = vperm.xlu0 %1289, %v447
      %v1291 = vpop.permute.xlu0 %1290
      %1293 = vset.pattern.permute.xlu0 1
      %1294 = vperm.xlu0 %1293, %v448
      %v1295 = vpop.permute.xlu0 %1294
      %1297 = vset.pattern.permute.xlu0 1
      %1298 = vperm.xlu0 %1297, %v449
      %v1299 = vpop.permute.xlu0 %1298
      %1301 = vset.pattern.permute.xlu0 1
      %1302 = vperm.xlu0 %1301, %v450
      %v1303 = vpop.permute.xlu0 %1302
      %1305 = vset.pattern.permute.xlu0 1
      %1306 = vperm.xlu0 %1305, %v451
      %v1307 = vpop.permute.xlu0 %1306
      %1309 = vset.pattern.permute.xlu0 1
      %1310 = vperm.xlu0 %1309, %v452
      %v1311 = vpop.permute.xlu0 %1310
      %1313 = vset.pattern.permute.xlu0 1
      %1314 = vperm.xlu0 %1313, %v453
      %v1315 = vpop.permute.xlu0 %1314
      %1317 = vset.pattern.permute.xlu0 1
      %1318 = vperm.xlu0 %1317, %v454
      %v1319 = vpop.permute.xlu0 %1318
      %1321 = vset.pattern.permute.xlu0 1
      %1322 = vperm.xlu0 %1321, %v455
      %v1323 = vpop.permute.xlu0 %1322
      %v1325 = vmul.f32 %v1199, %v1263
      %v1326 = vmul.f32 %v1202, %v1267
      %v1327 = vmul.f32 %v1207, %v1271
      %v1328 = vmul.f32 %v1210, %v1275
      %v1329 = vmul.f32 %v1215, %v1279
      %v1330 = vmul.f32 %v1218, %v1283
      %v1331 = vmul.f32 %v1223, %v1287
      %v1332 = vmul.f32 %v1226, %v1291
      %v1333 = vmul.f32 %v1231, %v1295
      %v1334 = vmul.f32 %v1234, %v1299
      %v1335 = vmul.f32 %v1239, %v1303
      %v1336 = vmul.f32 %v1242, %v1307
      %v1337 = vmul.f32 %v1247, %v1311
      %v1338 = vmul.f32 %v1250, %v1315
      %v1339 = vmul.f32 %v1255, %v1319
      %v1340 = vmul.f32 %v1258, %v1323
      %v1341 = vadd.f32 %v892, %v1325
      %v1342 = vadd.f32 %v893, %v1326
      %v1343 = vadd.f32 %v894, %v1327
      %v1344 = vadd.f32 %v895, %v1328
      %v1345 = vadd.f32 %v896, %v1329
      %v1346 = vadd.f32 %v897, %v1330
      %v1347 = vadd.f32 %v898, %v1331
      %v1348 = vadd.f32 %v899, %v1332
      %v1349 = vadd.f32 %v900, %v1333
      %v1350 = vadd.f32 %v901, %v1334
      %v1351 = vadd.f32 %v902, %v1335
      %v1352 = vadd.f32 %v903, %v1336
      %v1353 = vadd.f32 %v904, %v1337
      %v1354 = vadd.f32 %v905, %v1338
      %v1355 = vadd.f32 %v906, %v1339
      %v1356 = vadd.f32 %v907, %v1340
      %vm1357 = vcmp.gt.s32.totalorder %v456, 1
      %vm1358 = vcmp.gt.s32.totalorder %v457, 1
      %vm1359 = vcmp.gt.s32.totalorder %v458, 1
      %vm1360 = vcmp.gt.s32.totalorder %v459, 1
      %vm1361 = vcmp.gt.s32.totalorder %v460, 1
      %vm1362 = vcmp.gt.s32.totalorder %v461, 1
      %vm1363 = vcmp.gt.s32.totalorder %v462, 1
      %vm1364 = vcmp.gt.s32.totalorder %v463, 1
      %vm1365 = vcmp.gt.s32.totalorder %v464, 1
      %vm1366 = vcmp.gt.s32.totalorder %v465, 1
      %vm1367 = vcmp.gt.s32.totalorder %v466, 1
      %vm1368 = vcmp.gt.s32.totalorder %v467, 1
      %vm1369 = vcmp.gt.s32.totalorder %v468, 1
      %vm1370 = vcmp.gt.s32.totalorder %v469, 1
      %vm1371 = vcmp.gt.s32.totalorder %v470, 1
      %vm1372 = vcmp.gt.s32.totalorder %v471, 1
      %v1373 = vsel %vm1357, 1, 0
      %v1374 = vsel %vm1358, 1, 0
      %v1375 = vsel %vm1359, 1, 0
      %v1376 = vsel %vm1360, 1, 0
      %v1377 = vsel %vm1361, 1, 0
      %v1378 = vsel %vm1362, 1, 0
      %v1379 = vsel %vm1363, 1, 0
      %v1380 = vsel %vm1364, 1, 0
      %v1381 = vsel %vm1365, 1, 0
      %v1382 = vsel %vm1366, 1, 0
      %v1383 = vsel %vm1367, 1, 0
      %v1384 = vsel %vm1368, 1, 0
      %v1385 = vsel %vm1369, 1, 0
      %v1386 = vsel %vm1370, 1, 0
      %v1387 = vsel %vm1371, 1, 0
      %v1388 = vsel %vm1372, 1, 0
      %1389 = vset.pattern.permute.xlu0 0
      %1390 = vperm.xlu0 %1389, %v1373
      %v1391 = vpop.permute.xlu0 %1390
      %1392 = vset.pattern.permute.xlu0 0
      %1393 = vperm.xlu0 %1392, %v1374
      %v1394 = vpop.permute.xlu0 %1393
      %1395 = vset.pattern.permute.xlu0 0
      %1396 = vperm.xlu0 %1395, %v1375
      %v1397 = vpop.permute.xlu0 %1396
      %1398 = vset.pattern.permute.xlu0 0
      %1399 = vperm.xlu0 %1398, %v1376
      %v1400 = vpop.permute.xlu0 %1399
      %1401 = vset.pattern.permute.xlu0 0
      %1402 = vperm.xlu0 %1401, %v1377
      %v1403 = vpop.permute.xlu0 %1402
      %1404 = vset.pattern.permute.xlu0 0
      %1405 = vperm.xlu0 %1404, %v1378
      %v1406 = vpop.permute.xlu0 %1405
      %1407 = vset.pattern.permute.xlu0 0
      %1408 = vperm.xlu0 %1407, %v1379
      %v1409 = vpop.permute.xlu0 %1408
      %1410 = vset.pattern.permute.xlu0 0
      %1411 = vperm.xlu0 %1410, %v1380
      %v1412 = vpop.permute.xlu0 %1411
      %1413 = vset.pattern.permute.xlu0 0
      %1414 = vperm.xlu0 %1413, %v1381
      %v1415 = vpop.permute.xlu0 %1414
      %1416 = vset.pattern.permute.xlu0 0
      %1417 = vperm.xlu0 %1416, %v1382
      %v1418 = vpop.permute.xlu0 %1417
      %1419 = vset.pattern.permute.xlu0 0
      %1420 = vperm.xlu0 %1419, %v1383
      %v1421 = vpop.permute.xlu0 %1420
      %1422 = vset.pattern.permute.xlu0 0
      %1423 = vperm.xlu0 %1422, %v1384
      %v1424 = vpop.permute.xlu0 %1423
      %1425 = vset.pattern.permute.xlu0 0
      %1426 = vperm.xlu0 %1425, %v1385
      %v1427 = vpop.permute.xlu0 %1426
      %1428 = vset.pattern.permute.xlu0 0
      %1429 = vperm.xlu0 %1428, %v1386
      %v1430 = vpop.permute.xlu0 %1429
      %1431 = vset.pattern.permute.xlu0 0
      %1432 = vperm.xlu0 %1431, %v1387
      %v1433 = vpop.permute.xlu0 %1432
      %1434 = vset.pattern.permute.xlu0 0
      %1435 = vperm.xlu0 %1434, %v1388
      %v1436 = vpop.permute.xlu0 %1435
      %vm1437 = vcmp.eq.s32.totalorder %v1391, 1
      %vm1438 = vcmp.eq.s32.totalorder %v1394, 1
      %vm1439 = vcmp.eq.s32.totalorder %v1397, 1
      %vm1440 = vcmp.eq.s32.totalorder %v1400, 1
      %vm1441 = vcmp.eq.s32.totalorder %v1403, 1
      %vm1442 = vcmp.eq.s32.totalorder %v1406, 1
      %vm1443 = vcmp.eq.s32.totalorder %v1409, 1
      %vm1444 = vcmp.eq.s32.totalorder %v1412, 1
      %vm1445 = vcmp.eq.s32.totalorder %v1415, 1
      %vm1446 = vcmp.eq.s32.totalorder %v1418, 1
      %vm1447 = vcmp.eq.s32.totalorder %v1421, 1
      %vm1448 = vcmp.eq.s32.totalorder %v1424, 1
      %vm1449 = vcmp.eq.s32.totalorder %v1427, 1
      %vm1450 = vcmp.eq.s32.totalorder %v1430, 1
      %vm1451 = vcmp.eq.s32.totalorder %v1433, 1
      %vm1452 = vcmp.eq.s32.totalorder %v1436, 1
      %v1453 = vsel %vm1437, %v1325, -1e+30
      %v1454 = vsel %vm1438, %v1326, -1e+30
      %v1455 = vsel %vm1439, %v1327, -1e+30
      %v1456 = vsel %vm1440, %v1328, -1e+30
      %v1457 = vsel %vm1441, %v1329, -1e+30
      %v1458 = vsel %vm1442, %v1330, -1e+30
      %v1459 = vsel %vm1443, %v1331, -1e+30
      %v1460 = vsel %vm1444, %v1332, -1e+30
      %v1461 = vsel %vm1445, %v1333, -1e+30
      %v1462 = vsel %vm1446, %v1334, -1e+30
      %v1463 = vsel %vm1447, %v1335, -1e+30
      %v1464 = vsel %vm1448, %v1336, -1e+30
      %v1465 = vsel %vm1449, %v1337, -1e+30
      %v1466 = vsel %vm1450, %v1338, -1e+30
      %v1467 = vsel %vm1451, %v1339, -1e+30
      %v1468 = vsel %vm1452, %v1340, -1e+30
      %v1469 = vmax.f32 %v1020, %v1453
      %v1470 = vmax.f32 %v1021, %v1454
      %v1471 = vmax.f32 %v1022, %v1455
      %v1472 = vmax.f32 %v1023, %v1456
      %v1473 = vmax.f32 %v1024, %v1457
      %v1474 = vmax.f32 %v1025, %v1458
      %v1475 = vmax.f32 %v1026, %v1459
      %v1476 = vmax.f32 %v1027, %v1460
      %v1477 = vmax.f32 %v1028, %v1461
      %v1478 = vmax.f32 %v1029, %v1462
      %v1479 = vmax.f32 %v1030, %v1463
      %v1480 = vmax.f32 %v1031, %v1464
      %v1481 = vmax.f32 %v1032, %v1465
      %v1482 = vmax.f32 %v1033, %v1466
      %v1483 = vmax.f32 %v1034, %v1467
      %v1484 = vmax.f32 %v1035, %v1468
      %1485 = vset.pattern.permute.xlu0 2
      %1486 = vperm.xlu0 %1485, %v424
      %v1487 = vpop.permute.xlu0 %1486
      %1488 = vset.pattern.permute.xlu0 2
      %1489 = vperm.xlu0 %1488, %v425
      %v1490 = vpop.permute.xlu0 %1489
      %1491 = vset.pattern.permute.xlu0 2
      %1492 = vperm.xlu0 %1491, %v426
      %v1493 = vpop.permute.xlu0 %1492
      %1494 = vset.pattern.permute.xlu0 2
      %1495 = vperm.xlu0 %1494, %v427
      %v1496 = vpop.permute.xlu0 %1495
      %1497 = vset.pattern.permute.xlu0 2
      %1498 = vperm.xlu0 %1497, %v428
      %v1499 = vpop.permute.xlu0 %1498
      %1500 = vset.pattern.permute.xlu0 2
      %1501 = vperm.xlu0 %1500, %v429
      %v1502 = vpop.permute.xlu0 %1501
      %1503 = vset.pattern.permute.xlu0 2
      %1504 = vperm.xlu0 %1503, %v430
      %v1505 = vpop.permute.xlu0 %1504
      %1506 = vset.pattern.permute.xlu0 2
      %1507 = vperm.xlu0 %1506, %v431
      %v1508 = vpop.permute.xlu0 %1507
      %1509 = vset.pattern.permute.xlu0 2
      %1510 = vperm.xlu0 %1509, %v432
      %v1511 = vpop.permute.xlu0 %1510
      %1512 = vset.pattern.permute.xlu0 2
      %1513 = vperm.xlu0 %1512, %v433
      %v1514 = vpop.permute.xlu0 %1513
      %1515 = vset.pattern.permute.xlu0 2
      %1516 = vperm.xlu0 %1515, %v434
      %v1517 = vpop.permute.xlu0 %1516
      %1518 = vset.pattern.permute.xlu0 2
      %1519 = vperm.xlu0 %1518, %v435
      %v1520 = vpop.permute.xlu0 %1519
      %1521 = vset.pattern.permute.xlu0 2
      %1522 = vperm.xlu0 %1521, %v436
      %v1523 = vpop.permute.xlu0 %1522
      %1524 = vset.pattern.permute.xlu0 2
      %1525 = vperm.xlu0 %1524, %v437
      %v1526 = vpop.permute.xlu0 %1525
      %1527 = vset.pattern.permute.xlu0 2
      %1528 = vperm.xlu0 %1527, %v438
      %v1529 = vpop.permute.xlu0 %1528
      %1530 = vset.pattern.permute.xlu0 2
      %1531 = vperm.xlu0 %1530, %v439
      %v1532 = vpop.permute.xlu0 %1531
      %vm1533 = vcmp.eq.s32.totalorder %v473, %v1487
      %vm1534 = vcmp.eq.s32.totalorder %v474, %v1487
      %vm1535 = vcmp.eq.s32.totalorder %v473, %v1490
      %vm1536 = vcmp.eq.s32.totalorder %v474, %v1490
      %vm1537 = vcmp.eq.s32.totalorder %v473, %v1493
      %vm1538 = vcmp.eq.s32.totalorder %v474, %v1493
      %vm1539 = vcmp.eq.s32.totalorder %v473, %v1496
      %vm1540 = vcmp.eq.s32.totalorder %v474, %v1496
      %vm1541 = vcmp.eq.s32.totalorder %v473, %v1499
      %vm1542 = vcmp.eq.s32.totalorder %v474, %v1499
      %vm1543 = vcmp.eq.s32.totalorder %v473, %v1502
      %vm1544 = vcmp.eq.s32.totalorder %v474, %v1502
      %vm1545 = vcmp.eq.s32.totalorder %v473, %v1505
      %vm1546 = vcmp.eq.s32.totalorder %v474, %v1505
      %vm1547 = vcmp.eq.s32.totalorder %v473, %v1508
      %vm1548 = vcmp.eq.s32.totalorder %v474, %v1508
      %vm1549 = vcmp.eq.s32.totalorder %v473, %v1511
      %vm1550 = vcmp.eq.s32.totalorder %v474, %v1511
      %vm1551 = vcmp.eq.s32.totalorder %v473, %v1514
      %vm1552 = vcmp.eq.s32.totalorder %v474, %v1514
      %vm1553 = vcmp.eq.s32.totalorder %v473, %v1517
      %vm1554 = vcmp.eq.s32.totalorder %v474, %v1517
      %vm1555 = vcmp.eq.s32.totalorder %v473, %v1520
      %vm1556 = vcmp.eq.s32.totalorder %v474, %v1520
      %vm1557 = vcmp.eq.s32.totalorder %v473, %v1523
      %vm1558 = vcmp.eq.s32.totalorder %v474, %v1523
      %vm1559 = vcmp.eq.s32.totalorder %v473, %v1526
      %vm1560 = vcmp.eq.s32.totalorder %v474, %v1526
      %vm1561 = vcmp.eq.s32.totalorder %v473, %v1529
      %vm1562 = vcmp.eq.s32.totalorder %v474, %v1529
      %vm1563 = vcmp.eq.s32.totalorder %v473, %v1532
      %vm1564 = vcmp.eq.s32.totalorder %v474, %v1532
      %v1565 = vsel %vm1533, 1.0, 0.0
      %v1566 = vsel %vm1534, 1.0, 0.0
      %v1567 = vsel %vm1535, 1.0, 0.0
      %v1568 = vsel %vm1536, 1.0, 0.0
      %v1569 = vsel %vm1537, 1.0, 0.0
      %v1570 = vsel %vm1538, 1.0, 0.0
      %v1571 = vsel %vm1539, 1.0, 0.0
      %v1572 = vsel %vm1540, 1.0, 0.0
      %v1573 = vsel %vm1541, 1.0, 0.0
      %v1574 = vsel %vm1542, 1.0, 0.0
      %v1575 = vsel %vm1543, 1.0, 0.0
      %v1576 = vsel %vm1544, 1.0, 0.0
      %v1577 = vsel %vm1545, 1.0, 0.0
      %v1578 = vsel %vm1546, 1.0, 0.0
      %v1579 = vsel %vm1547, 1.0, 0.0
      %v1580 = vsel %vm1548, 1.0, 0.0
      %v1581 = vsel %vm1549, 1.0, 0.0
      %v1582 = vsel %vm1550, 1.0, 0.0
      %v1583 = vsel %vm1551, 1.0, 0.0
      %v1584 = vsel %vm1552, 1.0, 0.0
      %v1585 = vsel %vm1553, 1.0, 0.0
      %v1586 = vsel %vm1554, 1.0, 0.0
      %v1587 = vsel %vm1555, 1.0, 0.0
      %v1588 = vsel %vm1556, 1.0, 0.0
      %v1589 = vsel %vm1557, 1.0, 0.0
      %v1590 = vsel %vm1558, 1.0, 0.0
      %v1591 = vsel %vm1559, 1.0, 0.0
      %v1592 = vsel %vm1560, 1.0, 0.0
      %v1593 = vsel %vm1561, 1.0, 0.0
      %v1594 = vsel %vm1562, 1.0, 0.0
      %v1595 = vsel %vm1563, 1.0, 0.0
      %v1596 = vsel %vm1564, 1.0, 0.0
      %v1597 = vpack.c.bf16 %v1567, %v1565
      %v1598 = vpack.c.bf16 %v1568, %v1566
      %v1599 = vpack.c.bf16 %v1571, %v1569
      %v1600 = vpack.c.bf16 %v1572, %v1570
      %v1601 = vpack.c.bf16 %v1575, %v1573
      %v1602 = vpack.c.bf16 %v1576, %v1574
      %v1603 = vpack.c.bf16 %v1579, %v1577
      %v1604 = vpack.c.bf16 %v1580, %v1578
      %v1605 = vpack.c.bf16 %v1583, %v1581
      %v1606 = vpack.c.bf16 %v1584, %v1582
      %v1607 = vpack.c.bf16 %v1587, %v1585
      %v1608 = vpack.c.bf16 %v1588, %v1586
      %v1609 = vpack.c.bf16 %v1591, %v1589
      %v1610 = vpack.c.bf16 %v1592, %v1590
      %v1611 = vpack.c.bf16 %v1595, %v1593
      %v1612 = vpack.c.bf16 %v1596, %v1594
      %1613 = vmatprep.subr.bf16.mxu0 0
      %1614 = vmatpush1.bf16.msra.mxu0 %v674
      %1615 = vmatprep.subr.bf16.mxu0 0
      %1616 = vmatpush1.bf16.msra.mxu0 %v673
      %1617 = vmatprep.subr.bf16.mxu0 0
      %1618 = vmatpush1.bf16.msra.mxu0 %v672
      %1619 = vmatprep.subr.bf16.mxu0 0
      %1620 = vmatpush1.bf16.msra.mxu0 %v671
      %1621 = vmatprep.subr.bf16.mxu0 0
      %1622 = vmatpush1.bf16.msra.mxu0 %v670
      %1623 = vmatprep.subr.bf16.mxu0 0
      %1624 = vmatpush1.bf16.msra.mxu0 %v669
      %1625 = vmatprep.subr.bf16.mxu0 0
      %1626 = vmatpush1.bf16.msra.mxu0 %v668
      %1627 = vmatprep.subr.bf16.mxu0 0
      %1628 = vmatpush1.bf16.msra.mxu0 %v667
      %1629 = vmatprep.subr.bf16.mxu0 0
      %1630 = vmatpush2.bf16.msra.mxu0 %v682
      %1631 = vmatprep.subr.bf16.mxu0 0
      %1632 = vmatpush2.bf16.msra.mxu0 %v681
      %1633 = vmatprep.subr.bf16.mxu0 0
      %1634 = vmatpush2.bf16.msra.mxu0 %v680
      %1635 = vmatprep.subr.bf16.mxu0 0
      %1636 = vmatpush2.bf16.msra.mxu0 %v679
      %1637 = vmatprep.subr.bf16.mxu0 0
      %1638 = vmatpush2.bf16.msra.mxu0 %v678
      %1639 = vmatprep.subr.bf16.mxu0 0
      %1640 = vmatpush2.bf16.msra.mxu0 %v677
      %1641 = vmatprep.subr.bf16.mxu0 0
      %1642 = vmatpush2.bf16.msra.mxu0 %v676
      %1643 = vmatprep.subr.bf16.mxu0 0
      %1644 = vmatpush2.bf16.msra.mxu0 %v675
      %1645 = vmatprep.mubr.bf16.mxu0 %v1598
      %1646 = vmatmul.mubr.bf16.gmra.mxu0 %v1597
      %v1647 = vpop.f32.mrf.mxu0
      %v1648 = vadd.f32 0.0, %v1647
      %v1649 = vpop.f32.mrf.mxu0
      %v1650 = vpop.f32.mrf.mxu0
      %v1651 = vadd.f32 0.0, %v1650
      %v1652 = vpop.f32.mrf.mxu0
      %1653 = vmatprep.mubr.bf16.mxu0 %v1600
      %1654 = vmatmul.mubr.bf16.gmra.mxu0 %v1599
      %v1655 = vpop.f32.mrf.mxu0
      %v1656 = vadd.f32 0.0, %v1655
      %v1657 = vpop.f32.mrf.mxu0
      %v1658 = vpop.f32.mrf.mxu0
      %v1659 = vadd.f32 0.0, %v1658
      %v1660 = vpop.f32.mrf.mxu0
      %1661 = vmatprep.mubr.bf16.mxu0 %v1602
      %1662 = vmatmul.mubr.bf16.gmra.mxu0 %v1601
      %v1663 = vpop.f32.mrf.mxu0
      %v1664 = vadd.f32 0.0, %v1663
      %v1665 = vpop.f32.mrf.mxu0
      %v1666 = vpop.f32.mrf.mxu0
      %v1667 = vadd.f32 0.0, %v1666
      %v1668 = vpop.f32.mrf.mxu0
      %1669 = vmatprep.mubr.bf16.mxu0 %v1604
      %1670 = vmatmul.mubr.bf16.gmra.mxu0 %v1603
      %v1671 = vpop.f32.mrf.mxu0
      %v1672 = vadd.f32 0.0, %v1671
      %v1673 = vpop.f32.mrf.mxu0
      %v1674 = vpop.f32.mrf.mxu0
      %v1675 = vadd.f32 0.0, %v1674
      %v1676 = vpop.f32.mrf.mxu0
      %1677 = vmatprep.mubr.bf16.mxu0 %v1606
      %1678 = vmatmul.mubr.bf16.gmra.mxu0 %v1605
      %v1679 = vpop.f32.mrf.mxu0
      %v1680 = vadd.f32 0.0, %v1679
      %v1681 = vpop.f32.mrf.mxu0
      %v1682 = vpop.f32.mrf.mxu0
      %v1683 = vadd.f32 0.0, %v1682
      %v1684 = vpop.f32.mrf.mxu0
      %1685 = vmatprep.mubr.bf16.mxu0 %v1608
      %1686 = vmatmul.mubr.bf16.gmra.mxu0 %v1607
      %v1687 = vpop.f32.mrf.mxu0
      %v1688 = vadd.f32 0.0, %v1687
      %v1689 = vpop.f32.mrf.mxu0
      %v1690 = vpop.f32.mrf.mxu0
      %v1691 = vadd.f32 0.0, %v1690
      %v1692 = vpop.f32.mrf.mxu0
      %1693 = vmatprep.mubr.bf16.mxu0 %v1610
      %1694 = vmatmul.mubr.bf16.gmra.mxu0 %v1609
      %v1695 = vpop.f32.mrf.mxu0
      %v1696 = vadd.f32 0.0, %v1695
      %v1697 = vpop.f32.mrf.mxu0
      %v1698 = vpop.f32.mrf.mxu0
      %v1699 = vadd.f32 0.0, %v1698
      %v1700 = vpop.f32.mrf.mxu0
      %1701 = vmatprep.mubr.bf16.mxu0 %v1612
      %1702 = vmatmul.mubr.bf16.gmra.mxu0 %v1611
      %v1703 = vpop.f32.mrf.mxu0
      %v1704 = vadd.f32 0.0, %v1703
      %v1705 = vpop.f32.mrf.mxu0
      %v1706 = vpop.f32.mrf.mxu0
      %v1707 = vadd.f32 0.0, %v1706
      %v1708 = vpop.f32.mrf.mxu0
      %1709 = vdwg.mxu0
      %1710 = vset.pattern.permute.xlu0 2
      %1711 = vperm.xlu0 %1710, %v440
      %v1712 = vpop.permute.xlu0 %1711
      %1714 = vset.pattern.permute.xlu0 2
      %1715 = vperm.xlu0 %1714, %v441
      %v1716 = vpop.permute.xlu0 %1715
      %1718 = vset.pattern.permute.xlu0 2
      %1719 = vperm.xlu0 %1718, %v442
      %v1720 = vpop.permute.xlu0 %1719
      %1722 = vset.pattern.permute.xlu0 2
      %1723 = vperm.xlu0 %1722, %v443
      %v1724 = vpop.permute.xlu0 %1723
      %1726 = vset.pattern.permute.xlu0 2
      %1727 = vperm.xlu0 %1726, %v444
      %v1728 = vpop.permute.xlu0 %1727
      %1730 = vset.pattern.permute.xlu0 2
      %1731 = vperm.xlu0 %1730, %v445
      %v1732 = vpop.permute.xlu0 %1731
      %1734 = vset.pattern.permute.xlu0 2
      %1735 = vperm.xlu0 %1734, %v446
      %v1736 = vpop.permute.xlu0 %1735
      %1738 = vset.pattern.permute.xlu0 2
      %1739 = vperm.xlu0 %1738, %v447
      %v1740 = vpop.permute.xlu0 %1739
      %1742 = vset.pattern.permute.xlu0 2
      %1743 = vperm.xlu0 %1742, %v448
      %v1744 = vpop.permute.xlu0 %1743
      %1746 = vset.pattern.permute.xlu0 2
      %1747 = vperm.xlu0 %1746, %v449
      %v1748 = vpop.permute.xlu0 %1747
      %1750 = vset.pattern.permute.xlu0 2
      %1751 = vperm.xlu0 %1750, %v450
      %v1752 = vpop.permute.xlu0 %1751
      %1754 = vset.pattern.permute.xlu0 2
      %1755 = vperm.xlu0 %1754, %v451
      %v1756 = vpop.permute.xlu0 %1755
      %1758 = vset.pattern.permute.xlu0 2
      %1759 = vperm.xlu0 %1758, %v452
      %v1760 = vpop.permute.xlu0 %1759
      %1762 = vset.pattern.permute.xlu0 2
      %1763 = vperm.xlu0 %1762, %v453
      %v1764 = vpop.permute.xlu0 %1763
      %1766 = vset.pattern.permute.xlu0 2
      %1767 = vperm.xlu0 %1766, %v454
      %v1768 = vpop.permute.xlu0 %1767
      %1770 = vset.pattern.permute.xlu0 2
      %1771 = vperm.xlu0 %1770, %v455
      %v1772 = vpop.permute.xlu0 %1771
      %v1774 = vmul.f32 %v1648, %v1712
      %v1775 = vmul.f32 %v1651, %v1716
      %v1776 = vmul.f32 %v1656, %v1720
      %v1777 = vmul.f32 %v1659, %v1724
      %v1778 = vmul.f32 %v1664, %v1728
      %v1779 = vmul.f32 %v1667, %v1732
      %v1780 = vmul.f32 %v1672, %v1736
      %v1781 = vmul.f32 %v1675, %v1740
      %v1782 = vmul.f32 %v1680, %v1744
      %v1783 = vmul.f32 %v1683, %v1748
      %v1784 = vmul.f32 %v1688, %v1752
      %v1785 = vmul.f32 %v1691, %v1756
      %v1786 = vmul.f32 %v1696, %v1760
      %v1787 = vmul.f32 %v1699, %v1764
      %v1788 = vmul.f32 %v1704, %v1768
      %v1789 = vmul.f32 %v1707, %v1772
      %v1790 = vadd.f32 %v1341, %v1774
      %v1791 = vadd.f32 %v1342, %v1775
      %v1792 = vadd.f32 %v1343, %v1776
      %v1793 = vadd.f32 %v1344, %v1777
      %v1794 = vadd.f32 %v1345, %v1778
      %v1795 = vadd.f32 %v1346, %v1779
      %v1796 = vadd.f32 %v1347, %v1780
      %v1797 = vadd.f32 %v1348, %v1781
      %v1798 = vadd.f32 %v1349, %v1782
      %v1799 = vadd.f32 %v1350, %v1783
      %v1800 = vadd.f32 %v1351, %v1784
      %v1801 = vadd.f32 %v1352, %v1785
      %v1802 = vadd.f32 %v1353, %v1786
      %v1803 = vadd.f32 %v1354, %v1787
      %v1804 = vadd.f32 %v1355, %v1788
      %v1805 = vadd.f32 %v1356, %v1789
      %vm1806 = vcmp.gt.s32.totalorder %v456, 2
      %vm1807 = vcmp.gt.s32.totalorder %v457, 2
      %vm1808 = vcmp.gt.s32.totalorder %v458, 2
      %vm1809 = vcmp.gt.s32.totalorder %v459, 2
      %vm1810 = vcmp.gt.s32.totalorder %v460, 2
      %vm1811 = vcmp.gt.s32.totalorder %v461, 2
      %vm1812 = vcmp.gt.s32.totalorder %v462, 2
      %vm1813 = vcmp.gt.s32.totalorder %v463, 2
      %vm1814 = vcmp.gt.s32.totalorder %v464, 2
      %vm1815 = vcmp.gt.s32.totalorder %v465, 2
      %vm1816 = vcmp.gt.s32.totalorder %v466, 2
      %vm1817 = vcmp.gt.s32.totalorder %v467, 2
      %vm1818 = vcmp.gt.s32.totalorder %v468, 2
      %vm1819 = vcmp.gt.s32.totalorder %v469, 2
      %vm1820 = vcmp.gt.s32.totalorder %v470, 2
      %vm1821 = vcmp.gt.s32.totalorder %v471, 2
      %v1822 = vsel %vm1806, 1, 0
      %v1823 = vsel %vm1807, 1, 0
      %v1824 = vsel %vm1808, 1, 0
      %v1825 = vsel %vm1809, 1, 0
      %v1826 = vsel %vm1810, 1, 0
      %v1827 = vsel %vm1811, 1, 0
      %v1828 = vsel %vm1812, 1, 0
      %v1829 = vsel %vm1813, 1, 0
      %v1830 = vsel %vm1814, 1, 0
      %v1831 = vsel %vm1815, 1, 0
      %v1832 = vsel %vm1816, 1, 0
      %v1833 = vsel %vm1817, 1, 0
      %v1834 = vsel %vm1818, 1, 0
      %v1835 = vsel %vm1819, 1, 0
      %v1836 = vsel %vm1820, 1, 0
      %v1837 = vsel %vm1821, 1, 0
      %1838 = vset.pattern.permute.xlu0 0
      %1839 = vperm.xlu0 %1838, %v1822
      %v1840 = vpop.permute.xlu0 %1839
      %1841 = vset.pattern.permute.xlu0 0
      %1842 = vperm.xlu0 %1841, %v1823
      %v1843 = vpop.permute.xlu0 %1842
      %1844 = vset.pattern.permute.xlu0 0
      %1845 = vperm.xlu0 %1844, %v1824
      %v1846 = vpop.permute.xlu0 %1845
      %1847 = vset.pattern.permute.xlu0 0
      %1848 = vperm.xlu0 %1847, %v1825
      %v1849 = vpop.permute.xlu0 %1848
      %1850 = vset.pattern.permute.xlu0 0
      %1851 = vperm.xlu0 %1850, %v1826
      %v1852 = vpop.permute.xlu0 %1851
      %1853 = vset.pattern.permute.xlu0 0
      %1854 = vperm.xlu0 %1853, %v1827
      %v1855 = vpop.permute.xlu0 %1854
      %1856 = vset.pattern.permute.xlu0 0
      %1857 = vperm.xlu0 %1856, %v1828
      %v1858 = vpop.permute.xlu0 %1857
      %1859 = vset.pattern.permute.xlu0 0
      %1860 = vperm.xlu0 %1859, %v1829
      %v1861 = vpop.permute.xlu0 %1860
      %1862 = vset.pattern.permute.xlu0 0
      %1863 = vperm.xlu0 %1862, %v1830
      %v1864 = vpop.permute.xlu0 %1863
      %1865 = vset.pattern.permute.xlu0 0
      %1866 = vperm.xlu0 %1865, %v1831
      %v1867 = vpop.permute.xlu0 %1866
      %1868 = vset.pattern.permute.xlu0 0
      %1869 = vperm.xlu0 %1868, %v1832
      %v1870 = vpop.permute.xlu0 %1869
      %1871 = vset.pattern.permute.xlu0 0
      %1872 = vperm.xlu0 %1871, %v1833
      %v1873 = vpop.permute.xlu0 %1872
      %1874 = vset.pattern.permute.xlu0 0
      %1875 = vperm.xlu0 %1874, %v1834
      %v1876 = vpop.permute.xlu0 %1875
      %1877 = vset.pattern.permute.xlu0 0
      %1878 = vperm.xlu0 %1877, %v1835
      %v1879 = vpop.permute.xlu0 %1878
      %1880 = vset.pattern.permute.xlu0 0
      %1881 = vperm.xlu0 %1880, %v1836
      %v1882 = vpop.permute.xlu0 %1881
      %1883 = vset.pattern.permute.xlu0 0
      %1884 = vperm.xlu0 %1883, %v1837
      %v1885 = vpop.permute.xlu0 %1884
      %vm1886 = vcmp.eq.s32.totalorder %v1840, 1
      %vm1887 = vcmp.eq.s32.totalorder %v1843, 1
      %vm1888 = vcmp.eq.s32.totalorder %v1846, 1
      %vm1889 = vcmp.eq.s32.totalorder %v1849, 1
      %vm1890 = vcmp.eq.s32.totalorder %v1852, 1
      %vm1891 = vcmp.eq.s32.totalorder %v1855, 1
      %vm1892 = vcmp.eq.s32.totalorder %v1858, 1
      %vm1893 = vcmp.eq.s32.totalorder %v1861, 1
      %vm1894 = vcmp.eq.s32.totalorder %v1864, 1
      %vm1895 = vcmp.eq.s32.totalorder %v1867, 1
      %vm1896 = vcmp.eq.s32.totalorder %v1870, 1
      %vm1897 = vcmp.eq.s32.totalorder %v1873, 1
      %vm1898 = vcmp.eq.s32.totalorder %v1876, 1
      %vm1899 = vcmp.eq.s32.totalorder %v1879, 1
      %vm1900 = vcmp.eq.s32.totalorder %v1882, 1
      %vm1901 = vcmp.eq.s32.totalorder %v1885, 1
      %v1902 = vsel %vm1886, %v1774, -1e+30
      %v1903 = vsel %vm1887, %v1775, -1e+30
      %v1904 = vsel %vm1888, %v1776, -1e+30
      %v1905 = vsel %vm1889, %v1777, -1e+30
      %v1906 = vsel %vm1890, %v1778, -1e+30
      %v1907 = vsel %vm1891, %v1779, -1e+30
      %v1908 = vsel %vm1892, %v1780, -1e+30
      %v1909 = vsel %vm1893, %v1781, -1e+30
      %v1910 = vsel %vm1894, %v1782, -1e+30
      %v1911 = vsel %vm1895, %v1783, -1e+30
      %v1912 = vsel %vm1896, %v1784, -1e+30
      %v1913 = vsel %vm1897, %v1785, -1e+30
      %v1914 = vsel %vm1898, %v1786, -1e+30
      %v1915 = vsel %vm1899, %v1787, -1e+30
      %v1916 = vsel %vm1900, %v1788, -1e+30
      %v1917 = vsel %vm1901, %v1789, -1e+30
      %v1918 = vmax.f32 %v1469, %v1902
      %v1919 = vmax.f32 %v1470, %v1903
      %v1920 = vmax.f32 %v1471, %v1904
      %v1921 = vmax.f32 %v1472, %v1905
      %v1922 = vmax.f32 %v1473, %v1906
      %v1923 = vmax.f32 %v1474, %v1907
      %v1924 = vmax.f32 %v1475, %v1908
      %v1925 = vmax.f32 %v1476, %v1909
      %v1926 = vmax.f32 %v1477, %v1910
      %v1927 = vmax.f32 %v1478, %v1911
      %v1928 = vmax.f32 %v1479, %v1912
      %v1929 = vmax.f32 %v1480, %v1913
      %v1930 = vmax.f32 %v1481, %v1914
      %v1931 = vmax.f32 %v1482, %v1915
      %v1932 = vmax.f32 %v1483, %v1916
      %v1933 = vmax.f32 %v1484, %v1917
      %vm1934 = vcmp.lt.f32.partialorder %v1918, -1e+29
      %vm1935 = vcmp.lt.f32.partialorder %v1919, -1e+29
      %vm1936 = vcmp.lt.f32.partialorder %v1920, -1e+29
      %vm1937 = vcmp.lt.f32.partialorder %v1921, -1e+29
      %vm1938 = vcmp.lt.f32.partialorder %v1922, -1e+29
      %vm1939 = vcmp.lt.f32.partialorder %v1923, -1e+29
      %vm1940 = vcmp.lt.f32.partialorder %v1924, -1e+29
      %vm1941 = vcmp.lt.f32.partialorder %v1925, -1e+29
      %vm1942 = vcmp.lt.f32.partialorder %v1926, -1e+29
      %vm1943 = vcmp.lt.f32.partialorder %v1927, -1e+29
      %vm1944 = vcmp.lt.f32.partialorder %v1928, -1e+29
      %vm1945 = vcmp.lt.f32.partialorder %v1929, -1e+29
      %vm1946 = vcmp.lt.f32.partialorder %v1930, -1e+29
      %vm1947 = vcmp.lt.f32.partialorder %v1931, -1e+29
      %vm1948 = vcmp.lt.f32.partialorder %v1932, -1e+29
      %vm1949 = vcmp.lt.f32.partialorder %v1933, -1e+29
      %v1950 = vsel %vm1934, 0.0, %v1918
      %v1951 = vsel %vm1935, 0.0, %v1919
      %v1952 = vsel %vm1936, 0.0, %v1920
      %v1953 = vsel %vm1937, 0.0, %v1921
      %v1954 = vsel %vm1938, 0.0, %v1922
      %v1955 = vsel %vm1939, 0.0, %v1923
      %v1956 = vsel %vm1940, 0.0, %v1924
      %v1957 = vsel %vm1941, 0.0, %v1925
      %v1958 = vsel %vm1942, 0.0, %v1926
      %v1959 = vsel %vm1943, 0.0, %v1927
      %v1960 = vsel %vm1944, 0.0, %v1928
      %v1961 = vsel %vm1945, 0.0, %v1929
      %v1962 = vsel %vm1946, 0.0, %v1930
      %v1963 = vsel %vm1947, 0.0, %v1931
      %v1964 = vsel %vm1948, 0.0, %v1932
      %v1965 = vsel %vm1949, 0.0, %v1933
      %v1966 = vpack.c.bf16 %v1791, %v1790
      %v1967 = vpack.c.bf16 %v1951, %v1950
      %v1968 = vpack.c.bf16 %v1793, %v1792
      %v1969 = vpack.c.bf16 %v1953, %v1952
      %v1970 = vpack.c.bf16 %v1795, %v1794
      %v1971 = vpack.c.bf16 %v1955, %v1954
      %v1972 = vpack.c.bf16 %v1797, %v1796
      %v1973 = vpack.c.bf16 %v1957, %v1956
      %v1974 = vpack.c.bf16 %v1799, %v1798
      %v1975 = vpack.c.bf16 %v1959, %v1958
      %v1976 = vpack.c.bf16 %v1801, %v1800
      %v1977 = vpack.c.bf16 %v1961, %v1960
      %v1978 = vpack.c.bf16 %v1803, %v1802
      %v1979 = vpack.c.bf16 %v1963, %v1962
      %v1980 = vpack.c.bf16 %v1805, %v1804
      %v1981 = vpack.c.bf16 %v1965, %v1964
      %v1982 = vld [vmem:[%s4] sm:$0xf]
      %v1983 = vld [vmem:[%s4 + $0x4] sm:$0xf]
      %v1984 = vld [vmem:[%s4 + $0x8] sm:$0xf]
      %v1985 = vld [vmem:[%s4 + $0xc] sm:$0xf]
      %v1986 = vld [vmem:[%s4 + $0x10] sm:$0xf]
      %v1987 = vld [vmem:[%s4 + $0x14] sm:$0xf]
      %v1988 = vld [vmem:[%s4 + $0x18] sm:$0xf]
      %v1989 = vld [vmem:[%s4 + $0x1c] sm:$0xf]
      %v1990 = vld [vmem:[%s4 + $0x20] sm:$0xf]
      %v1991 = vld [vmem:[%s4 + $0x24] sm:$0xf]
      %v1992 = vld [vmem:[%s4 + $0x28] sm:$0xf]
      %v1993 = vld [vmem:[%s4 + $0x2c] sm:$0xf]
      %v1994 = vld [vmem:[%s4 + $0x30] sm:$0xf]
      %v1995 = vld [vmem:[%s4 + $0x34] sm:$0xf]
      %v1996 = vld [vmem:[%s4 + $0x38] sm:$0xf]
      %v1997 = vld [vmem:[%s4 + $0x3c] sm:$0xf]
      %v1998 = vld [vmem:[%s4 + $0x40] sm:$0xf]
      %v1999 = vld [vmem:[%s4 + $0x44] sm:$0xf]
      %v2000 = vld [vmem:[%s4 + $0x48] sm:$0xf]
      %v2001 = vld [vmem:[%s4 + $0x4c] sm:$0xf]
      %v2002 = vld [vmem:[%s4 + $0x50] sm:$0xf]
      %v2003 = vld [vmem:[%s4 + $0x54] sm:$0xf]
      %v2004 = vld [vmem:[%s4 + $0x58] sm:$0xf]
      %v2005 = vld [vmem:[%s4 + $0x5c] sm:$0xf]
      %v2006 = vld [vmem:[%s4 + $0x60] sm:$0xf]
      %v2007 = vld [vmem:[%s4 + $0x64] sm:$0xf]
      %v2008 = vld [vmem:[%s4 + $0x68] sm:$0xf]
      %v2009 = vld [vmem:[%s4 + $0x6c] sm:$0xf]
      %v2010 = vld [vmem:[%s4 + $0x70] sm:$0xf]
      %v2011 = vld [vmem:[%s4 + $0x74] sm:$0xf]
      %v2012 = vld [vmem:[%s4 + $0x78] sm:$0xf]
      %v2013 = vld [vmem:[%s4 + $0x7c] sm:$0xf]
      %v2014 = vld [vmem:[%s5] sm:$0x1]
      %v2016 = vlaneseq
      %v2017 = vshrl.u32 %v2016, 7
      %v2018 = vsub.s32 0, %v2017
      %v2019 = vrot.slane %v2014, %v2018
      %v2053 = vunpack.c.l.b16 %v1982
      %v2054 = vunpack.c.l.b16 %v1983
      %v2055 = vunpack.c.l.b16 %v1984
      %v2056 = vunpack.c.l.b16 %v1985
      %v2057 = vunpack.c.l.b16 %v1986
      %v2058 = vunpack.c.l.b16 %v1987
      %v2059 = vunpack.c.l.b16 %v1988
      %v2060 = vunpack.c.l.b16 %v1989
      %v2061 = vunpack.c.l.b16 %v1990
      %v2062 = vunpack.c.l.b16 %v1991
      %v2063 = vunpack.c.l.b16 %v1992
      %v2064 = vunpack.c.l.b16 %v1993
      %v2065 = vunpack.c.l.b16 %v1994
      %v2066 = vunpack.c.l.b16 %v1995
      %v2067 = vunpack.c.l.b16 %v1996
      %v2068 = vunpack.c.l.b16 %v1997
      %v2069 = vunpack.c.l.b16 %v1998
      %v2070 = vunpack.c.l.b16 %v1999
      %v2071 = vunpack.c.l.b16 %v2000
      %v2072 = vunpack.c.l.b16 %v2001
      %v2073 = vunpack.c.l.b16 %v2002
      %v2074 = vunpack.c.l.b16 %v2003
      %v2075 = vunpack.c.l.b16 %v2004
      %v2076 = vunpack.c.l.b16 %v2005
      %v2077 = vunpack.c.l.b16 %v2006
      %v2078 = vunpack.c.l.b16 %v2007
      %v2079 = vunpack.c.l.b16 %v2008
      %v2080 = vunpack.c.l.b16 %v2009
      %v2081 = vunpack.c.l.b16 %v2010
      %v2082 = vunpack.c.l.b16 %v2011
      %v2083 = vunpack.c.l.b16 %v2012
      %v2084 = vunpack.c.l.b16 %v2013
      %v2085 = vpack.c.b16 %v2054, %v2053
      %v2086 = vpack.c.b16 %v2056, %v2055
      %v2087 = vpack.c.b16 %v2058, %v2057
      %v2088 = vpack.c.b16 %v2060, %v2059
      %v2089 = vpack.c.b16 %v2062, %v2061
      %v2090 = vpack.c.b16 %v2064, %v2063
      %v2091 = vpack.c.b16 %v2066, %v2065
      %v2092 = vpack.c.b16 %v2068, %v2067
      %v2093 = vpack.c.b16 %v2070, %v2069
      %v2094 = vpack.c.b16 %v2072, %v2071
      %v2095 = vpack.c.b16 %v2074, %v2073
      %v2096 = vpack.c.b16 %v2076, %v2075
      %v2097 = vpack.c.b16 %v2078, %v2077
      %v2098 = vpack.c.b16 %v2080, %v2079
      %v2099 = vpack.c.b16 %v2082, %v2081
      %v2100 = vpack.c.b16 %v2084, %v2083
      %2117 = vmatprep.subr.bf16.mxu0 0
      %2118 = vmatpush1.bf16.msra.mxu0 %v2092
      %2119 = vmatprep.subr.bf16.mxu0 0
      %2120 = vmatpush1.bf16.msra.mxu0 %v2091
      %2121 = vmatprep.subr.bf16.mxu0 0
      %2122 = vmatpush1.bf16.msra.mxu0 %v2090
      %2123 = vmatprep.subr.bf16.mxu0 0
      %2124 = vmatpush1.bf16.msra.mxu0 %v2089
      %2125 = vmatprep.subr.bf16.mxu0 0
      %2126 = vmatpush1.bf16.msra.mxu0 %v2088
      %2127 = vmatprep.subr.bf16.mxu0 0
      %2128 = vmatpush1.bf16.msra.mxu0 %v2087
      %2129 = vmatprep.subr.bf16.mxu0 0
      %2130 = vmatpush1.bf16.msra.mxu0 %v2086
      %2131 = vmatprep.subr.bf16.mxu0 0
      %2132 = vmatpush1.bf16.msra.mxu0 %v2085
      %2133 = vmatprep.subr.bf16.mxu0 0
      %2134 = vmatpush2.bf16.msra.mxu0 %v2100
      %2135 = vmatprep.subr.bf16.mxu0 0
      %2136 = vmatpush2.bf16.msra.mxu0 %v2099
      %2137 = vmatprep.subr.bf16.mxu0 0
      %2138 = vmatpush2.bf16.msra.mxu0 %v2098
      %2139 = vmatprep.subr.bf16.mxu0 0
      %2140 = vmatpush2.bf16.msra.mxu0 %v2097
      %2141 = vmatprep.subr.bf16.mxu0 0
      %2142 = vmatpush2.bf16.msra.mxu0 %v2096
      %2143 = vmatprep.subr.bf16.mxu0 0
      %2144 = vmatpush2.bf16.msra.mxu0 %v2095
      %2145 = vmatprep.subr.bf16.mxu0 0
      %2146 = vmatpush2.bf16.msra.mxu0 %v2094
      %2147 = vmatprep.subr.bf16.mxu0 0
      %2148 = vmatpush2.bf16.msra.mxu0 %v2093
      %2149 = vmatprep.mubr.bf16.mxu0 %v1967
      %2150 = vmatmul.mubr.bf16.gmra.mxu0 %v1966
      %v2151 = vpop.f32.mrf.mxu0
      %v2152 = vadd.f32 %v2019, %v2151
      %v2153 = vpop.f32.mrf.mxu0
      %v2154 = vpop.f32.mrf.mxu0
      %v2155 = vadd.f32 %v2019, %v2154
      %v2156 = vpop.f32.mrf.mxu0
      %2157 = vmatprep.mubr.bf16.mxu0 %v1969
      %2158 = vmatmul.mubr.bf16.gmra.mxu0 %v1968
      %v2159 = vpop.f32.mrf.mxu0
      %v2160 = vadd.f32 %v2019, %v2159
      %v2161 = vpop.f32.mrf.mxu0
      %v2162 = vpop.f32.mrf.mxu0
      %v2163 = vadd.f32 %v2019, %v2162
      %v2164 = vpop.f32.mrf.mxu0
      %2165 = vmatprep.mubr.bf16.mxu0 %v1971
      %2166 = vmatmul.mubr.bf16.gmra.mxu0 %v1970
      %v2167 = vpop.f32.mrf.mxu0
      %v2168 = vadd.f32 %v2019, %v2167
      %v2169 = vpop.f32.mrf.mxu0
      %v2170 = vpop.f32.mrf.mxu0
      %v2171 = vadd.f32 %v2019, %v2170
      %v2172 = vpop.f32.mrf.mxu0
      %2173 = vmatprep.mubr.bf16.mxu0 %v1973
      %2174 = vmatmul.mubr.bf16.gmra.mxu0 %v1972
      %v2175 = vpop.f32.mrf.mxu0
      %v2176 = vadd.f32 %v2019, %v2175
      %v2177 = vpop.f32.mrf.mxu0
      %v2178 = vpop.f32.mrf.mxu0
      %v2179 = vadd.f32 %v2019, %v2178
      %v2180 = vpop.f32.mrf.mxu0
      %2181 = vmatprep.mubr.bf16.mxu0 %v1975
      %2182 = vmatmul.mubr.bf16.gmra.mxu0 %v1974
      %v2183 = vpop.f32.mrf.mxu0
      %v2184 = vadd.f32 %v2019, %v2183
      %v2185 = vpop.f32.mrf.mxu0
      %v2186 = vpop.f32.mrf.mxu0
      %v2187 = vadd.f32 %v2019, %v2186
      %v2188 = vpop.f32.mrf.mxu0
      %2189 = vmatprep.mubr.bf16.mxu0 %v1977
      %2190 = vmatmul.mubr.bf16.gmra.mxu0 %v1976
      %v2191 = vpop.f32.mrf.mxu0
      %v2192 = vadd.f32 %v2019, %v2191
      %v2193 = vpop.f32.mrf.mxu0
      %v2194 = vpop.f32.mrf.mxu0
      %v2195 = vadd.f32 %v2019, %v2194
      %v2196 = vpop.f32.mrf.mxu0
      %2197 = vmatprep.mubr.bf16.mxu0 %v1979
      %2198 = vmatmul.mubr.bf16.gmra.mxu0 %v1978
      %v2199 = vpop.f32.mrf.mxu0
      %v2200 = vadd.f32 %v2019, %v2199
      %v2201 = vpop.f32.mrf.mxu0
      %v2202 = vpop.f32.mrf.mxu0
      %v2203 = vadd.f32 %v2019, %v2202
      %v2204 = vpop.f32.mrf.mxu0
      %2205 = vmatprep.mubr.bf16.mxu0 %v1981
      %2206 = vmatmul.mubr.bf16.gmra.mxu0 %v1980
      %v2207 = vpop.f32.mrf.mxu0
      %v2208 = vadd.f32 %v2019, %v2207
      %v2209 = vpop.f32.mrf.mxu0
      %v2210 = vpop.f32.mrf.mxu0
      %v2211 = vadd.f32 %v2019, %v2210
      %v2212 = vpop.f32.mrf.mxu0
      %2213 = vdwg.mxu0
      %s2214 = smul.u32 %s21, 128
      %s2215 = sshra.s32 %s2214, 3
      %s2216 = sand.u32 %s2214, 7
      %s2217 = smul.addr %s2215, 4
      %s2218 = scalar_lea.vmem %s0, %s2217
      %v2219 = vld [vmem:[%s2218] sm:$0xf]
      %v2220 = vld [vmem:[%s2218 + $0x4] sm:$0xf]
      %v2221 = vld [vmem:[%s2218 + $0x8] sm:$0xf]
      %v2222 = vld [vmem:[%s2218 + $0xc] sm:$0xf]
      %v2223 = vld [vmem:[%s2218 + $0x10] sm:$0xf]
      %v2224 = vld [vmem:[%s2218 + $0x14] sm:$0xf]
      %v2225 = vld [vmem:[%s2218 + $0x18] sm:$0xf]
      %v2226 = vld [vmem:[%s2218 + $0x1c] sm:$0xf]
      %v2227 = vld [vmem:[%s2218 + $0x20] sm:$0xf]
      %v2228 = vld [vmem:[%s2218 + $0x24] sm:$0xf]
      %v2229 = vld [vmem:[%s2218 + $0x28] sm:$0xf]
      %v2230 = vld [vmem:[%s2218 + $0x2c] sm:$0xf]
      %v2231 = vld [vmem:[%s2218 + $0x30] sm:$0xf]
      %v2232 = vld [vmem:[%s2218 + $0x34] sm:$0xf]
      %v2233 = vld [vmem:[%s2218 + $0x38] sm:$0xf]
      %v2234 = vld [vmem:[%s2218 + $0x3c] sm:$0xf]
      %v2235 = vpack.c.bf16 %v2155, %v2152
      %v2236 = vpack.c.bf16 %v2163, %v2160
      %v2237 = vpack.c.bf16 %v2171, %v2168
      %v2238 = vpack.c.bf16 %v2179, %v2176
      %v2239 = vpack.c.bf16 %v2187, %v2184
      %v2240 = vpack.c.bf16 %v2195, %v2192
      %v2241 = vpack.c.bf16 %v2203, %v2200
      %v2242 = vpack.c.bf16 %v2211, %v2208
      %v2259 = vunpack.c.l.b16 %v2219
      %v2260 = vunpack.c.l.b16 %v2220
      %v2261 = vunpack.c.l.b16 %v2221
      %v2262 = vunpack.c.l.b16 %v2222
      %v2263 = vunpack.c.l.b16 %v2223
      %v2264 = vunpack.c.l.b16 %v2224
      %v2265 = vunpack.c.l.b16 %v2225
      %v2266 = vunpack.c.l.b16 %v2226
      %v2267 = vunpack.c.l.b16 %v2227
      %v2268 = vunpack.c.l.b16 %v2228
      %v2269 = vunpack.c.l.b16 %v2229
      %v2270 = vunpack.c.l.b16 %v2230
      %v2271 = vunpack.c.l.b16 %v2231
      %v2272 = vunpack.c.l.b16 %v2232
      %v2273 = vunpack.c.l.b16 %v2233
      %v2274 = vunpack.c.l.b16 %v2234
      %v2275 = vpack.c.b16 %v2260, %v2259
      %v2276 = vpack.c.b16 %v2262, %v2261
      %v2277 = vpack.c.b16 %v2264, %v2263
      %v2278 = vpack.c.b16 %v2266, %v2265
      %v2279 = vpack.c.b16 %v2268, %v2267
      %v2280 = vpack.c.b16 %v2270, %v2269
      %v2281 = vpack.c.b16 %v2272, %v2271
      %v2282 = vpack.c.b16 %v2274, %v2273
      %v2291 = vld [vmem:[%s6] sm:$0xf]
      %v2292 = vld [vmem:[%s6 + $0x4] sm:$0xf]
      %v2293 = vld [vmem:[%s6 + $0x8] sm:$0xf]
      %v2294 = vld [vmem:[%s6 + $0xc] sm:$0xf]
      %v2295 = vld [vmem:[%s6 + $0x10] sm:$0xf]
      %v2296 = vld [vmem:[%s6 + $0x14] sm:$0xf]
      %v2297 = vld [vmem:[%s6 + $0x18] sm:$0xf]
      %v2298 = vld [vmem:[%s6 + $0x1c] sm:$0xf]
      %v2299 = vld [vmem:[%s6 + $0x20] sm:$0xf]
      %v2300 = vld [vmem:[%s6 + $0x24] sm:$0xf]
      %v2301 = vld [vmem:[%s6 + $0x28] sm:$0xf]
      %v2302 = vld [vmem:[%s6 + $0x2c] sm:$0xf]
      %v2303 = vld [vmem:[%s6 + $0x30] sm:$0xf]
      %v2304 = vld [vmem:[%s6 + $0x34] sm:$0xf]
      %v2305 = vld [vmem:[%s6 + $0x38] sm:$0xf]
      %v2306 = vld [vmem:[%s6 + $0x3c] sm:$0xf]
      %v2307 = vld [vmem:[%s6 + $0x40] sm:$0xf]
      %v2308 = vld [vmem:[%s6 + $0x44] sm:$0xf]
      %v2309 = vld [vmem:[%s6 + $0x48] sm:$0xf]
      %v2310 = vld [vmem:[%s6 + $0x4c] sm:$0xf]
      %v2311 = vld [vmem:[%s6 + $0x50] sm:$0xf]
      %v2312 = vld [vmem:[%s6 + $0x54] sm:$0xf]
      %v2313 = vld [vmem:[%s6 + $0x58] sm:$0xf]
      %v2314 = vld [vmem:[%s6 + $0x5c] sm:$0xf]
      %v2315 = vld [vmem:[%s6 + $0x60] sm:$0xf]
      %v2316 = vld [vmem:[%s6 + $0x64] sm:$0xf]
      %v2317 = vld [vmem:[%s6 + $0x68] sm:$0xf]
      %v2318 = vld [vmem:[%s6 + $0x6c] sm:$0xf]
      %v2319 = vld [vmem:[%s6 + $0x70] sm:$0xf]
      %v2320 = vld [vmem:[%s6 + $0x74] sm:$0xf]
      %v2321 = vld [vmem:[%s6 + $0x78] sm:$0xf]
      %v2322 = vld [vmem:[%s6 + $0x7c] sm:$0xf]
      %v2323 = vld [vmem:[%s7] sm:$0x1]
      %v2325 = vlaneseq
      %v2326 = vshrl.u32 %v2325, 7
      %v2327 = vsub.s32 0, %v2326
      %v2328 = vrot.slane %v2323, %v2327
      %v2362 = vunpack.c.l.b16 %v2291
      %v2363 = vunpack.c.l.b16 %v2292
      %v2364 = vunpack.c.l.b16 %v2293
      %v2365 = vunpack.c.l.b16 %v2294
      %v2366 = vunpack.c.l.b16 %v2295
      %v2367 = vunpack.c.l.b16 %v2296
      %v2368 = vunpack.c.l.b16 %v2297
      %v2369 = vunpack.c.l.b16 %v2298
      %v2370 = vunpack.c.l.b16 %v2299
      %v2371 = vunpack.c.l.b16 %v2300
      %v2372 = vunpack.c.l.b16 %v2301
      %v2373 = vunpack.c.l.b16 %v2302
      %v2374 = vunpack.c.l.b16 %v2303
      %v2375 = vunpack.c.l.b16 %v2304
      %v2376 = vunpack.c.l.b16 %v2305
      %v2377 = vunpack.c.l.b16 %v2306
      %v2378 = vunpack.c.l.b16 %v2307
      %v2379 = vunpack.c.l.b16 %v2308
      %v2380 = vunpack.c.l.b16 %v2309
      %v2381 = vunpack.c.l.b16 %v2310
      %v2382 = vunpack.c.l.b16 %v2311
      %v2383 = vunpack.c.l.b16 %v2312
      %v2384 = vunpack.c.l.b16 %v2313
      %v2385 = vunpack.c.l.b16 %v2314
      %v2386 = vunpack.c.l.b16 %v2315
      %v2387 = vunpack.c.l.b16 %v2316
      %v2388 = vunpack.c.l.b16 %v2317
      %v2389 = vunpack.c.l.b16 %v2318
      %v2390 = vunpack.c.l.b16 %v2319
      %v2391 = vunpack.c.l.b16 %v2320
      %v2392 = vunpack.c.l.b16 %v2321
      %v2393 = vunpack.c.l.b16 %v2322
      %v2394 = vpack.c.b16 %v2363, %v2362
      %v2395 = vpack.c.b16 %v2365, %v2364
      %v2396 = vpack.c.b16 %v2367, %v2366
      %v2397 = vpack.c.b16 %v2369, %v2368
      %v2398 = vpack.c.b16 %v2371, %v2370
      %v2399 = vpack.c.b16 %v2373, %v2372
      %v2400 = vpack.c.b16 %v2375, %v2374
      %v2401 = vpack.c.b16 %v2377, %v2376
      %v2402 = vpack.c.b16 %v2379, %v2378
      %v2403 = vpack.c.b16 %v2381, %v2380
      %v2404 = vpack.c.b16 %v2383, %v2382
      %v2405 = vpack.c.b16 %v2385, %v2384
      %v2406 = vpack.c.b16 %v2387, %v2386
      %v2407 = vpack.c.b16 %v2389, %v2388
      %v2408 = vpack.c.b16 %v2391, %v2390
      %v2409 = vpack.c.b16 %v2393, %v2392
      %2426 = vmatprep.subr.bf16.mxu0 0
      %2427 = vmatpush1.bf16.msra.mxu0 %v2401
      %2428 = vmatprep.subr.bf16.mxu0 0
      %2429 = vmatpush1.bf16.msra.mxu0 %v2400
      %2430 = vmatprep.subr.bf16.mxu0 0
      %2431 = vmatpush1.bf16.msra.mxu0 %v2399
      %2432 = vmatprep.subr.bf16.mxu0 0
      %2433 = vmatpush1.bf16.msra.mxu0 %v2398
      %2434 = vmatprep.subr.bf16.mxu0 0
      %2435 = vmatpush1.bf16.msra.mxu0 %v2397
      %2436 = vmatprep.subr.bf16.mxu0 0
      %2437 = vmatpush1.bf16.msra.mxu0 %v2396
      %2438 = vmatprep.subr.bf16.mxu0 0
      %2439 = vmatpush1.bf16.msra.mxu0 %v2395
      %2440 = vmatprep.subr.bf16.mxu0 0
      %2441 = vmatpush1.bf16.msra.mxu0 %v2394
      %2442 = vmatprep.subr.bf16.mxu0 0
      %2443 = vmatpush2.bf16.msra.mxu0 %v2409
      %2444 = vmatprep.subr.bf16.mxu0 0
      %2445 = vmatpush2.bf16.msra.mxu0 %v2408
      %2446 = vmatprep.subr.bf16.mxu0 0
      %2447 = vmatpush2.bf16.msra.mxu0 %v2407
      %2448 = vmatprep.subr.bf16.mxu0 0
      %2449 = vmatpush2.bf16.msra.mxu0 %v2406
      %2450 = vmatprep.subr.bf16.mxu0 0
      %2451 = vmatpush2.bf16.msra.mxu0 %v2405
      %2452 = vmatprep.subr.bf16.mxu0 0
      %2453 = vmatpush2.bf16.msra.mxu0 %v2404
      %2454 = vmatprep.subr.bf16.mxu0 0
      %2455 = vmatpush2.bf16.msra.mxu0 %v2403
      %2456 = vmatprep.subr.bf16.mxu0 0
      %2457 = vmatpush2.bf16.msra.mxu0 %v2402
      %2458 = vmatprep.mubr.bf16.mxu0 %v2235
      %2459 = vmatmul.mubr.bf16.gmra.mxu0 %v2275
      %v2460 = vpop.f32.mrf.mxu0
      %v2461 = vadd.f32 %v2328, %v2460
      %v2462 = vpop.f32.mrf.mxu0
      %v2463 = vpop.f32.mrf.mxu0
      %v2464 = vadd.f32 %v2328, %v2463
      %v2465 = vpop.f32.mrf.mxu0
      %2466 = vmatprep.mubr.bf16.mxu0 %v2236
      %2467 = vmatmul.mubr.bf16.gmra.mxu0 %v2276
      %v2468 = vpop.f32.mrf.mxu0
      %v2469 = vadd.f32 %v2328, %v2468
      %v2470 = vpop.f32.mrf.mxu0
      %v2471 = vpop.f32.mrf.mxu0
      %v2472 = vadd.f32 %v2328, %v2471
      %v2473 = vpop.f32.mrf.mxu0
      %2474 = vmatprep.mubr.bf16.mxu0 %v2237
      %2475 = vmatmul.mubr.bf16.gmra.mxu0 %v2277
      %v2476 = vpop.f32.mrf.mxu0
      %v2477 = vadd.f32 %v2328, %v2476
      %v2478 = vpop.f32.mrf.mxu0
      %v2479 = vpop.f32.mrf.mxu0
      %v2480 = vadd.f32 %v2328, %v2479
      %v2481 = vpop.f32.mrf.mxu0
      %2482 = vmatprep.mubr.bf16.mxu0 %v2238
      %2483 = vmatmul.mubr.bf16.gmra.mxu0 %v2278
      %v2484 = vpop.f32.mrf.mxu0
      %v2485 = vadd.f32 %v2328, %v2484
      %v2486 = vpop.f32.mrf.mxu0
      %v2487 = vpop.f32.mrf.mxu0
      %v2488 = vadd.f32 %v2328, %v2487
      %v2489 = vpop.f32.mrf.mxu0
      %2490 = vmatprep.mubr.bf16.mxu0 %v2239
      %2491 = vmatmul.mubr.bf16.gmra.mxu0 %v2279
      %v2492 = vpop.f32.mrf.mxu0
      %v2493 = vadd.f32 %v2328, %v2492
      %v2494 = vpop.f32.mrf.mxu0
      %v2495 = vpop.f32.mrf.mxu0
      %v2496 = vadd.f32 %v2328, %v2495
      %v2497 = vpop.f32.mrf.mxu0
      %2498 = vmatprep.mubr.bf16.mxu0 %v2240
      %2499 = vmatmul.mubr.bf16.gmra.mxu0 %v2280
      %v2500 = vpop.f32.mrf.mxu0
      %v2501 = vadd.f32 %v2328, %v2500
      %v2502 = vpop.f32.mrf.mxu0
      %v2503 = vpop.f32.mrf.mxu0
      %v2504 = vadd.f32 %v2328, %v2503
      %v2505 = vpop.f32.mrf.mxu0
      %2506 = vmatprep.mubr.bf16.mxu0 %v2241
      %2507 = vmatmul.mubr.bf16.gmra.mxu0 %v2281
      %v2508 = vpop.f32.mrf.mxu0
      %v2509 = vadd.f32 %v2328, %v2508
      %v2510 = vpop.f32.mrf.mxu0
      %v2511 = vpop.f32.mrf.mxu0
      %v2512 = vadd.f32 %v2328, %v2511
      %v2513 = vpop.f32.mrf.mxu0
      %2514 = vmatprep.mubr.bf16.mxu0 %v2242
      %2515 = vmatmul.mubr.bf16.gmra.mxu0 %v2282
      %v2516 = vpop.f32.mrf.mxu0
      %v2517 = vadd.f32 %v2328, %v2516
      %v2518 = vpop.f32.mrf.mxu0
      %v2519 = vpop.f32.mrf.mxu0
      %v2520 = vadd.f32 %v2328, %v2519
      %v2521 = vpop.f32.mrf.mxu0
      %2522 = vdwg.mxu0
      %vm2523 = vcmp.gt.f32.partialorder %v2461, 0.0
      %vm2524 = vcmp.gt.f32.partialorder %v2464, 0.0
      %vm2525 = vcmp.gt.f32.partialorder %v2469, 0.0
      %vm2526 = vcmp.gt.f32.partialorder %v2472, 0.0
      %vm2527 = vcmp.gt.f32.partialorder %v2477, 0.0
      %vm2528 = vcmp.gt.f32.partialorder %v2480, 0.0
      %vm2529 = vcmp.gt.f32.partialorder %v2485, 0.0
      %vm2530 = vcmp.gt.f32.partialorder %v2488, 0.0
      %vm2531 = vcmp.gt.f32.partialorder %v2493, 0.0
      %vm2532 = vcmp.gt.f32.partialorder %v2496, 0.0
      %vm2533 = vcmp.gt.f32.partialorder %v2501, 0.0
      %vm2534 = vcmp.gt.f32.partialorder %v2504, 0.0
      %vm2535 = vcmp.gt.f32.partialorder %v2509, 0.0
      %vm2536 = vcmp.gt.f32.partialorder %v2512, 0.0
      %vm2537 = vcmp.gt.f32.partialorder %v2517, 0.0
      %vm2538 = vcmp.gt.f32.partialorder %v2520, 0.0
      %v2539 = vmul.f32 %v2461, 0.01
      %v2540 = vmul.f32 %v2464, 0.01
      %v2541 = vmul.f32 %v2469, 0.01
      %v2542 = vmul.f32 %v2472, 0.01
      %v2543 = vmul.f32 %v2477, 0.01
      %v2544 = vmul.f32 %v2480, 0.01
      %v2545 = vmul.f32 %v2485, 0.01
      %v2546 = vmul.f32 %v2488, 0.01
      %v2547 = vmul.f32 %v2493, 0.01
      %v2548 = vmul.f32 %v2496, 0.01
      %v2549 = vmul.f32 %v2501, 0.01
      %v2550 = vmul.f32 %v2504, 0.01
      %v2551 = vmul.f32 %v2509, 0.01
      %v2552 = vmul.f32 %v2512, 0.01
      %v2553 = vmul.f32 %v2517, 0.01
      %v2554 = vmul.f32 %v2520, 0.01
      %v2555 = vsel %vm2523, %v2461, %v2539
      %v2556 = vsel %vm2524, %v2464, %v2540
      %v2557 = vsel %vm2525, %v2469, %v2541
      %v2558 = vsel %vm2526, %v2472, %v2542
      %v2559 = vsel %vm2527, %v2477, %v2543
      %v2560 = vsel %vm2528, %v2480, %v2544
      %v2561 = vsel %vm2529, %v2485, %v2545
      %v2562 = vsel %vm2530, %v2488, %v2546
      %v2563 = vsel %vm2531, %v2493, %v2547
      %v2564 = vsel %vm2532, %v2496, %v2548
      %v2565 = vsel %vm2533, %v2501, %v2549
      %v2566 = vsel %vm2534, %v2504, %v2550
      %v2567 = vsel %vm2535, %v2509, %v2551
      %v2568 = vsel %vm2536, %v2512, %v2552
      %v2569 = vsel %vm2537, %v2517, %v2553
      %v2570 = vsel %vm2538, %v2520, %v2554
      %v2571 = vlaneseq
      %v2572 = vshrl.u32 %v2571, 7
      %v2573 = vadd.s32 %v2572, 8
      %v2574 = vadd.s32 %v2572, 16
      %v2575 = vadd.s32 %v2572, 24
      %v2576 = vadd.s32 %v2572, 32
      %v2577 = vadd.s32 %v2572, 40
      %v2578 = vadd.s32 %v2572, 48
      %v2579 = vadd.s32 %v2572, 56
      %v2580 = vadd.s32 %v2572, 64
      %v2581 = vadd.s32 %v2572, 72
      %v2582 = vadd.s32 %v2572, 80
      %v2583 = vadd.s32 %v2572, 88
      %v2584 = vadd.s32 %v2572, 96
      %v2585 = vadd.s32 %v2572, 104
      %v2586 = vadd.s32 %v2572, 112
      %v2587 = vadd.s32 %v2572, 120
      %v2588 = vstv %s2214
      %v2589 = vadd.s32 %v2588, %v2572
      %v2590 = vadd.s32 %v2588, %v2573
      %v2591 = vadd.s32 %v2588, %v2574
      %v2592 = vadd.s32 %v2588, %v2575
      %v2593 = vadd.s32 %v2588, %v2576
      %v2594 = vadd.s32 %v2588, %v2577
      %v2595 = vadd.s32 %v2588, %v2578
      %v2596 = vadd.s32 %v2588, %v2579
      %v2597 = vadd.s32 %v2588, %v2580
      %v2598 = vadd.s32 %v2588, %v2581
      %v2599 = vadd.s32 %v2588, %v2582
      %v2600 = vadd.s32 %v2588, %v2583
      %v2601 = vadd.s32 %v2588, %v2584
      %v2602 = vadd.s32 %v2588, %v2585
      %v2603 = vadd.s32 %v2588, %v2586
      %v2604 = vadd.s32 %v2588, %v2587
      %vm2605 = vcmp.lt.s32.totalorder %v2589, 200
      %vm2606 = vcmp.lt.s32.totalorder %v2590, 200
      %vm2607 = vcmp.lt.s32.totalorder %v2591, 200
      %vm2608 = vcmp.lt.s32.totalorder %v2592, 200
      %vm2609 = vcmp.lt.s32.totalorder %v2593, 200
      %vm2610 = vcmp.lt.s32.totalorder %v2594, 200
      %vm2611 = vcmp.lt.s32.totalorder %v2595, 200
      %vm2612 = vcmp.lt.s32.totalorder %v2596, 200
      %vm2613 = vcmp.lt.s32.totalorder %v2597, 200
      %vm2614 = vcmp.lt.s32.totalorder %v2598, 200
      %vm2615 = vcmp.lt.s32.totalorder %v2599, 200
      %vm2616 = vcmp.lt.s32.totalorder %v2600, 200
      %vm2617 = vcmp.lt.s32.totalorder %v2601, 200
      %vm2618 = vcmp.lt.s32.totalorder %v2602, 200
      %vm2619 = vcmp.lt.s32.totalorder %v2603, 200
      %vm2620 = vcmp.lt.s32.totalorder %v2604, 200
      %v2621 = vsel %vm2605, 1, 0
      %v2622 = vsel %vm2606, 1, 0
      %v2623 = vsel %vm2607, 1, 0
      %v2624 = vsel %vm2608, 1, 0
      %v2625 = vsel %vm2609, 1, 0
      %v2626 = vsel %vm2610, 1, 0
      %v2627 = vsel %vm2611, 1, 0
      %v2628 = vsel %vm2612, 1, 0
      %v2629 = vsel %vm2613, 1, 0
      %v2630 = vsel %vm2614, 1, 0
      %v2631 = vsel %vm2615, 1, 0
      %v2632 = vsel %vm2616, 1, 0
      %v2633 = vsel %vm2617, 1, 0
      %v2634 = vsel %vm2618, 1, 0
      %v2635 = vsel %vm2619, 1, 0
      %v2636 = vsel %vm2620, 1, 0
      %vm2637 = vcmp.eq.s32.totalorder %v2621, 1
      %vm2638 = vcmp.eq.s32.totalorder %v2622, 1
      %vm2639 = vcmp.eq.s32.totalorder %v2623, 1
      %vm2640 = vcmp.eq.s32.totalorder %v2624, 1
      %vm2641 = vcmp.eq.s32.totalorder %v2625, 1
      %vm2642 = vcmp.eq.s32.totalorder %v2626, 1
      %vm2643 = vcmp.eq.s32.totalorder %v2627, 1
      %vm2644 = vcmp.eq.s32.totalorder %v2628, 1
      %vm2645 = vcmp.eq.s32.totalorder %v2629, 1
      %vm2646 = vcmp.eq.s32.totalorder %v2630, 1
      %vm2647 = vcmp.eq.s32.totalorder %v2631, 1
      %vm2648 = vcmp.eq.s32.totalorder %v2632, 1
      %vm2649 = vcmp.eq.s32.totalorder %v2633, 1
      %vm2650 = vcmp.eq.s32.totalorder %v2634, 1
      %vm2651 = vcmp.eq.s32.totalorder %v2635, 1
      %vm2652 = vcmp.eq.s32.totalorder %v2636, 1
      %v2653 = vsel %vm2637, %v2555, 0.0
      %v2654 = vsel %vm2638, %v2556, 0.0
      %v2655 = vsel %vm2639, %v2557, 0.0
      %v2656 = vsel %vm2640, %v2558, 0.0
      %v2657 = vsel %vm2641, %v2559, 0.0
      %v2658 = vsel %vm2642, %v2560, 0.0
      %v2659 = vsel %vm2643, %v2561, 0.0
      %v2660 = vsel %vm2644, %v2562, 0.0
      %v2661 = vsel %vm2645, %v2563, 0.0
      %v2662 = vsel %vm2646, %v2564, 0.0
      %v2663 = vsel %vm2647, %v2565, 0.0
      %v2664 = vsel %vm2648, %v2566, 0.0
      %v2665 = vsel %vm2649, %v2567, 0.0
      %v2666 = vsel %vm2650, %v2568, 0.0
      %v2667 = vsel %vm2651, %v2569, 0.0
      %v2668 = vsel %vm2652, %v2570, 0.0
      %v2669 = vpack.c.bf16 %v2654, %v2653
      %v2670 = vpack.c.bf16 %v2656, %v2655
      %v2671 = vpack.c.bf16 %v2658, %v2657
      %v2672 = vpack.c.bf16 %v2660, %v2659
      %v2673 = vpack.c.bf16 %v2662, %v2661
      %v2674 = vpack.c.bf16 %v2664, %v2663
      %v2675 = vpack.c.bf16 %v2666, %v2665
      %v2676 = vpack.c.bf16 %v2668, %v2667
      %v2685 = vunpack.c.l.b16 %v2669
      %v2686 = vunpack.c.h.b16 %v2669
      %v2687 = vunpack.c.l.b16 %v2670
      %v2688 = vunpack.c.h.b16 %v2670
      %v2689 = vunpack.c.l.b16 %v2671
      %v2690 = vunpack.c.h.b16 %v2671
      %v2691 = vunpack.c.l.b16 %v2672
      %v2692 = vunpack.c.h.b16 %v2672
      %v2693 = vunpack.c.l.b16 %v2673
      %v2694 = vunpack.c.h.b16 %v2673
      %v2695 = vunpack.c.l.b16 %v2674
      %v2696 = vunpack.c.h.b16 %v2674
      %v2697 = vunpack.c.l.b16 %v2675
      %v2698 = vunpack.c.h.b16 %v2675
      %v2699 = vunpack.c.l.b16 %v2676
      %v2700 = vunpack.c.h.b16 %v2676
      %v2701 = vpack.c.b16 %v2685, %v2685
      %v2702 = vpack.c.b16 %v2686, %v2686
      %v2703 = vpack.c.b16 %v2687, %v2687
      %v2704 = vpack.c.b16 %v2688, %v2688
      %v2705 = vpack.c.b16 %v2689, %v2689
      %v2706 = vpack.c.b16 %v2690, %v2690
      %v2707 = vpack.c.b16 %v2691, %v2691
      %v2708 = vpack.c.b16 %v2692, %v2692
      %v2709 = vpack.c.b16 %v2693, %v2693
      %v2710 = vpack.c.b16 %v2694, %v2694
      %v2711 = vpack.c.b16 %v2695, %v2695
      %v2712 = vpack.c.b16 %v2696, %v2696
      %v2713 = vpack.c.b16 %v2697, %v2697
      %v2714 = vpack.c.b16 %v2698, %v2698
      %v2715 = vpack.c.b16 %v2699, %v2699
      %v2716 = vpack.c.b16 %v2700, %v2700
      %2733 = vst [vmem:[%s385] sm:$0xf] %v2701
      %2734 = vst [vmem:[%s385 + $0x4] sm:$0xf] %v2702
      %2735 = vst [vmem:[%s385 + $0x8] sm:$0xf] %v2703
      %2736 = vst [vmem:[%s385 + $0xc] sm:$0xf] %v2704
      %2737 = vst [vmem:[%s385 + $0x10] sm:$0xf] %v2705
      %2738 = vst [vmem:[%s385 + $0x14] sm:$0xf] %v2706
      %2739 = vst [vmem:[%s385 + $0x18] sm:$0xf] %v2707
      %2740 = vst [vmem:[%s385 + $0x1c] sm:$0xf] %v2708
      %2741 = vst [vmem:[%s385 + $0x20] sm:$0xf] %v2709
      %2742 = vst [vmem:[%s385 + $0x24] sm:$0xf] %v2710
      %2743 = vst [vmem:[%s385 + $0x28] sm:$0xf] %v2711
      %2744 = vst [vmem:[%s385 + $0x2c] sm:$0xf] %v2712
      %2745 = vst [vmem:[%s385 + $0x30] sm:$0xf] %v2713
      %2746 = vst [vmem:[%s385 + $0x34] sm:$0xf] %v2714
      %2747 = vst [vmem:[%s385 + $0x38] sm:$0xf] %v2715
      %2748 = vst [vmem:[%s385 + $0x3c] sm:$0xf] %v2716
      %v2749 = vadd.f32 %v2653, %v2654
      %v2750 = vadd.f32 %v2749, %v2655
      %v2751 = vadd.f32 %v2750, %v2656
      %v2752 = vadd.f32 %v2751, %v2657
      %v2753 = vadd.f32 %v2752, %v2658
      %v2754 = vadd.f32 %v2753, %v2659
      %v2755 = vadd.f32 %v2754, %v2660
      %v2756 = vadd.f32 %v2755, %v2661
      %v2757 = vadd.f32 %v2756, %v2662
      %v2758 = vadd.f32 %v2757, %v2663
      %v2759 = vadd.f32 %v2758, %v2664
      %v2760 = vadd.f32 %v2759, %v2665
      %v2761 = vadd.f32 %v2760, %v2666
      %v2762 = vadd.f32 %v2761, %v2667
      %v2763 = vadd.f32 %v2762, %v2668
      %v2764 = vrot.slane %v2763, 4
      %v2765 = vadd.f32 %v2763, %v2764
      %v2766 = vrot.slane %v2765, 2
      %v2767 = vadd.f32 %v2765, %v2766
      %v2768 = vrot.slane %v2767, 1
      %v2769 = vadd.f32 %v2767, %v2768
      %v2770 = vmul.f32 %v2653, %v2653
      %v2771 = vmul.f32 %v2654, %v2654
      %v2772 = vmul.f32 %v2655, %v2655
      %v2773 = vmul.f32 %v2656, %v2656
      %v2774 = vmul.f32 %v2657, %v2657
      %v2775 = vmul.f32 %v2658, %v2658
      %v2776 = vmul.f32 %v2659, %v2659
      %v2777 = vmul.f32 %v2660, %v2660
      %v2778 = vmul.f32 %v2661, %v2661
      %v2779 = vmul.f32 %v2662, %v2662
      %v2780 = vmul.f32 %v2663, %v2663
      %v2781 = vmul.f32 %v2664, %v2664
      %v2782 = vmul.f32 %v2665, %v2665
      %v2783 = vmul.f32 %v2666, %v2666
      %v2784 = vmul.f32 %v2667, %v2667
      %v2785 = vmul.f32 %v2668, %v2668
      %v2786 = vadd.f32 %v2770, %v2771
      %v2787 = vadd.f32 %v2786, %v2772
      %v2788 = vadd.f32 %v2787, %v2773
      %v2789 = vadd.f32 %v2788, %v2774
      %v2790 = vadd.f32 %v2789, %v2775
      %v2791 = vadd.f32 %v2790, %v2776
      %v2792 = vadd.f32 %v2791, %v2777
      %v2793 = vadd.f32 %v2792, %v2778
      %v2794 = vadd.f32 %v2793, %v2779
      %v2795 = vadd.f32 %v2794, %v2780
      %v2796 = vadd.f32 %v2795, %v2781
      %v2797 = vadd.f32 %v2796, %v2782
      %v2798 = vadd.f32 %v2797, %v2783
      %v2799 = vadd.f32 %v2798, %v2784
      %v2800 = vadd.f32 %v2799, %v2785
      %v2801 = vrot.slane %v2800, 4
      %v2802 = vadd.f32 %v2800, %v2801
      %v2803 = vrot.slane %v2802, 2
      %v2804 = vadd.f32 %v2802, %v2803
      %v2805 = vrot.slane %v2804, 1
      %v2806 = vadd.f32 %v2804, %v2805
      %vm2807 = vcmask 1040384
      %v2808 = vsel %vm2807, %v2769, %v2806
      %vm2809 = vcmask 1041408
      %v2810 = vsel %vm2809, %v2808, 0.0
      %2811 = vst [vmem:[%s390] sm:$0xff] %v2810
      %s2812 = smul.u32 16, %s21
      %p2813 = scmp.lt.s32.totalorder %s2812, 31
      %s2814 = scalar_select %p2813, %s2812, 31
      %s2815 = smul.addr %s2814, 4
      %s2816 = scalar_lea.vmem %s8, %s2815
      %p2817 = scmp.lt.s32.totalorder %s21, 1
      %s2818 = scalar_select %p2817, %s21, 1
      %s2819 = smul.addr %s2818, 8
      %s2820 = scalar_lea.vmem %s9, %s2819
      // Predicated region
      $region53: #{graph_conv_forward.3} parent=51 // pred_check
        %p2821 = pneg %p222
      $region54: #{graph_conv_forward.3} parent=51 // pred_check_branch
        %2823 = sbr.rel (%p2821) target = $region56
      $region55: #{graph_conv_forward.3} parent=51 // pred_region
        %s2824 = smul.u32 16, %s21
      $region56: #{graph_conv_forward.3} parent=51 // pred_fallthru
        _
      // Predicated region
      $region57: #{graph_conv_forward.3} parent=51 // pred_check
        %p2825 = pneg %p248
      $region58: #{graph_conv_forward.3} parent=51 // pred_check_branch
        %2827 = sbr.rel (%p2825) target = $region60
      $region59: #{graph_conv_forward.3} parent=51 // pred_region
        _
      $region60: #{graph_conv_forward.3} parent=51 // pred_fallthru
        _
    $region52: #{graph_conv_forward.3} parent=5 // pred_fallthru
      _
    %p2828 = scmp.le.s32.totalorder 2, %s16
    // Predicated region
    $region61: #{graph_conv_forward.3} parent=5 // pred_check
      %p2829 = pneg %p2828
    $region62: #{graph_conv_forward.3} parent=5 // pred_check_branch
      %2831 = sbr.rel (%p2829) target = $region64
    $region63: #{graph_conv_forward.3} parent=5 // pred_region
      %s2832 = ssub.s32 %s16, 2
      // Predicated region
      $region65: #{graph_conv_forward.3} parent=63 // pred_check
        %p2833 = pneg %p228
      $region66: #{graph_conv_forward.3} parent=63 // pred_check_branch
        %2835 = sbr.rel (%p2833) target = $region68
      $region67: #{graph_conv_forward.3} parent=63 // pred_region
        %s2836 = smul.u32 16, %s22
        %p2837 = scmp.lt.s32.totalorder %s2836, 31
        %s2838 = scalar_select %p2837, %s2836, 31
        %s2839 = smul.addr %s2838, 4
        %s2840 = scalar_lea.vmem %s8, %s2839
      $region68: #{graph_conv_forward.3} parent=63 // pred_fallthru
        _
      // Predicated region
      $region69: #{graph_conv_forward.3} parent=63 // pred_check
        %p2841 = pneg %p254
      $region70: #{graph_conv_forward.3} parent=63 // pred_check_branch
        %2843 = sbr.rel (%p2841) target = $region72
      $region71: #{graph_conv_forward.3} parent=63 // pred_region
        %p2844 = scmp.lt.s32.totalorder %s22, 1
        %s2845 = scalar_select %p2844, %s22, 1
        %s2846 = smul.addr %s2845, 8
        %s2847 = scalar_lea.vmem %s9, %s2846
      $region72: #{graph_conv_forward.3} parent=63 // pred_fallthru
        _
    $region64: #{graph_conv_forward.3} parent=5 // pred_fallthru
      _
  $region6: #{graph_conv_forward.3} parent=0 // loop_footer
    %s20 = sadd.s32 1, %s16
  $region7: #{graph_conv_forward.3} parent=0 // loop_footer_branch
    %15 = sbr.rel target = $region3
  $region8: #{graph_conv_forward.3} parent=0 // loop_exit
    _

</llo_original>
